<compile_context>
chip_gen: v6e
topology: v6e:2x2x1
jax: 0.10.0
libtpu: 0.0.40
codegen_flags: <defaults>
</compile_context>

<pallas_src>
import functools

import jax
import jax.numpy as jnp
from jax.experimental import pallas as pl
from jax.experimental.pallas import tpu as pltpu


# ----------------------------------------------------------------------------
# Input-projection kernel: gates_ih = x @ W_ih_all + b_ih_all  (all time steps)
# ----------------------------------------------------------------------------
def ih_projection_kernel(x_ref, w_ref, b_ref, o_ref):
    o_ref[...] = (
        jnp.dot(x_ref[...], w_ref[...], preferred_element_type=jnp.float32)
        + b_ref[...]
    )


def ih_projection(x_tbd, wih_all, bih_all):
    T, B, D = x_tbd.shape
    G = wih_all.shape[1]  # 3H
    x2d = x_tbd.reshape(T * B, D)
    out = pl.pallas_call(
        ih_projection_kernel,
        out_shape=jax.ShapeDtypeStruct((T * B, G), jnp.float32),
        in_specs=[
            pl.BlockSpec((T * B, D), lambda: (0, 0)),
            pl.BlockSpec((D, G), lambda: (0, 0)),
            pl.BlockSpec((1, G), lambda: (0, 0)),
        ],
        out_specs=pl.BlockSpec((T * B, G), lambda: (0, 0)),
    )(x2d, wih_all, bih_all)
    return out.reshape(T, B, G)


# ----------------------------------------------------------------------------
# Recurrent kernel (intermediate layers): TB time steps per grid iteration,
# hidden state carried across grid iterations in VMEM scratch. Emits the full
# (T, B, H) sequence, which the next layer consumes.
# ----------------------------------------------------------------------------
def gru_recurrent_kernel(gih_ref, whh_ref, bhh_ref, out_ref, h_ref):
    ti = pl.program_id(0)

    @pl.when(ti == 0)
    def _():
        h_ref[...] = jnp.zeros_like(h_ref)  # PyTorch default h0 = zeros

    tb = gih_ref.shape[0]
    hdim = h_ref.shape[-1]
    whh = whh_ref[...]       # (H, 3H), resident
    bhh = bhh_ref[...]       # (1, 3H)

    def step(s, h):
        gih = gih_ref[s]     # (B, 3H) precomputed x-projection (incl. b_ih)
        ghh = jnp.dot(h, whh, preferred_element_type=jnp.float32) + bhh
        r = jax.nn.sigmoid(gih[:, :hdim] + ghh[:, :hdim])
        z = jax.nn.sigmoid(gih[:, hdim:2 * hdim] + ghh[:, hdim:2 * hdim])
        n = jnp.tanh(gih[:, 2 * hdim:] + r * ghh[:, 2 * hdim:])
        h_new = (1.0 - z) * n + z * h
        out_ref[s] = h_new
        return h_new

    h_ref[...] = jax.lax.fori_loop(0, tb, step, h_ref[...], unroll=True)


# ----------------------------------------------------------------------------
# Last-layer kernel: same recurrence but no sequence writeback; at the final
# grid step it applies the fused FC head and writes only the (B, C) logits.
# ----------------------------------------------------------------------------
def gru_last_layer_fc_kernel(gih_ref, whh_ref, bhh_ref, wfc_ref, bfc_ref,
                             logits_ref, h_ref):
    ti = pl.program_id(0)

    @pl.when(ti == 0)
    def _():
        h_ref[...] = jnp.zeros_like(h_ref)

    tb = gih_ref.shape[0]
    hdim = h_ref.shape[-1]
    whh = whh_ref[...]
    bhh = bhh_ref[...]

    def step(s, h):
        gih = gih_ref[s]
        ghh = jnp.dot(h, whh, preferred_element_type=jnp.float32) + bhh
        r = jax.nn.sigmoid(gih[:, :hdim] + ghh[:, :hdim])
        z = jax.nn.sigmoid(gih[:, hdim:2 * hdim] + ghh[:, hdim:2 * hdim])
        n = jnp.tanh(gih[:, 2 * hdim:] + r * ghh[:, 2 * hdim:])
        return (1.0 - z) * n + z * h

    h = jax.lax.fori_loop(0, tb, step, h_ref[...], unroll=True)
    h_ref[...] = h

    @pl.when(ti == pl.num_programs(0) - 1)
    def _():
        logits_ref[...] = (
            jnp.dot(h, wfc_ref[...], preferred_element_type=jnp.float32)
            + bfc_ref[...]
        )


# ----------------------------------------------------------------------------
# pallas_call wrappers
# ----------------------------------------------------------------------------
def _time_block(T, max_tb=16):
    tb = 1
    for cand in range(1, min(T, max_tb) + 1):
        if T % cand == 0:
            tb = cand
    return tb


def gru_recurrent(gih, whh_all, bhh_all, hidden_size):
    T, B, G = gih.shape
    tb = _time_block(T)
    return pl.pallas_call(
        gru_recurrent_kernel,
        out_shape=jax.ShapeDtypeStruct((T, B, hidden_size), jnp.float32),
        grid=(T // tb,),
        in_specs=[
            pl.BlockSpec((tb, B, G), lambda i: (i, 0, 0)),
            pl.BlockSpec((hidden_size, G), lambda i: (0, 0)),
            pl.BlockSpec((1, G), lambda i: (0, 0)),
        ],
        out_specs=pl.BlockSpec((tb, B, hidden_size), lambda i: (i, 0, 0)),
        scratch_shapes=[pltpu.VMEM((B, hidden_size), jnp.float32)],
        compiler_params=pltpu.CompilerParams(
            dimension_semantics=("arbitrary",),  # recurrence: sequential in T
        ),
    )(gih, whh_all, bhh_all)


def gru_last_layer_fc(gih, whh_all, bhh_all, wfc_t, bfc, hidden_size):
    T, B, G = gih.shape
    C = wfc_t.shape[1]
    tb = _time_block(T)
    return pl.pallas_call(
        gru_last_layer_fc_kernel,
        out_shape=jax.ShapeDtypeStruct((B, C), jnp.float32),
        grid=(T // tb,),
        in_specs=[
            pl.BlockSpec((tb, B, G), lambda i: (i, 0, 0)),
            pl.BlockSpec((hidden_size, G), lambda i: (0, 0)),
            pl.BlockSpec((1, G), lambda i: (0, 0)),
            pl.BlockSpec((hidden_size, C), lambda i: (0, 0)),
            pl.BlockSpec((1, C), lambda i: (0, 0)),
        ],
        out_specs=pl.BlockSpec((B, C), lambda i: (0, 0)),
        scratch_shapes=[pltpu.VMEM((B, hidden_size), jnp.float32)],
        compiler_params=pltpu.CompilerParams(
            dimension_semantics=("arbitrary",),
        ),
    )(gih, whh_all, bhh_all, wfc_t, bfc)


# ----------------------------------------------------------------------------
# Full model forward: out, _ = gru(x); return fc(out[:, -1, :])
# ----------------------------------------------------------------------------
@functools.partial(jax.jit, static_argnames=("hidden_size", "num_layers"))
def gru_predictor_forward(x_btd, params, hidden_size, num_layers):
    h_seq = jnp.transpose(x_btd, (1, 0, 2))  # (T, B, D) time-major
    logits = None
    for layer in range(num_layers):
        p = params[f"l{layer}"]
        gih = ih_projection(h_seq, p["wih"], p["bih"])  # (T, B, 3H)
        if layer < num_layers - 1:
            h_seq = gru_recurrent(gih, p["whh"], p["bhh"], hidden_size)
        else:
            logits = gru_last_layer_fc(
                gih, p["whh"], p["bhh"],
                params["fc"]["w_t"], params["fc"]["b"], hidden_size)
    return logits


# ----------------------------------------------------------------------------
# Deterministic parameter construction (PyTorch-style init, packed layout)
# ----------------------------------------------------------------------------
def init_params(key, input_size, hidden_size, num_layers, num_classes):
    params = {}
    bound = 1.0 / jnp.sqrt(hidden_size)
    for layer in range(num_layers):
        d_in = input_size if layer == 0 else hidden_size
        key, k1, k2, k3, k4 = jax.random.split(key, 5)
        # PyTorch weight_ih_l{k}: (3H, d_in), rows in gate order (r, z, n).
        w_ih = jax.random.uniform(k1, (3 * hidden_size, d_in), jnp.float32,
                                  -bound, bound)
        w_hh = jax.random.uniform(k2, (3 * hidden_size, hidden_size),
                                  jnp.float32, -bound, bound)
        b_ih = jax.random.uniform(k3, (3 * hidden_size,), jnp.float32,
                                  -bound, bound)
        b_hh = jax.random.uniform(k4, (3 * hidden_size,), jnp.float32,
                                  -bound, bound)
        params[f"l{layer}"] = {
            # Fused-gate packing: columns of the transposed matrix stay in
            # (r|z|n) order, so the kernel slices the (B, 3H) result at H, 2H.
            "wih": w_ih.T,                               # (d_in, 3H)
            "whh": w_hh.T,                               # (H, 3H)
            "bih": b_ih.reshape(1, 3 * hidden_size),
            "bhh": b_hh.reshape(1, 3 * hidden_size),
        }
    key, k1, k2 = jax.random.split(key, 3)
    w_fc = jax.random.uniform(k1, (num_classes, hidden_size), jnp.float32,
                              -bound, bound)
    b_fc = jax.random.uniform(k2, (num_classes,), jnp.float32, -bound, bound)
    params["fc"] = {"w_t": w_fc.T, "b": b_fc.reshape(1, num_classes)}
    return params


# ----------------------------------------------------------------------------
# Pure-JAX reference (same packed params) for a sanity check.
# ----------------------------------------------------------------------------
def reference_forward(x_btd, params, hidden_size, num_layers):
    h_seq = jnp.transpose(x_btd, (1, 0, 2))
    T, B, _ = h_seq.shape
    for layer in range(num_layers):
        p = params[f"l{layer}"]
        gih_all = jnp.einsum("tbd,dg->tbg", h_seq, p["wih"]) + p["bih"]
        h = jnp.zeros((B, hidden_size), jnp.float32)
        outs = []
        for t in range(T):
            ghh = h @ p["whh"] + p["bhh"]
            gih = gih_all[t]
            r = jax.nn.sigmoid(gih[:, :hidden_size] + ghh[:, :hidden_size])
            z = jax.nn.sigmoid(gih[:, hidden_size:2 * hidden_size]
                               + ghh[:, hidden_size:2 * hidden_size])
            n = jnp.tanh(gih[:, 2 * hidden_size:]
                         + r * ghh[:, 2 * hidden_size:])
            h = (1.0 - z) * n + z * h
            outs.append(h)
        h_seq = jnp.stack(outs, axis=0)
    return h_seq[-1] @ params["fc"]["w_t"] + params["fc"]["b"]


if __name__ == "__main__":
    # x: (batch, seq_len, input_size) matching the module's forward.
    batch, seq_len = 2, 8
    input_size, hidden_size, num_layers, num_classes = 16, 32, 2, 4

    key = jax.random.PRNGKey(0)
    key_x, key_p = jax.random.split(key)
    x = jax.random.normal(key_x, (batch, seq_len, input_size), jnp.float32)
    params = init_params(key_p, input_size, hidden_size, num_layers,
                         num_classes)

    logits = gru_predictor_forward(x, params, hidden_size, num_layers)
    jax.block_until_ready(logits)
    assert logits.shape == (batch, num_classes)

    ref = reference_forward(x, params, hidden_size, num_layers)
    assert jnp.allclose(logits, ref, atol=1e-3, rtol=1e-3)

    print("KERNEL_OK")
</pallas_src>

<mosaic_0001>
module attributes {stable_mosaic.version = 11 : i64} {
  func.func @ih_projection_kernel(%arg0: memref<16x16xf32, #tpu.memory_space<vmem>>, %arg1: memref<16x96xf32, #tpu.memory_space<vmem>>, %arg2: memref<1x96xf32, #tpu.memory_space<vmem>>, %arg3: memref<16x96xf32, #tpu.memory_space<vmem>>) attributes {dimension_semantics = [], scalar_prefetch = 0 : i64, scratch_operands = 0 : i64, tpu.core_type = #tpu.core_type<tc>} {
    %c0 = arith.constant 0 : index
    %c0_0 = arith.constant 0 : index
    %0 = vector.load %arg0[%c0, %c0_0] : memref<16x16xf32, #tpu.memory_space<vmem>>, vector<16x16xf32>
    %c0_1 = arith.constant 0 : index
    %c0_2 = arith.constant 0 : index
    %1 = vector.load %arg1[%c0_1, %c0_2] : memref<16x96xf32, #tpu.memory_space<vmem>>, vector<16x96xf32>
    %cst = arith.constant dense<0.000000e+00> : vector<16x96xf32>
    %2 = tpu.matmul %0, %1, %cst {dimension_numbers = #tpu.dot_dimension_numbers<[1], [0], [0], [1], [0, 0, 1, 1], [], []>} : vector<16x16xf32>, vector<16x96xf32>, vector<16x96xf32> -> vector<16x96xf32>
    %c0_3 = arith.constant 0 : index
    %c0_4 = arith.constant 0 : index
    %3 = vector.load %arg2[%c0_3, %c0_4] : memref<1x96xf32, #tpu.memory_space<vmem>>, vector<1x96xf32>
    %4 = vector.broadcast %3 : vector<1x96xf32> to vector<16x96xf32>
    %5 = arith.addf %2, %4 : vector<16x96xf32>
    %c0_5 = arith.constant 0 : index
    %c0_6 = arith.constant 0 : index
    %6 = vector.load %arg3[%c0_5, %c0_6] : memref<16x96xf32, #tpu.memory_space<vmem>>, vector<16x96xf32>
    tpu.vector_store %arg3[%c0_5, %c0_6], %5 {strides = array<i32>} : memref<16x96xf32, #tpu.memory_space<vmem>>, vector<16x96xf32>,
    return
  }
}

module attributes {stable_mosaic.version = 11 : i64} {
  func.func @gru_recurrent_kernel(%arg0: i32, %arg1: memref<8x2x96xf32, #tpu.memory_space<vmem>>, %arg2: memref<32x96xf32, #tpu.memory_space<vmem>>, %arg3: memref<1x96xf32, #tpu.memory_space<vmem>>, %arg4: memref<8x2x32xf32, #tpu.memory_space<vmem>>, %arg5: memref<2x32xf32, #tpu.memory_space<vmem>>) attributes {dimension_semantics = [#tpu.dimension_semantics<arbitrary>], iteration_bounds = array<i64: 1>, scalar_prefetch = 0 : i64, scratch_operands = 1 : i64, tpu.core_type = #tpu.core_type<tc>, window_params = [{transform_indices = @transform_0, window_bounds = array<i64: 8, 2, 96>}, {pipeline_mode = #tpu.pipeline_mode<synchronous>, transform_indices = @transform_1, window_bounds = array<i64: 32, 96>}, {pipeline_mode = #tpu.pipeline_mode<synchronous>, transform_indices = @transform_2, window_bounds = array<i64: 1, 96>}, {transform_indices = @transform_3, window_bounds = array<i64: 8, 2, 32>}]} {
    %c0_i32 = arith.constant 0 : i32
    %0 = arith.cmpi eq, %arg0, %c0_i32 : i32
    %1 = arith.extui %0 : i1 to i32
    %c0_i32_0 = arith.constant 0 : i32
    %2 = arith.cmpi ne, %1, %c0_i32_0 : i32
    scf.if %2 {
      %cst_72 = arith.constant 0.000000e+00 : f32
      %295 = vector.broadcast %cst_72 : f32 to vector<2x32xf32>
      %c0_73 = arith.constant 0 : index
      %c0_74 = arith.constant 0 : index
      %296 = vector.load %arg5[%c0_73, %c0_74] : memref<2x32xf32, #tpu.memory_space<vmem>>, vector<2x32xf32>
      tpu.vector_store %arg5[%c0_73, %c0_74], %295 {strides = array<i32>} : memref<2x32xf32, #tpu.memory_space<vmem>>, vector<2x32xf32>,
    } else {
    }
    %c0 = arith.constant 0 : index
    %c0_1 = arith.constant 0 : index
    %3 = vector.load %arg2[%c0, %c0_1] : memref<32x96xf32, #tpu.memory_space<vmem>>, vector<32x96xf32>
    %c0_2 = arith.constant 0 : index
    %c0_3 = arith.constant 0 : index
    %4 = vector.load %arg3[%c0_2, %c0_3] : memref<1x96xf32, #tpu.memory_space<vmem>>, vector<1x96xf32>
    %c0_4 = arith.constant 0 : index
    %c0_5 = arith.constant 0 : index
    %5 = vector.load %arg5[%c0_4, %c0_5] : memref<2x32xf32, #tpu.memory_space<vmem>>, vector<2x32xf32>
    %c0_i32_6 = arith.constant 0 : i32
    %6 = arith.index_cast %c0_i32_6 : i32 to index
    %c0_7 = arith.constant 0 : index
    %c0_8 = arith.constant 0 : index
    %7 = vector.load %arg1[%6, %c0_7, %c0_8] : memref<8x2x96xf32, #tpu.memory_space<vmem>>, vector<1x2x96xf32>
    %8 = vector.shape_cast %7 : vector<1x2x96xf32> to vector<2x96xf32>
    %cst = arith.constant dense<0.000000e+00> : vector<2x96xf32>
    %9 = tpu.matmul %5, %3, %cst {dimension_numbers = #tpu.dot_dimension_numbers<[1], [0], [0], [1], [0, 0, 1, 1], [], []>} : vector<2x32xf32>, vector<32x96xf32>, vector<2x96xf32> -> vector<2x96xf32>
    %10 = vector.broadcast %4 : vector<1x96xf32> to vector<2x96xf32>
    %11 = arith.addf %9, %10 : vector<2x96xf32>
    %12 = vector.extract_strided_slice %8 {offsets = [0, 0], sizes = [2, 32], strides = [1, 1]} : vector<2x96xf32> to vector<2x32xf32>
    %13 = vector.extract_strided_slice %11 {offsets = [0, 0], sizes = [2, 32], strides = [1, 1]} : vector<2x96xf32> to vector<2x32xf32>
    %14 = arith.addf %12, %13 : vector<2x32xf32>
    %15 = arith.negf %14 : vector<2x32xf32>
    %16 = math.exp %15 : vector<2x32xf32>
    %cst_9 = arith.constant 1.000000e+00 : f32
    %17 = vector.broadcast %cst_9 : f32 to vector<2x32xf32>
    %18 = arith.addf %17, %16 : vector<2x32xf32>
    %19 = arith.divf %17, %18 : vector<2x32xf32>
    %20 = vector.extract_strided_slice %8 {offsets = [0, 32], sizes = [2, 32], strides = [1, 1]} : vector<2x96xf32> to vector<2x32xf32>
    %21 = vector.extract_strided_slice %11 {offsets = [0, 32], sizes = [2, 32], strides = [1, 1]} : vector<2x96xf32> to vector<2x32xf32>
    %22 = arith.addf %20, %21 : vector<2x32xf32>
    %23 = arith.negf %22 : vector<2x32xf32>
    %24 = math.exp %23 : vector<2x32xf32>
    %cst_10 = arith.constant 1.000000e+00 : f32
    %25 = vector.broadcast %cst_10 : f32 to vector<2x32xf32>
    %26 = arith.addf %25, %24 : vector<2x32xf32>
    %27 = arith.divf %25, %26 : vector<2x32xf32>
    %28 = vector.extract_strided_slice %8 {offsets = [0, 64], sizes = [2, 32], strides = [1, 1]} : vector<2x96xf32> to vector<2x32xf32>
    %29 = vector.extract_strided_slice %11 {offsets = [0, 64], sizes = [2, 32], strides = [1, 1]} : vector<2x96xf32> to vector<2x32xf32>
    %30 = arith.mulf %19, %29 : vector<2x32xf32>
    %31 = arith.addf %28, %30 : vector<2x32xf32>
    %32 = math.tanh %31 : vector<2x32xf32>
    %cst_11 = arith.constant 1.000000e+00 : f32
    %33 = vector.broadcast %cst_11 : f32 to vector<2x32xf32>
    %34 = arith.subf %33, %27 : vector<2x32xf32>
    %35 = arith.mulf %34, %32 : vector<2x32xf32>
    %36 = arith.mulf %27, %5 : vector<2x32xf32>
    %37 = arith.addf %35, %36 : vector<2x32xf32>
    %38 = arith.index_cast %c0_i32_6 : i32 to index
    %c0_12 = arith.constant 0 : index
    %c0_13 = arith.constant 0 : index
    %39 = vector.load %arg4[%38, %c0_12, %c0_13] : memref<8x2x32xf32, #tpu.memory_space<vmem>>, vector<1x2x32xf32>
    %40 = vector.shape_cast %39 : vector<1x2x32xf32> to vector<2x32xf32>
    %41 = vector.shape_cast %37 : vector<2x32xf32> to vector<1x2x32xf32>
    tpu.vector_store %arg4[%38, %c0_12, %c0_13], %41 {strides = array<i32>} : memref<8x2x32xf32, #tpu.memory_space<vmem>>, vector<1x2x32xf32>,
    %c1_i32 = arith.constant 1 : i32
    %42 = arith.index_cast %c1_i32 : i32 to index
    %c0_14 = arith.constant 0 : index
    %c0_15 = arith.constant 0 : index
    %43 = vector.load %arg1[%42, %c0_14, %c0_15] : memref<8x2x96xf32, #tpu.memory_space<vmem>>, vector<1x2x96xf32>
    %44 = vector.shape_cast %43 : vector<1x2x96xf32> to vector<2x96xf32>
    %cst_16 = arith.constant dense<0.000000e+00> : vector<2x96xf32>
    %45 = tpu.matmul %37, %3, %cst_16 {dimension_numbers = #tpu.dot_dimension_numbers<[1], [0], [0], [1], [0, 0, 1, 1], [], []>} : vector<2x32xf32>, vector<32x96xf32>, vector<2x96xf32> -> vector<2x96xf32>
    %46 = vector.broadcast %4 : vector<1x96xf32> to vector<2x96xf32>
    %47 = arith.addf %45, %46 : vector<2x96xf32>
    %48 = vector.extract_strided_slice %44 {offsets = [0, 0], sizes = [2, 32], strides = [1, 1]} : vector<2x96xf32> to vector<2x32xf32>
    %49 = vector.extract_strided_slice %47 {offsets = [0, 0], sizes = [2, 32], strides = [1, 1]} : vector<2x96xf32> to vector<2x32xf32>
    %50 = arith.addf %48, %49 : vector<2x32xf32>
    %51 = arith.negf %50 : vector<2x32xf32>
    %52 = math.exp %51 : vector<2x32xf32>
    %cst_17 = arith.constant 1.000000e+00 : f32
    %53 = vector.broadcast %cst_17 : f32 to vector<2x32xf32>
    %54 = arith.addf %53, %52 : vector<2x32xf32>
    %55 = arith.divf %53, %54 : vector<2x32xf32>
    %56 = vector.extract_strided_slice %44 {offsets = [0, 32], sizes = [2, 32], strides = [1, 1]} : vector<2x96xf32> to vector<2x32xf32>
    %57 = vector.extract_strided_slice %47 {offsets = [0, 32], sizes = [2, 32], strides = [1, 1]} : vector<2x96xf32> to vector<2x32xf32>
    %58 = arith.addf %56, %57 : vector<2x32xf32>
    %59 = arith.negf %58 : vector<2x32xf32>
    %60 = math.exp %59 : vector<2x32xf32>
    %cst_18 = arith.constant 1.000000e+00 : f32
    %61 = vector.broadcast %cst_18 : f32 to vector<2x32xf32>
    %62 = arith.addf %61, %60 : vector<2x32xf32>
    %63 = arith.divf %61, %62 : vector<2x32xf32>
    %64 = vector.extract_strided_slice %44 {offsets = [0, 64], sizes = [2, 32], strides = [1, 1]} : vector<2x96xf32> to vector<2x32xf32>
    %65 = vector.extract_strided_slice %47 {offsets = [0, 64], sizes = [2, 32], strides = [1, 1]} : vector<2x96xf32> to vector<2x32xf32>
    %66 = arith.mulf %55, %65 : vector<2x32xf32>
    %67 = arith.addf %64, %66 : vector<2x32xf32>
    %68 = math.tanh %67 : vector<2x32xf32>
    %cst_19 = arith.constant 1.000000e+00 : f32
    %69 = vector.broadcast %cst_19 : f32 to vector<2x32xf32>
    %70 = arith.subf %69, %63 : vector<2x32xf32>
    %71 = arith.mulf %70, %68 : vector<2x32xf32>
    %72 = arith.mulf %63, %37 : vector<2x32xf32>
    %73 = arith.addf %71, %72 : vector<2x32xf32>
    %74 = arith.index_cast %c1_i32 : i32 to index
    %c0_20 = arith.constant 0 : index
    %c0_21 = arith.constant 0 : index
    %75 = vector.load %arg4[%74, %c0_20, %c0_21] : memref<8x2x32xf32, #tpu.memory_space<vmem>>, vector<1x2x32xf32>
    %76 = vector.shape_cast %75 : vector<1x2x32xf32> to vector<2x32xf32>
    %77 = vector.shape_cast %73 : vector<2x32xf32> to vector<1x2x32xf32>
    tpu.vector_store %arg4[%74, %c0_20, %c0_21], %77 {strides = array<i32>} : memref<8x2x32xf32, #tpu.memory_space<vmem>>, vector<1x2x32xf32>,
    %c2_i32 = arith.constant 2 : i32
    %78 = arith.index_cast %c2_i32 : i32 to index
    %c0_22 = arith.constant 0 : index
    %c0_23 = arith.constant 0 : index
    %79 = vector.load %arg1[%78, %c0_22, %c0_23] : memref<8x2x96xf32, #tpu.memory_space<vmem>>, vector<1x2x96xf32>
    %80 = vector.shape_cast %79 : vector<1x2x96xf32> to vector<2x96xf32>
    %cst_24 = arith.constant dense<0.000000e+00> : vector<2x96xf32>
    %81 = tpu.matmul %73, %3, %cst_24 {dimension_numbers = #tpu.dot_dimension_numbers<[1], [0], [0], [1], [0, 0, 1, 1], [], []>} : vector<2x32xf32>, vector<32x96xf32>, vector<2x96xf32> -> vector<2x96xf32>
    %82 = vector.broadcast %4 : vector<1x96xf32> to vector<2x96xf32>
    %83 = arith.addf %81, %82 : vector<2x96xf32>
    %84 = vector.extract_strided_slice %80 {offsets = [0, 0], sizes = [2, 32], strides = [1, 1]} : vector<2x96xf32> to vector<2x32xf32>
    %85 = vector.extract_strided_slice %83 {offsets = [0, 0], sizes = [2, 32], strides = [1, 1]} : vector<2x96xf32> to vector<2x32xf32>
    %86 = arith.addf %84, %85 : vector<2x32xf32>
    %87 = arith.negf %86 : vector<2x32xf32>
    %88 = math.exp %87 : vector<2x32xf32>
    %cst_25 = arith.constant 1.000000e+00 : f32
    %89 = vector.broadcast %cst_25 : f32 to vector<2x32xf32>
    %90 = arith.addf %89, %88 : vector<2x32xf32>
    %91 = arith.divf %89, %90 : vector<2x32xf32>
    %92 = vector.extract_strided_slice %80 {offsets = [0, 32], sizes = [2, 32], strides = [1, 1]} : vector<2x96xf32> to vector<2x32xf32>
    %93 = vector.extract_strided_slice %83 {offsets = [0, 32], sizes = [2, 32], strides = [1, 1]} : vector<2x96xf32> to vector<2x32xf32>
    %94 = arith.addf %92, %93 : vector<2x32xf32>
    %95 = arith.negf %94 : vector<2x32xf32>
    %96 = math.exp %95 : vector<2x32xf32>
    %cst_26 = arith.constant 1.000000e+00 : f32
    %97 = vector.broadcast %cst_26 : f32 to vector<2x32xf32>
    %98 = arith.addf %97, %96 : vector<2x32xf32>
    %99 = arith.divf %97, %98 : vector<2x32xf32>
    %100 = vector.extract_strided_slice %80 {offsets = [0, 64], sizes = [2, 32], strides = [1, 1]} : vector<2x96xf32> to vector<2x32xf32>
    %101 = vector.extract_strided_slice %83 {offsets = [0, 64], sizes = [2, 32], strides = [1, 1]} : vector<2x96xf32> to vector<2x32xf32>
    %102 = arith.mulf %91, %101 : vector<2x32xf32>
    %103 = arith.addf %100, %102 : vector<2x32xf32>
    %104 = math.tanh %103 : vector<2x32xf32>
    %cst_27 = arith.constant 1.000000e+00 : f32
    %105 = vector.broadcast %cst_27 : f32 to vector<2x32xf32>
    %106 = arith.subf %105, %99 : vector<2x32xf32>
    %107 = arith.mulf %106, %104 : vector<2x32xf32>
    %108 = arith.mulf %99, %73 : vector<2x32xf32>
    %109 = arith.addf %107, %108 : vector<2x32xf32>
    %110 = arith.index_cast %c2_i32 : i32 to index
    %c0_28 = arith.constant 0 : index
    %c0_29 = arith.constant 0 : index
    %111 = vector.load %arg4[%110, %c0_28, %c0_29] : memref<8x2x32xf32, #tpu.memory_space<vmem>>, vector<1x2x32xf32>
    %112 = vector.shape_cast %111 : vector<1x2x32xf32> to vector<2x32xf32>
    %113 = vector.shape_cast %109 : vector<2x32xf32> to vector<1x2x32xf32>
    tpu.vector_store %arg4[%110, %c0_28, %c0_29], %113 {strides = array<i32>} : memref<8x2x32xf32, #tpu.memory_space<vmem>>, vector<1x2x32xf32>,
    %c3_i32 = arith.constant 3 : i32
    %114 = arith.index_cast %c3_i32 : i32 to index
    %c0_30 = arith.constant 0 : index
    %c0_31 = arith.constant 0 : index
    %115 = vector.load %arg1[%114, %c0_30, %c0_31] : memref<8x2x96xf32, #tpu.memory_space<vmem>>, vector<1x2x96xf32>
    %116 = vector.shape_cast %115 : vector<1x2x96xf32> to vector<2x96xf32>
    %cst_32 = arith.constant dense<0.000000e+00> : vector<2x96xf32>
    %117 = tpu.matmul %109, %3, %cst_32 {dimension_numbers = #tpu.dot_dimension_numbers<[1], [0], [0], [1], [0, 0, 1, 1], [], []>} : vector<2x32xf32>, vector<32x96xf32>, vector<2x96xf32> -> vector<2x96xf32>
    %118 = vector.broadcast %4 : vector<1x96xf32> to vector<2x96xf32>
    %119 = arith.addf %117, %118 : vector<2x96xf32>
    %120 = vector.extract_strided_slice %116 {offsets = [0, 0], sizes = [2, 32], strides = [1, 1]} : vector<2x96xf32> to vector<2x32xf32>
    %121 = vector.extract_strided_slice %119 {offsets = [0, 0], sizes = [2, 32], strides = [1, 1]} : vector<2x96xf32> to vector<2x32xf32>
    %122 = arith.addf %120, %121 : vector<2x32xf32>
    %123 = arith.negf %122 : vector<2x32xf32>
    %124 = math.exp %123 : vector<2x32xf32>
    %cst_33 = arith.constant 1.000000e+00 : f32
    %125 = vector.broadcast %cst_33 : f32 to vector<2x32xf32>
    %126 = arith.addf %125, %124 : vector<2x32xf32>
    %127 = arith.divf %125, %126 : vector<2x32xf32>
    %128 = vector.extract_strided_slice %116 {offsets = [0, 32], sizes = [2, 32], strides = [1, 1]} : vector<2x96xf32> to vector<2x32xf32>
    %129 = vector.extract_strided_slice %119 {offsets = [0, 32], sizes = [2, 32], strides = [1, 1]} : vector<2x96xf32> to vector<2x32xf32>
    %130 = arith.addf %128, %129 : vector<2x32xf32>
    %131 = arith.negf %130 : vector<2x32xf32>
    %132 = math.exp %131 : vector<2x32xf32>
    %cst_34 = arith.constant 1.000000e+00 : f32
    %133 = vector.broadcast %cst_34 : f32 to vector<2x32xf32>
    %134 = arith.addf %133, %132 : vector<2x32xf32>
    %135 = arith.divf %133, %134 : vector<2x32xf32>
    %136 = vector.extract_strided_slice %116 {offsets = [0, 64], sizes = [2, 32], strides = [1, 1]} : vector<2x96xf32> to vector<2x32xf32>
    %137 = vector.extract_strided_slice %119 {offsets = [0, 64], sizes = [2, 32], strides = [1, 1]} : vector<2x96xf32> to vector<2x32xf32>
    %138 = arith.mulf %127, %137 : vector<2x32xf32>
    %139 = arith.addf %136, %138 : vector<2x32xf32>
    %140 = math.tanh %139 : vector<2x32xf32>
    %cst_35 = arith.constant 1.000000e+00 : f32
    %141 = vector.broadcast %cst_35 : f32 to vector<2x32xf32>
    %142 = arith.subf %141, %135 : vector<2x32xf32>
    %143 = arith.mulf %142, %140 : vector<2x32xf32>
    %144 = arith.mulf %135, %109 : vector<2x32xf32>
    %145 = arith.addf %143, %144 : vector<2x32xf32>
    %146 = arith.index_cast %c3_i32 : i32 to index
    %c0_36 = arith.constant 0 : index
    %c0_37 = arith.constant 0 : index
    %147 = vector.load %arg4[%146, %c0_36, %c0_37] : memref<8x2x32xf32, #tpu.memory_space<vmem>>, vector<1x2x32xf32>
    %148 = vector.shape_cast %147 : vector<1x2x32xf32> to vector<2x32xf32>
    %149 = vector.shape_cast %145 : vector<2x32xf32> to vector<1x2x32xf32>
    tpu.vector_store %arg4[%146, %c0_36, %c0_37], %149 {strides = array<i32>} : memref<8x2x32xf32, #tpu.memory_space<vmem>>, vector<1x2x32xf32>,
    %c4_i32 = arith.constant 4 : i32
    %150 = arith.index_cast %c4_i32 : i32 to index
    %c0_38 = arith.constant 0 : index
    %c0_39 = arith.constant 0 : index
    %151 = vector.load %arg1[%150, %c0_38, %c0_39] : memref<8x2x96xf32, #tpu.memory_space<vmem>>, vector<1x2x96xf32>
    %152 = vector.shape_cast %151 : vector<1x2x96xf32> to vector<2x96xf32>
    %cst_40 = arith.constant dense<0.000000e+00> : vector<2x96xf32>
    %153 = tpu.matmul %145, %3, %cst_40 {dimension_numbers = #tpu.dot_dimension_numbers<[1], [0], [0], [1], [0, 0, 1, 1], [], []>} : vector<2x32xf32>, vector<32x96xf32>, vector<2x96xf32> -> vector<2x96xf32>
    %154 = vector.broadcast %4 : vector<1x96xf32> to vector<2x96xf32>
    %155 = arith.addf %153, %154 : vector<2x96xf32>
    %156 = vector.extract_strided_slice %152 {offsets = [0, 0], sizes = [2, 32], strides = [1, 1]} : vector<2x96xf32> to vector<2x32xf32>
    %157 = vector.extract_strided_slice %155 {offsets = [0, 0], sizes = [2, 32], strides = [1, 1]} : vector<2x96xf32> to vector<2x32xf32>
    %158 = arith.addf %156, %157 : vector<2x32xf32>
    %159 = arith.negf %158 : vector<2x32xf32>
    %160 = math.exp %159 : vector<2x32xf32>
    %cst_41 = arith.constant 1.000000e+00 : f32
    %161 = vector.broadcast %cst_41 : f32 to vector<2x32xf32>
    %162 = arith.addf %161, %160 : vector<2x32xf32>
    %163 = arith.divf %161, %162 : vector<2x32xf32>
    %164 = vector.extract_strided_slice %152 {offsets = [0, 32], sizes = [2, 32], strides = [1, 1]} : vector<2x96xf32> to vector<2x32xf32>
    %165 = vector.extract_strided_slice %155 {offsets = [0, 32], sizes = [2, 32], strides = [1, 1]} : vector<2x96xf32> to vector<2x32xf32>
    %166 = arith.addf %164, %165 : vector<2x32xf32>
    %167 = arith.negf %166 : vector<2x32xf32>
    %168 = math.exp %167 : vector<2x32xf32>
    %cst_42 = arith.constant 1.000000e+00 : f32
    %169 = vector.broadcast %cst_42 : f32 to vector<2x32xf32>
    %170 = arith.addf %169, %168 : vector<2x32xf32>
    %171 = arith.divf %169, %170 : vector<2x32xf32>
    %172 = vector.extract_strided_slice %152 {offsets = [0, 64], sizes = [2, 32], strides = [1, 1]} : vector<2x96xf32> to vector<2x32xf32>
    %173 = vector.extract_strided_slice %155 {offsets = [0, 64], sizes = [2, 32], strides = [1, 1]} : vector<2x96xf32> to vector<2x32xf32>
    %174 = arith.mulf %163, %173 : vector<2x32xf32>
    %175 = arith.addf %172, %174 : vector<2x32xf32>
    %176 = math.tanh %175 : vector<2x32xf32>
    %cst_43 = arith.constant 1.000000e+00 : f32
    %177 = vector.broadcast %cst_43 : f32 to vector<2x32xf32>
    %178 = arith.subf %177, %171 : vector<2x32xf32>
    %179 = arith.mulf %178, %176 : vector<2x32xf32>
    %180 = arith.mulf %171, %145 : vector<2x32xf32>
    %181 = arith.addf %179, %180 : vector<2x32xf32>
    %182 = arith.index_cast %c4_i32 : i32 to index
    %c0_44 = arith.constant 0 : index
    %c0_45 = arith.constant 0 : index
    %183 = vector.load %arg4[%182, %c0_44, %c0_45] : memref<8x2x32xf32, #tpu.memory_space<vmem>>, vector<1x2x32xf32>
    %184 = vector.shape_cast %183 : vector<1x2x32xf32> to vector<2x32xf32>
    %185 = vector.shape_cast %181 : vector<2x32xf32> to vector<1x2x32xf32>
    tpu.vector_store %arg4[%182, %c0_44, %c0_45], %185 {strides = array<i32>} : memref<8x2x32xf32, #tpu.memory_space<vmem>>, vector<1x2x32xf32>,
    %c5_i32 = arith.constant 5 : i32
    %186 = arith.index_cast %c5_i32 : i32 to index
    %c0_46 = arith.constant 0 : index
    %c0_47 = arith.constant 0 : index
    %187 = vector.load %arg1[%186, %c0_46, %c0_47] : memref<8x2x96xf32, #tpu.memory_space<vmem>>, vector<1x2x96xf32>
    %188 = vector.shape_cast %187 : vector<1x2x96xf32> to vector<2x96xf32>
    %cst_48 = arith.constant dense<0.000000e+00> : vector<2x96xf32>
    %189 = tpu.matmul %181, %3, %cst_48 {dimension_numbers = #tpu.dot_dimension_numbers<[1], [0], [0], [1], [0, 0, 1, 1], [], []>} : vector<2x32xf32>, vector<32x96xf32>, vector<2x96xf32> -> vector<2x96xf32>
    %190 = vector.broadcast %4 : vector<1x96xf32> to vector<2x96xf32>
    %191 = arith.addf %189, %190 : vector<2x96xf32>
    %192 = vector.extract_strided_slice %188 {offsets = [0, 0], sizes = [2, 32], strides = [1, 1]} : vector<2x96xf32> to vector<2x32xf32>
    %193 = vector.extract_strided_slice %191 {offsets = [0, 0], sizes = [2, 32], strides = [1, 1]} : vector<2x96xf32> to vector<2x32xf32>
    %194 = arith.addf %192, %193 : vector<2x32xf32>
    %195 = arith.negf %194 : vector<2x32xf32>
    %196 = math.exp %195 : vector<2x32xf32>
    %cst_49 = arith.constant 1.000000e+00 : f32
    %197 = vector.broadcast %cst_49 : f32 to vector<2x32xf32>
    %198 = arith.addf %197, %196 : vector<2x32xf32>
    %199 = arith.divf %197, %198 : vector<2x32xf32>
    %200 = vector.extract_strided_slice %188 {offsets = [0, 32], sizes = [2, 32], strides = [1, 1]} : vector<2x96xf32> to vector<2x32xf32>
    %201 = vector.extract_strided_slice %191 {offsets = [0, 32], sizes = [2, 32], strides = [1, 1]} : vector<2x96xf32> to vector<2x32xf32>
    %202 = arith.addf %200, %201 : vector<2x32xf32>
    %203 = arith.negf %202 : vector<2x32xf32>
    %204 = math.exp %203 : vector<2x32xf32>
    %cst_50 = arith.constant 1.000000e+00 : f32
    %205 = vector.broadcast %cst_50 : f32 to vector<2x32xf32>
    %206 = arith.addf %205, %204 : vector<2x32xf32>
    %207 = arith.divf %205, %206 : vector<2x32xf32>
    %208 = vector.extract_strided_slice %188 {offsets = [0, 64], sizes = [2, 32], strides = [1, 1]} : vector<2x96xf32> to vector<2x32xf32>
    %209 = vector.extract_strided_slice %191 {offsets = [0, 64], sizes = [2, 32], strides = [1, 1]} : vector<2x96xf32> to vector<2x32xf32>
    %210 = arith.mulf %199, %209 : vector<2x32xf32>
    %211 = arith.addf %208, %210 : vector<2x32xf32>
    %212 = math.tanh %211 : vector<2x32xf32>
    %cst_51 = arith.constant 1.000000e+00 : f32
    %213 = vector.broadcast %cst_51 : f32 to vector<2x32xf32>
    %214 = arith.subf %213, %207 : vector<2x32xf32>
    %215 = arith.mulf %214, %212 : vector<2x32xf32>
    %216 = arith.mulf %207, %181 : vector<2x32xf32>
    %217 = arith.addf %215, %216 : vector<2x32xf32>
    %218 = arith.index_cast %c5_i32 : i32 to index
    %c0_52 = arith.constant 0 : index
    %c0_53 = arith.constant 0 : index
    %219 = vector.load %arg4[%218, %c0_52, %c0_53] : memref<8x2x32xf32, #tpu.memory_space<vmem>>, vector<1x2x32xf32>
    %220 = vector.shape_cast %219 : vector<1x2x32xf32> to vector<2x32xf32>
    %221 = vector.shape_cast %217 : vector<2x32xf32> to vector<1x2x32xf32>
    tpu.vector_store %arg4[%218, %c0_52, %c0_53], %221 {strides = array<i32>} : memref<8x2x32xf32, #tpu.memory_space<vmem>>, vector<1x2x32xf32>,
    %c6_i32 = arith.constant 6 : i32
    %222 = arith.index_cast %c6_i32 : i32 to index
    %c0_54 = arith.constant 0 : index
    %c0_55 = arith.constant 0 : index
    %223 = vector.load %arg1[%222, %c0_54, %c0_55] : memref<8x2x96xf32, #tpu.memory_space<vmem>>, vector<1x2x96xf32>
    %224 = vector.shape_cast %223 : vector<1x2x96xf32> to vector<2x96xf32>
    %cst_56 = arith.constant dense<0.000000e+00> : vector<2x96xf32>
    %225 = tpu.matmul %217, %3, %cst_56 {dimension_numbers = #tpu.dot_dimension_numbers<[1], [0], [0], [1], [0, 0, 1, 1], [], []>} : vector<2x32xf32>, vector<32x96xf32>, vector<2x96xf32> -> vector<2x96xf32>
    %226 = vector.broadcast %4 : vector<1x96xf32> to vector<2x96xf32>
    %227 = arith.addf %225, %226 : vector<2x96xf32>
    %228 = vector.extract_strided_slice %224 {offsets = [0, 0], sizes = [2, 32], strides = [1, 1]} : vector<2x96xf32> to vector<2x32xf32>
    %229 = vector.extract_strided_slice %227 {offsets = [0, 0], sizes = [2, 32], strides = [1, 1]} : vector<2x96xf32> to vector<2x32xf32>
    %230 = arith.addf %228, %229 : vector<2x32xf32>
    %231 = arith.negf %230 : vector<2x32xf32>
    %232 = math.exp %231 : vector<2x32xf32>
    %cst_57 = arith.constant 1.000000e+00 : f32
    %233 = vector.broadcast %cst_57 : f32 to vector<2x32xf32>
    %234 = arith.addf %233, %232 : vector<2x32xf32>
    %235 = arith.divf %233, %234 : vector<2x32xf32>
    %236 = vector.extract_strided_slice %224 {offsets = [0, 32], sizes = [2, 32], strides = [1, 1]} : vector<2x96xf32> to vector<2x32xf32>
    %237 = vector.extract_strided_slice %227 {offsets = [0, 32], sizes = [2, 32], strides = [1, 1]} : vector<2x96xf32> to vector<2x32xf32>
    %238 = arith.addf %236, %237 : vector<2x32xf32>
    %239 = arith.negf %238 : vector<2x32xf32>
    %240 = math.exp %239 : vector<2x32xf32>
    %cst_58 = arith.constant 1.000000e+00 : f32
    %241 = vector.broadcast %cst_58 : f32 to vector<2x32xf32>
    %242 = arith.addf %241, %240 : vector<2x32xf32>
    %243 = arith.divf %241, %242 : vector<2x32xf32>
    %244 = vector.extract_strided_slice %224 {offsets = [0, 64], sizes = [2, 32], strides = [1, 1]} : vector<2x96xf32> to vector<2x32xf32>
    %245 = vector.extract_strided_slice %227 {offsets = [0, 64], sizes = [2, 32], strides = [1, 1]} : vector<2x96xf32> to vector<2x32xf32>
    %246 = arith.mulf %235, %245 : vector<2x32xf32>
    %247 = arith.addf %244, %246 : vector<2x32xf32>
    %248 = math.tanh %247 : vector<2x32xf32>
    %cst_59 = arith.constant 1.000000e+00 : f32
    %249 = vector.broadcast %cst_59 : f32 to vector<2x32xf32>
    %250 = arith.subf %249, %243 : vector<2x32xf32>
    %251 = arith.mulf %250, %248 : vector<2x32xf32>
    %252 = arith.mulf %243, %217 : vector<2x32xf32>
    %253 = arith.addf %251, %252 : vector<2x32xf32>
    %254 = arith.index_cast %c6_i32 : i32 to index
    %c0_60 = arith.constant 0 : index
    %c0_61 = arith.constant 0 : index
    %255 = vector.load %arg4[%254, %c0_60, %c0_61] : memref<8x2x32xf32, #tpu.memory_space<vmem>>, vector<1x2x32xf32>
    %256 = vector.shape_cast %255 : vector<1x2x32xf32> to vector<2x32xf32>
    %257 = vector.shape_cast %253 : vector<2x32xf32> to vector<1x2x32xf32>
    tpu.vector_store %arg4[%254, %c0_60, %c0_61], %257 {strides = array<i32>} : memref<8x2x32xf32, #tpu.memory_space<vmem>>, vector<1x2x32xf32>,
    %c7_i32 = arith.constant 7 : i32
    %258 = arith.index_cast %c7_i32 : i32 to index
    %c0_62 = arith.constant 0 : index
    %c0_63 = arith.constant 0 : index
    %259 = vector.load %arg1[%258, %c0_62, %c0_63] : memref<8x2x96xf32, #tpu.memory_space<vmem>>, vector<1x2x96xf32>
    %260 = vector.shape_cast %259 : vector<1x2x96xf32> to vector<2x96xf32>
    %cst_64 = arith.constant dense<0.000000e+00> : vector<2x96xf32>
    %261 = tpu.matmul %253, %3, %cst_64 {dimension_numbers = #tpu.dot_dimension_numbers<[1], [0], [0], [1], [0, 0, 1, 1], [], []>} : vector<2x32xf32>, vector<32x96xf32>, vector<2x96xf32> -> vector<2x96xf32>
    %262 = vector.broadcast %4 : vector<1x96xf32> to vector<2x96xf32>
    %263 = arith.addf %261, %262 : vector<2x96xf32>
    %264 = vector.extract_strided_slice %260 {offsets = [0, 0], sizes = [2, 32], strides = [1, 1]} : vector<2x96xf32> to vector<2x32xf32>
    %265 = vector.extract_strided_slice %263 {offsets = [0, 0], sizes = [2, 32], strides = [1, 1]} : vector<2x96xf32> to vector<2x32xf32>
    %266 = arith.addf %264, %265 : vector<2x32xf32>
    %267 = arith.negf %266 : vector<2x32xf32>
    %268 = math.exp %267 : vector<2x32xf32>
    %cst_65 = arith.constant 1.000000e+00 : f32
    %269 = vector.broadcast %cst_65 : f32 to vector<2x32xf32>
    %270 = arith.addf %269, %268 : vector<2x32xf32>
    %271 = arith.divf %269, %270 : vector<2x32xf32>
    %272 = vector.extract_strided_slice %260 {offsets = [0, 32], sizes = [2, 32], strides = [1, 1]} : vector<2x96xf32> to vector<2x32xf32>
    %273 = vector.extract_strided_slice %263 {offsets = [0, 32], sizes = [2, 32], strides = [1, 1]} : vector<2x96xf32> to vector<2x32xf32>
    %274 = arith.addf %272, %273 : vector<2x32xf32>
    %275 = arith.negf %274 : vector<2x32xf32>
    %276 = math.exp %275 : vector<2x32xf32>
    %cst_66 = arith.constant 1.000000e+00 : f32
    %277 = vector.broadcast %cst_66 : f32 to vector<2x32xf32>
    %278 = arith.addf %277, %276 : vector<2x32xf32>
    %279 = arith.divf %277, %278 : vector<2x32xf32>
    %280 = vector.extract_strided_slice %260 {offsets = [0, 64], sizes = [2, 32], strides = [1, 1]} : vector<2x96xf32> to vector<2x32xf32>
    %281 = vector.extract_strided_slice %263 {offsets = [0, 64], sizes = [2, 32], strides = [1, 1]} : vector<2x96xf32> to vector<2x32xf32>
    %282 = arith.mulf %271, %281 : vector<2x32xf32>
    %283 = arith.addf %280, %282 : vector<2x32xf32>
    %284 = math.tanh %283 : vector<2x32xf32>
    %cst_67 = arith.constant 1.000000e+00 : f32
    %285 = vector.broadcast %cst_67 : f32 to vector<2x32xf32>
    %286 = arith.subf %285, %279 : vector<2x32xf32>
    %287 = arith.mulf %286, %284 : vector<2x32xf32>
    %288 = arith.mulf %279, %253 : vector<2x32xf32>
    %289 = arith.addf %287, %288 : vector<2x32xf32>
    %290 = arith.index_cast %c7_i32 : i32 to index
    %c0_68 = arith.constant 0 : index
    %c0_69 = arith.constant 0 : index
    %291 = vector.load %arg4[%290, %c0_68, %c0_69] : memref<8x2x32xf32, #tpu.memory_space<vmem>>, vector<1x2x32xf32>
    %292 = vector.shape_cast %291 : vector<1x2x32xf32> to vector<2x32xf32>
    %293 = vector.shape_cast %289 : vector<2x32xf32> to vector<1x2x32xf32>
    tpu.vector_store %arg4[%290, %c0_68, %c0_69], %293 {strides = array<i32>} : memref<8x2x32xf32, #tpu.memory_space<vmem>>, vector<1x2x32xf32>,
    %c8_i32 = arith.constant 8 : i32
    %c0_70 = arith.constant 0 : index
    %c0_71 = arith.constant 0 : index
    %294 = vector.load %arg5[%c0_70, %c0_71] : memref<2x32xf32, #tpu.memory_space<vmem>>, vector<2x32xf32>
    tpu.vector_store %arg5[%c0_70, %c0_71], %289 {strides = array<i32>} : memref<2x32xf32, #tpu.memory_space<vmem>>, vector<2x32xf32>,
    return
  }
  func.func @transform_0(%arg0: i32) -> (i32, i32, i32) {
    %c0_i32 = arith.constant 0 : i32
    %c0_i32_0 = arith.constant 0 : i32
    %c0_i32_1 = arith.constant 0 : i32
    return %arg0, %c0_i32, %c0_i32_0 : i32, i32, i32
  }
  func.func @transform_1(%arg0: i32) -> (i32, i32) {
    %c0_i32 = arith.constant 0 : i32
    %c0_i32_0 = arith.constant 0 : i32
    %c0_i32_1 = arith.constant 0 : i32
    return %c0_i32, %c0_i32_0 : i32, i32
  }
  func.func @transform_2(%arg0: i32) -> (i32, i32) {
    %c0_i32 = arith.constant 0 : i32
    %c0_i32_0 = arith.constant 0 : i32
    %c0_i32_1 = arith.constant 0 : i32
    return %c0_i32, %c0_i32_0 : i32, i32
  }
  func.func @transform_3(%arg0: i32) -> (i32, i32, i32) {
    %c0_i32 = arith.constant 0 : i32
    %c0_i32_0 = arith.constant 0 : i32
    %c0_i32_1 = arith.constant 0 : i32
    return %arg0, %c0_i32, %c0_i32_0 : i32, i32, i32
  }
}

module attributes {stable_mosaic.version = 11 : i64} {
  func.func @ih_projection_kernel(%arg0: memref<16x32xf32, #tpu.memory_space<vmem>>, %arg1: memref<32x96xf32, #tpu.memory_space<vmem>>, %arg2: memref<1x96xf32, #tpu.memory_space<vmem>>, %arg3: memref<16x96xf32, #tpu.memory_space<vmem>>) attributes {dimension_semantics = [], scalar_prefetch = 0 : i64, scratch_operands = 0 : i64, tpu.core_type = #tpu.core_type<tc>} {
    %c0 = arith.constant 0 : index
    %c0_0 = arith.constant 0 : index
    %0 = vector.load %arg0[%c0, %c0_0] : memref<16x32xf32, #tpu.memory_space<vmem>>, vector<16x32xf32>
    %c0_1 = arith.constant 0 : index
    %c0_2 = arith.constant 0 : index
    %1 = vector.load %arg1[%c0_1, %c0_2] : memref<32x96xf32, #tpu.memory_space<vmem>>, vector<32x96xf32>
    %cst = arith.constant dense<0.000000e+00> : vector<16x96xf32>
    %2 = tpu.matmul %0, %1, %cst {dimension_numbers = #tpu.dot_dimension_numbers<[1], [0], [0], [1], [0, 0, 1, 1], [], []>} : vector<16x32xf32>, vector<32x96xf32>, vector<16x96xf32> -> vector<16x96xf32>
    %c0_3 = arith.constant 0 : index
    %c0_4 = arith.constant 0 : index
    %3 = vector.load %arg2[%c0_3, %c0_4] : memref<1x96xf32, #tpu.memory_space<vmem>>, vector<1x96xf32>
    %4 = vector.broadcast %3 : vector<1x96xf32> to vector<16x96xf32>
    %5 = arith.addf %2, %4 : vector<16x96xf32>
    %c0_5 = arith.constant 0 : index
    %c0_6 = arith.constant 0 : index
    %6 = vector.load %arg3[%c0_5, %c0_6] : memref<16x96xf32, #tpu.memory_space<vmem>>, vector<16x96xf32>
    tpu.vector_store %arg3[%c0_5, %c0_6], %5 {strides = array<i32>} : memref<16x96xf32, #tpu.memory_space<vmem>>, vector<16x96xf32>,
    return
  }
}

module attributes {stable_mosaic.version = 11 : i64} {
  func.func @gru_last_layer_fc_kernel(%arg0: i32, %arg1: memref<8x2x96xf32, #tpu.memory_space<vmem>>, %arg2: memref<32x96xf32, #tpu.memory_space<vmem>>, %arg3: memref<1x96xf32, #tpu.memory_space<vmem>>, %arg4: memref<32x4xf32, #tpu.memory_space<vmem>>, %arg5: memref<1x4xf32, #tpu.memory_space<vmem>>, %arg6: memref<2x4xf32, #tpu.memory_space<vmem>>, %arg7: memref<2x32xf32, #tpu.memory_space<vmem>>) attributes {dimension_semantics = [#tpu.dimension_semantics<arbitrary>], iteration_bounds = array<i64: 1>, scalar_prefetch = 0 : i64, scratch_operands = 1 : i64, tpu.core_type = #tpu.core_type<tc>, window_params = [{transform_indices = @transform_0, window_bounds = array<i64: 8, 2, 96>}, {pipeline_mode = #tpu.pipeline_mode<synchronous>, transform_indices = @transform_1, window_bounds = array<i64: 32, 96>}, {pipeline_mode = #tpu.pipeline_mode<synchronous>, transform_indices = @transform_2, window_bounds = array<i64: 1, 96>}, {pipeline_mode = #tpu.pipeline_mode<synchronous>, transform_indices = @transform_3, window_bounds = array<i64: 32, 4>}, {pipeline_mode = #tpu.pipeline_mode<synchronous>, transform_indices = @transform_4, window_bounds = array<i64: 1, 4>}, {pipeline_mode = #tpu.pipeline_mode<synchronous>, transform_indices = @transform_5, window_bounds = array<i64: 2, 4>}]} {
    %c0_i32 = arith.constant 0 : i32
    %0 = arith.cmpi eq, %arg0, %c0_i32 : i32
    %1 = arith.extui %0 : i1 to i32
    %c0_i32_0 = arith.constant 0 : i32
    %2 = arith.cmpi ne, %1, %c0_i32_0 : i32
    scf.if %2 {
      %cst_58 = arith.constant 0.000000e+00 : f32
      %266 = vector.broadcast %cst_58 : f32 to vector<2x32xf32>
      %c0_59 = arith.constant 0 : index
      %c0_60 = arith.constant 0 : index
      %267 = vector.load %arg7[%c0_59, %c0_60] : memref<2x32xf32, #tpu.memory_space<vmem>>, vector<2x32xf32>
      tpu.vector_store %arg7[%c0_59, %c0_60], %266 {strides = array<i32>} : memref<2x32xf32, #tpu.memory_space<vmem>>, vector<2x32xf32>,
    } else {
    }
    %c0 = arith.constant 0 : index
    %c0_1 = arith.constant 0 : index
    %3 = vector.load %arg2[%c0, %c0_1] : memref<32x96xf32, #tpu.memory_space<vmem>>, vector<32x96xf32>
    %c0_2 = arith.constant 0 : index
    %c0_3 = arith.constant 0 : index
    %4 = vector.load %arg3[%c0_2, %c0_3] : memref<1x96xf32, #tpu.memory_space<vmem>>, vector<1x96xf32>
    %c0_4 = arith.constant 0 : index
    %c0_5 = arith.constant 0 : index
    %5 = vector.load %arg7[%c0_4, %c0_5] : memref<2x32xf32, #tpu.memory_space<vmem>>, vector<2x32xf32>
    %c0_i32_6 = arith.constant 0 : i32
    %6 = arith.index_cast %c0_i32_6 : i32 to index
    %c0_7 = arith.constant 0 : index
    %c0_8 = arith.constant 0 : index
    %7 = vector.load %arg1[%6, %c0_7, %c0_8] : memref<8x2x96xf32, #tpu.memory_space<vmem>>, vector<1x2x96xf32>
    %8 = vector.shape_cast %7 : vector<1x2x96xf32> to vector<2x96xf32>
    %cst = arith.constant dense<0.000000e+00> : vector<2x96xf32>
    %9 = tpu.matmul %5, %3, %cst {dimension_numbers = #tpu.dot_dimension_numbers<[1], [0], [0], [1], [0, 0, 1, 1], [], []>} : vector<2x32xf32>, vector<32x96xf32>, vector<2x96xf32> -> vector<2x96xf32>
    %10 = vector.broadcast %4 : vector<1x96xf32> to vector<2x96xf32>
    %11 = arith.addf %9, %10 : vector<2x96xf32>
    %12 = vector.extract_strided_slice %8 {offsets = [0, 0], sizes = [2, 32], strides = [1, 1]} : vector<2x96xf32> to vector<2x32xf32>
    %13 = vector.extract_strided_slice %11 {offsets = [0, 0], sizes = [2, 32], strides = [1, 1]} : vector<2x96xf32> to vector<2x32xf32>
    %14 = arith.addf %12, %13 : vector<2x32xf32>
    %15 = arith.negf %14 : vector<2x32xf32>
    %16 = math.exp %15 : vector<2x32xf32>
    %cst_9 = arith.constant 1.000000e+00 : f32
    %17 = vector.broadcast %cst_9 : f32 to vector<2x32xf32>
    %18 = arith.addf %17, %16 : vector<2x32xf32>
    %19 = arith.divf %17, %18 : vector<2x32xf32>
    %20 = vector.extract_strided_slice %8 {offsets = [0, 32], sizes = [2, 32], strides = [1, 1]} : vector<2x96xf32> to vector<2x32xf32>
    %21 = vector.extract_strided_slice %11 {offsets = [0, 32], sizes = [2, 32], strides = [1, 1]} : vector<2x96xf32> to vector<2x32xf32>
    %22 = arith.addf %20, %21 : vector<2x32xf32>
    %23 = arith.negf %22 : vector<2x32xf32>
    %24 = math.exp %23 : vector<2x32xf32>
    %cst_10 = arith.constant 1.000000e+00 : f32
    %25 = vector.broadcast %cst_10 : f32 to vector<2x32xf32>
    %26 = arith.addf %25, %24 : vector<2x32xf32>
    %27 = arith.divf %25, %26 : vector<2x32xf32>
    %28 = vector.extract_strided_slice %8 {offsets = [0, 64], sizes = [2, 32], strides = [1, 1]} : vector<2x96xf32> to vector<2x32xf32>
    %29 = vector.extract_strided_slice %11 {offsets = [0, 64], sizes = [2, 32], strides = [1, 1]} : vector<2x96xf32> to vector<2x32xf32>
    %30 = arith.mulf %19, %29 : vector<2x32xf32>
    %31 = arith.addf %28, %30 : vector<2x32xf32>
    %32 = math.tanh %31 : vector<2x32xf32>
    %cst_11 = arith.constant 1.000000e+00 : f32
    %33 = vector.broadcast %cst_11 : f32 to vector<2x32xf32>
    %34 = arith.subf %33, %27 : vector<2x32xf32>
    %35 = arith.mulf %34, %32 : vector<2x32xf32>
    %36 = arith.mulf %27, %5 : vector<2x32xf32>
    %37 = arith.addf %35, %36 : vector<2x32xf32>
    %c1_i32 = arith.constant 1 : i32
    %38 = arith.index_cast %c1_i32 : i32 to index
    %c0_12 = arith.constant 0 : index
    %c0_13 = arith.constant 0 : index
    %39 = vector.load %arg1[%38, %c0_12, %c0_13] : memref<8x2x96xf32, #tpu.memory_space<vmem>>, vector<1x2x96xf32>
    %40 = vector.shape_cast %39 : vector<1x2x96xf32> to vector<2x96xf32>
    %cst_14 = arith.constant dense<0.000000e+00> : vector<2x96xf32>
    %41 = tpu.matmul %37, %3, %cst_14 {dimension_numbers = #tpu.dot_dimension_numbers<[1], [0], [0], [1], [0, 0, 1, 1], [], []>} : vector<2x32xf32>, vector<32x96xf32>, vector<2x96xf32> -> vector<2x96xf32>
    %42 = vector.broadcast %4 : vector<1x96xf32> to vector<2x96xf32>
    %43 = arith.addf %41, %42 : vector<2x96xf32>
    %44 = vector.extract_strided_slice %40 {offsets = [0, 0], sizes = [2, 32], strides = [1, 1]} : vector<2x96xf32> to vector<2x32xf32>
    %45 = vector.extract_strided_slice %43 {offsets = [0, 0], sizes = [2, 32], strides = [1, 1]} : vector<2x96xf32> to vector<2x32xf32>
    %46 = arith.addf %44, %45 : vector<2x32xf32>
    %47 = arith.negf %46 : vector<2x32xf32>
    %48 = math.exp %47 : vector<2x32xf32>
    %cst_15 = arith.constant 1.000000e+00 : f32
    %49 = vector.broadcast %cst_15 : f32 to vector<2x32xf32>
    %50 = arith.addf %49, %48 : vector<2x32xf32>
    %51 = arith.divf %49, %50 : vector<2x32xf32>
    %52 = vector.extract_strided_slice %40 {offsets = [0, 32], sizes = [2, 32], strides = [1, 1]} : vector<2x96xf32> to vector<2x32xf32>
    %53 = vector.extract_strided_slice %43 {offsets = [0, 32], sizes = [2, 32], strides = [1, 1]} : vector<2x96xf32> to vector<2x32xf32>
    %54 = arith.addf %52, %53 : vector<2x32xf32>
    %55 = arith.negf %54 : vector<2x32xf32>
    %56 = math.exp %55 : vector<2x32xf32>
    %cst_16 = arith.constant 1.000000e+00 : f32
    %57 = vector.broadcast %cst_16 : f32 to vector<2x32xf32>
    %58 = arith.addf %57, %56 : vector<2x32xf32>
    %59 = arith.divf %57, %58 : vector<2x32xf32>
    %60 = vector.extract_strided_slice %40 {offsets = [0, 64], sizes = [2, 32], strides = [1, 1]} : vector<2x96xf32> to vector<2x32xf32>
    %61 = vector.extract_strided_slice %43 {offsets = [0, 64], sizes = [2, 32], strides = [1, 1]} : vector<2x96xf32> to vector<2x32xf32>
    %62 = arith.mulf %51, %61 : vector<2x32xf32>
    %63 = arith.addf %60, %62 : vector<2x32xf32>
    %64 = math.tanh %63 : vector<2x32xf32>
    %cst_17 = arith.constant 1.000000e+00 : f32
    %65 = vector.broadcast %cst_17 : f32 to vector<2x32xf32>
    %66 = arith.subf %65, %59 : vector<2x32xf32>
    %67 = arith.mulf %66, %64 : vector<2x32xf32>
    %68 = arith.mulf %59, %37 : vector<2x32xf32>
    %69 = arith.addf %67, %68 : vector<2x32xf32>
    %c2_i32 = arith.constant 2 : i32
    %70 = arith.index_cast %c2_i32 : i32 to index
    %c0_18 = arith.constant 0 : index
    %c0_19 = arith.constant 0 : index
    %71 = vector.load %arg1[%70, %c0_18, %c0_19] : memref<8x2x96xf32, #tpu.memory_space<vmem>>, vector<1x2x96xf32>
    %72 = vector.shape_cast %71 : vector<1x2x96xf32> to vector<2x96xf32>
    %cst_20 = arith.constant dense<0.000000e+00> : vector<2x96xf32>
    %73 = tpu.matmul %69, %3, %cst_20 {dimension_numbers = #tpu.dot_dimension_numbers<[1], [0], [0], [1], [0, 0, 1, 1], [], []>} : vector<2x32xf32>, vector<32x96xf32>, vector<2x96xf32> -> vector<2x96xf32>
    %74 = vector.broadcast %4 : vector<1x96xf32> to vector<2x96xf32>
    %75 = arith.addf %73, %74 : vector<2x96xf32>
    %76 = vector.extract_strided_slice %72 {offsets = [0, 0], sizes = [2, 32], strides = [1, 1]} : vector<2x96xf32> to vector<2x32xf32>
    %77 = vector.extract_strided_slice %75 {offsets = [0, 0], sizes = [2, 32], strides = [1, 1]} : vector<2x96xf32> to vector<2x32xf32>
    %78 = arith.addf %76, %77 : vector<2x32xf32>
    %79 = arith.negf %78 : vector<2x32xf32>
    %80 = math.exp %79 : vector<2x32xf32>
    %cst_21 = arith.constant 1.000000e+00 : f32
    %81 = vector.broadcast %cst_21 : f32 to vector<2x32xf32>
    %82 = arith.addf %81, %80 : vector<2x32xf32>
    %83 = arith.divf %81, %82 : vector<2x32xf32>
    %84 = vector.extract_strided_slice %72 {offsets = [0, 32], sizes = [2, 32], strides = [1, 1]} : vector<2x96xf32> to vector<2x32xf32>
    %85 = vector.extract_strided_slice %75 {offsets = [0, 32], sizes = [2, 32], strides = [1, 1]} : vector<2x96xf32> to vector<2x32xf32>
    %86 = arith.addf %84, %85 : vector<2x32xf32>
    %87 = arith.negf %86 : vector<2x32xf32>
    %88 = math.exp %87 : vector<2x32xf32>
    %cst_22 = arith.constant 1.000000e+00 : f32
    %89 = vector.broadcast %cst_22 : f32 to vector<2x32xf32>
    %90 = arith.addf %89, %88 : vector<2x32xf32>
    %91 = arith.divf %89, %90 : vector<2x32xf32>
    %92 = vector.extract_strided_slice %72 {offsets = [0, 64], sizes = [2, 32], strides = [1, 1]} : vector<2x96xf32> to vector<2x32xf32>
    %93 = vector.extract_strided_slice %75 {offsets = [0, 64], sizes = [2, 32], strides = [1, 1]} : vector<2x96xf32> to vector<2x32xf32>
    %94 = arith.mulf %83, %93 : vector<2x32xf32>
    %95 = arith.addf %92, %94 : vector<2x32xf32>
    %96 = math.tanh %95 : vector<2x32xf32>
    %cst_23 = arith.constant 1.000000e+00 : f32
    %97 = vector.broadcast %cst_23 : f32 to vector<2x32xf32>
    %98 = arith.subf %97, %91 : vector<2x32xf32>
    %99 = arith.mulf %98, %96 : vector<2x32xf32>
    %100 = arith.mulf %91, %69 : vector<2x32xf32>
    %101 = arith.addf %99, %100 : vector<2x32xf32>
    %c3_i32 = arith.constant 3 : i32
    %102 = arith.index_cast %c3_i32 : i32 to index
    %c0_24 = arith.constant 0 : index
    %c0_25 = arith.constant 0 : index
    %103 = vector.load %arg1[%102, %c0_24, %c0_25] : memref<8x2x96xf32, #tpu.memory_space<vmem>>, vector<1x2x96xf32>
    %104 = vector.shape_cast %103 : vector<1x2x96xf32> to vector<2x96xf32>
    %cst_26 = arith.constant dense<0.000000e+00> : vector<2x96xf32>
    %105 = tpu.matmul %101, %3, %cst_26 {dimension_numbers = #tpu.dot_dimension_numbers<[1], [0], [0], [1], [0, 0, 1, 1], [], []>} : vector<2x32xf32>, vector<32x96xf32>, vector<2x96xf32> -> vector<2x96xf32>
    %106 = vector.broadcast %4 : vector<1x96xf32> to vector<2x96xf32>
    %107 = arith.addf %105, %106 : vector<2x96xf32>
    %108 = vector.extract_strided_slice %104 {offsets = [0, 0], sizes = [2, 32], strides = [1, 1]} : vector<2x96xf32> to vector<2x32xf32>
    %109 = vector.extract_strided_slice %107 {offsets = [0, 0], sizes = [2, 32], strides = [1, 1]} : vector<2x96xf32> to vector<2x32xf32>
    %110 = arith.addf %108, %109 : vector<2x32xf32>
    %111 = arith.negf %110 : vector<2x32xf32>
    %112 = math.exp %111 : vector<2x32xf32>
    %cst_27 = arith.constant 1.000000e+00 : f32
    %113 = vector.broadcast %cst_27 : f32 to vector<2x32xf32>
    %114 = arith.addf %113, %112 : vector<2x32xf32>
    %115 = arith.divf %113, %114 : vector<2x32xf32>
    %116 = vector.extract_strided_slice %104 {offsets = [0, 32], sizes = [2, 32], strides = [1, 1]} : vector<2x96xf32> to vector<2x32xf32>
    %117 = vector.extract_strided_slice %107 {offsets = [0, 32], sizes = [2, 32], strides = [1, 1]} : vector<2x96xf32> to vector<2x32xf32>
    %118 = arith.addf %116, %117 : vector<2x32xf32>
    %119 = arith.negf %118 : vector<2x32xf32>
    %120 = math.exp %119 : vector<2x32xf32>
    %cst_28 = arith.constant 1.000000e+00 : f32
    %121 = vector.broadcast %cst_28 : f32 to vector<2x32xf32>
    %122 = arith.addf %121, %120 : vector<2x32xf32>
    %123 = arith.divf %121, %122 : vector<2x32xf32>
    %124 = vector.extract_strided_slice %104 {offsets = [0, 64], sizes = [2, 32], strides = [1, 1]} : vector<2x96xf32> to vector<2x32xf32>
    %125 = vector.extract_strided_slice %107 {offsets = [0, 64], sizes = [2, 32], strides = [1, 1]} : vector<2x96xf32> to vector<2x32xf32>
    %126 = arith.mulf %115, %125 : vector<2x32xf32>
    %127 = arith.addf %124, %126 : vector<2x32xf32>
    %128 = math.tanh %127 : vector<2x32xf32>
    %cst_29 = arith.constant 1.000000e+00 : f32
    %129 = vector.broadcast %cst_29 : f32 to vector<2x32xf32>
    %130 = arith.subf %129, %123 : vector<2x32xf32>
    %131 = arith.mulf %130, %128 : vector<2x32xf32>
    %132 = arith.mulf %123, %101 : vector<2x32xf32>
    %133 = arith.addf %131, %132 : vector<2x32xf32>
    %c4_i32 = arith.constant 4 : i32
    %134 = arith.index_cast %c4_i32 : i32 to index
    %c0_30 = arith.constant 0 : index
    %c0_31 = arith.constant 0 : index
    %135 = vector.load %arg1[%134, %c0_30, %c0_31] : memref<8x2x96xf32, #tpu.memory_space<vmem>>, vector<1x2x96xf32>
    %136 = vector.shape_cast %135 : vector<1x2x96xf32> to vector<2x96xf32>
    %cst_32 = arith.constant dense<0.000000e+00> : vector<2x96xf32>
    %137 = tpu.matmul %133, %3, %cst_32 {dimension_numbers = #tpu.dot_dimension_numbers<[1], [0], [0], [1], [0, 0, 1, 1], [], []>} : vector<2x32xf32>, vector<32x96xf32>, vector<2x96xf32> -> vector<2x96xf32>
    %138 = vector.broadcast %4 : vector<1x96xf32> to vector<2x96xf32>
    %139 = arith.addf %137, %138 : vector<2x96xf32>
    %140 = vector.extract_strided_slice %136 {offsets = [0, 0], sizes = [2, 32], strides = [1, 1]} : vector<2x96xf32> to vector<2x32xf32>
    %141 = vector.extract_strided_slice %139 {offsets = [0, 0], sizes = [2, 32], strides = [1, 1]} : vector<2x96xf32> to vector<2x32xf32>
    %142 = arith.addf %140, %141 : vector<2x32xf32>
    %143 = arith.negf %142 : vector<2x32xf32>
    %144 = math.exp %143 : vector<2x32xf32>
    %cst_33 = arith.constant 1.000000e+00 : f32
    %145 = vector.broadcast %cst_33 : f32 to vector<2x32xf32>
    %146 = arith.addf %145, %144 : vector<2x32xf32>
    %147 = arith.divf %145, %146 : vector<2x32xf32>
    %148 = vector.extract_strided_slice %136 {offsets = [0, 32], sizes = [2, 32], strides = [1, 1]} : vector<2x96xf32> to vector<2x32xf32>
    %149 = vector.extract_strided_slice %139 {offsets = [0, 32], sizes = [2, 32], strides = [1, 1]} : vector<2x96xf32> to vector<2x32xf32>
    %150 = arith.addf %148, %149 : vector<2x32xf32>
    %151 = arith.negf %150 : vector<2x32xf32>
    %152 = math.exp %151 : vector<2x32xf32>
    %cst_34 = arith.constant 1.000000e+00 : f32
    %153 = vector.broadcast %cst_34 : f32 to vector<2x32xf32>
    %154 = arith.addf %153, %152 : vector<2x32xf32>
    %155 = arith.divf %153, %154 : vector<2x32xf32>
    %156 = vector.extract_strided_slice %136 {offsets = [0, 64], sizes = [2, 32], strides = [1, 1]} : vector<2x96xf32> to vector<2x32xf32>
    %157 = vector.extract_strided_slice %139 {offsets = [0, 64], sizes = [2, 32], strides = [1, 1]} : vector<2x96xf32> to vector<2x32xf32>
    %158 = arith.mulf %147, %157 : vector<2x32xf32>
    %159 = arith.addf %156, %158 : vector<2x32xf32>
    %160 = math.tanh %159 : vector<2x32xf32>
    %cst_35 = arith.constant 1.000000e+00 : f32
    %161 = vector.broadcast %cst_35 : f32 to vector<2x32xf32>
    %162 = arith.subf %161, %155 : vector<2x32xf32>
    %163 = arith.mulf %162, %160 : vector<2x32xf32>
    %164 = arith.mulf %155, %133 : vector<2x32xf32>
    %165 = arith.addf %163, %164 : vector<2x32xf32>
    %c5_i32 = arith.constant 5 : i32
    %166 = arith.index_cast %c5_i32 : i32 to index
    %c0_36 = arith.constant 0 : index
    %c0_37 = arith.constant 0 : index
    %167 = vector.load %arg1[%166, %c0_36, %c0_37] : memref<8x2x96xf32, #tpu.memory_space<vmem>>, vector<1x2x96xf32>
    %168 = vector.shape_cast %167 : vector<1x2x96xf32> to vector<2x96xf32>
    %cst_38 = arith.constant dense<0.000000e+00> : vector<2x96xf32>
    %169 = tpu.matmul %165, %3, %cst_38 {dimension_numbers = #tpu.dot_dimension_numbers<[1], [0], [0], [1], [0, 0, 1, 1], [], []>} : vector<2x32xf32>, vector<32x96xf32>, vector<2x96xf32> -> vector<2x96xf32>
    %170 = vector.broadcast %4 : vector<1x96xf32> to vector<2x96xf32>
    %171 = arith.addf %169, %170 : vector<2x96xf32>
    %172 = vector.extract_strided_slice %168 {offsets = [0, 0], sizes = [2, 32], strides = [1, 1]} : vector<2x96xf32> to vector<2x32xf32>
    %173 = vector.extract_strided_slice %171 {offsets = [0, 0], sizes = [2, 32], strides = [1, 1]} : vector<2x96xf32> to vector<2x32xf32>
    %174 = arith.addf %172, %173 : vector<2x32xf32>
    %175 = arith.negf %174 : vector<2x32xf32>
    %176 = math.exp %175 : vector<2x32xf32>
    %cst_39 = arith.constant 1.000000e+00 : f32
    %177 = vector.broadcast %cst_39 : f32 to vector<2x32xf32>
    %178 = arith.addf %177, %176 : vector<2x32xf32>
    %179 = arith.divf %177, %178 : vector<2x32xf32>
    %180 = vector.extract_strided_slice %168 {offsets = [0, 32], sizes = [2, 32], strides = [1, 1]} : vector<2x96xf32> to vector<2x32xf32>
    %181 = vector.extract_strided_slice %171 {offsets = [0, 32], sizes = [2, 32], strides = [1, 1]} : vector<2x96xf32> to vector<2x32xf32>
    %182 = arith.addf %180, %181 : vector<2x32xf32>
    %183 = arith.negf %182 : vector<2x32xf32>
    %184 = math.exp %183 : vector<2x32xf32>
    %cst_40 = arith.constant 1.000000e+00 : f32
    %185 = vector.broadcast %cst_40 : f32 to vector<2x32xf32>
    %186 = arith.addf %185, %184 : vector<2x32xf32>
    %187 = arith.divf %185, %186 : vector<2x32xf32>
    %188 = vector.extract_strided_slice %168 {offsets = [0, 64], sizes = [2, 32], strides = [1, 1]} : vector<2x96xf32> to vector<2x32xf32>
    %189 = vector.extract_strided_slice %171 {offsets = [0, 64], sizes = [2, 32], strides = [1, 1]} : vector<2x96xf32> to vector<2x32xf32>
    %190 = arith.mulf %179, %189 : vector<2x32xf32>
    %191 = arith.addf %188, %190 : vector<2x32xf32>
    %192 = math.tanh %191 : vector<2x32xf32>
    %cst_41 = arith.constant 1.000000e+00 : f32
    %193 = vector.broadcast %cst_41 : f32 to vector<2x32xf32>
    %194 = arith.subf %193, %187 : vector<2x32xf32>
    %195 = arith.mulf %194, %192 : vector<2x32xf32>
    %196 = arith.mulf %187, %165 : vector<2x32xf32>
    %197 = arith.addf %195, %196 : vector<2x32xf32>
    %c6_i32 = arith.constant 6 : i32
    %198 = arith.index_cast %c6_i32 : i32 to index
    %c0_42 = arith.constant 0 : index
    %c0_43 = arith.constant 0 : index
    %199 = vector.load %arg1[%198, %c0_42, %c0_43] : memref<8x2x96xf32, #tpu.memory_space<vmem>>, vector<1x2x96xf32>
    %200 = vector.shape_cast %199 : vector<1x2x96xf32> to vector<2x96xf32>
    %cst_44 = arith.constant dense<0.000000e+00> : vector<2x96xf32>
    %201 = tpu.matmul %197, %3, %cst_44 {dimension_numbers = #tpu.dot_dimension_numbers<[1], [0], [0], [1], [0, 0, 1, 1], [], []>} : vector<2x32xf32>, vector<32x96xf32>, vector<2x96xf32> -> vector<2x96xf32>
    %202 = vector.broadcast %4 : vector<1x96xf32> to vector<2x96xf32>
    %203 = arith.addf %201, %202 : vector<2x96xf32>
    %204 = vector.extract_strided_slice %200 {offsets = [0, 0], sizes = [2, 32], strides = [1, 1]} : vector<2x96xf32> to vector<2x32xf32>
    %205 = vector.extract_strided_slice %203 {offsets = [0, 0], sizes = [2, 32], strides = [1, 1]} : vector<2x96xf32> to vector<2x32xf32>
    %206 = arith.addf %204, %205 : vector<2x32xf32>
    %207 = arith.negf %206 : vector<2x32xf32>
    %208 = math.exp %207 : vector<2x32xf32>
    %cst_45 = arith.constant 1.000000e+00 : f32
    %209 = vector.broadcast %cst_45 : f32 to vector<2x32xf32>
    %210 = arith.addf %209, %208 : vector<2x32xf32>
    %211 = arith.divf %209, %210 : vector<2x32xf32>
    %212 = vector.extract_strided_slice %200 {offsets = [0, 32], sizes = [2, 32], strides = [1, 1]} : vector<2x96xf32> to vector<2x32xf32>
    %213 = vector.extract_strided_slice %203 {offsets = [0, 32], sizes = [2, 32], strides = [1, 1]} : vector<2x96xf32> to vector<2x32xf32>
    %214 = arith.addf %212, %213 : vector<2x32xf32>
    %215 = arith.negf %214 : vector<2x32xf32>
    %216 = math.exp %215 : vector<2x32xf32>
    %cst_46 = arith.constant 1.000000e+00 : f32
    %217 = vector.broadcast %cst_46 : f32 to vector<2x32xf32>
    %218 = arith.addf %217, %216 : vector<2x32xf32>
    %219 = arith.divf %217, %218 : vector<2x32xf32>
    %220 = vector.extract_strided_slice %200 {offsets = [0, 64], sizes = [2, 32], strides = [1, 1]} : vector<2x96xf32> to vector<2x32xf32>
    %221 = vector.extract_strided_slice %203 {offsets = [0, 64], sizes = [2, 32], strides = [1, 1]} : vector<2x96xf32> to vector<2x32xf32>
    %222 = arith.mulf %211, %221 : vector<2x32xf32>
    %223 = arith.addf %220, %222 : vector<2x32xf32>
    %224 = math.tanh %223 : vector<2x32xf32>
    %cst_47 = arith.constant 1.000000e+00 : f32
    %225 = vector.broadcast %cst_47 : f32 to vector<2x32xf32>
    %226 = arith.subf %225, %219 : vector<2x32xf32>
    %227 = arith.mulf %226, %224 : vector<2x32xf32>
    %228 = arith.mulf %219, %197 : vector<2x32xf32>
    %229 = arith.addf %227, %228 : vector<2x32xf32>
    %c7_i32 = arith.constant 7 : i32
    %230 = arith.index_cast %c7_i32 : i32 to index
    %c0_48 = arith.constant 0 : index
    %c0_49 = arith.constant 0 : index
    %231 = vector.load %arg1[%230, %c0_48, %c0_49] : memref<8x2x96xf32, #tpu.memory_space<vmem>>, vector<1x2x96xf32>
    %232 = vector.shape_cast %231 : vector<1x2x96xf32> to vector<2x96xf32>
    %cst_50 = arith.constant dense<0.000000e+00> : vector<2x96xf32>
    %233 = tpu.matmul %229, %3, %cst_50 {dimension_numbers = #tpu.dot_dimension_numbers<[1], [0], [0], [1], [0, 0, 1, 1], [], []>} : vector<2x32xf32>, vector<32x96xf32>, vector<2x96xf32> -> vector<2x96xf32>
    %234 = vector.broadcast %4 : vector<1x96xf32> to vector<2x96xf32>
    %235 = arith.addf %233, %234 : vector<2x96xf32>
    %236 = vector.extract_strided_slice %232 {offsets = [0, 0], sizes = [2, 32], strides = [1, 1]} : vector<2x96xf32> to vector<2x32xf32>
    %237 = vector.extract_strided_slice %235 {offsets = [0, 0], sizes = [2, 32], strides = [1, 1]} : vector<2x96xf32> to vector<2x32xf32>
    %238 = arith.addf %236, %237 : vector<2x32xf32>
    %239 = arith.negf %238 : vector<2x32xf32>
    %240 = math.exp %239 : vector<2x32xf32>
    %cst_51 = arith.constant 1.000000e+00 : f32
    %241 = vector.broadcast %cst_51 : f32 to vector<2x32xf32>
    %242 = arith.addf %241, %240 : vector<2x32xf32>
    %243 = arith.divf %241, %242 : vector<2x32xf32>
    %244 = vector.extract_strided_slice %232 {offsets = [0, 32], sizes = [2, 32], strides = [1, 1]} : vector<2x96xf32> to vector<2x32xf32>
    %245 = vector.extract_strided_slice %235 {offsets = [0, 32], sizes = [2, 32], strides = [1, 1]} : vector<2x96xf32> to vector<2x32xf32>
    %246 = arith.addf %244, %245 : vector<2x32xf32>
    %247 = arith.negf %246 : vector<2x32xf32>
    %248 = math.exp %247 : vector<2x32xf32>
    %cst_52 = arith.constant 1.000000e+00 : f32
    %249 = vector.broadcast %cst_52 : f32 to vector<2x32xf32>
    %250 = arith.addf %249, %248 : vector<2x32xf32>
    %251 = arith.divf %249, %250 : vector<2x32xf32>
    %252 = vector.extract_strided_slice %232 {offsets = [0, 64], sizes = [2, 32], strides = [1, 1]} : vector<2x96xf32> to vector<2x32xf32>
    %253 = vector.extract_strided_slice %235 {offsets = [0, 64], sizes = [2, 32], strides = [1, 1]} : vector<2x96xf32> to vector<2x32xf32>
    %254 = arith.mulf %243, %253 : vector<2x32xf32>
    %255 = arith.addf %252, %254 : vector<2x32xf32>
    %256 = math.tanh %255 : vector<2x32xf32>
    %cst_53 = arith.constant 1.000000e+00 : f32
    %257 = vector.broadcast %cst_53 : f32 to vector<2x32xf32>
    %258 = arith.subf %257, %251 : vector<2x32xf32>
    %259 = arith.mulf %258, %256 : vector<2x32xf32>
    %260 = arith.mulf %251, %229 : vector<2x32xf32>
    %261 = arith.addf %259, %260 : vector<2x32xf32>
    %c8_i32 = arith.constant 8 : i32
    %c0_54 = arith.constant 0 : index
    %c0_55 = arith.constant 0 : index
    %262 = vector.load %arg7[%c0_54, %c0_55] : memref<2x32xf32, #tpu.memory_space<vmem>>, vector<2x32xf32>
    tpu.vector_store %arg7[%c0_54, %c0_55], %261 {strides = array<i32>} : memref<2x32xf32, #tpu.memory_space<vmem>>, vector<2x32xf32>,
    %c0_i32_56 = arith.constant 0 : i32
    %263 = arith.cmpi eq, %arg0, %c0_i32_56 : i32
    %264 = arith.extui %263 : i1 to i32
    %c0_i32_57 = arith.constant 0 : i32
    %265 = arith.cmpi ne, %264, %c0_i32_57 : i32
    scf.if %265 {
      %c0_58 = arith.constant 0 : index
      %c0_59 = arith.constant 0 : index
      %266 = vector.load %arg4[%c0_58, %c0_59] : memref<32x4xf32, #tpu.memory_space<vmem>>, vector<32x4xf32>
      %cst_60 = arith.constant dense<0.000000e+00> : vector<2x4xf32>
      %267 = tpu.matmul %261, %266, %cst_60 {dimension_numbers = #tpu.dot_dimension_numbers<[1], [0], [0], [1], [0, 0, 1, 1], [], []>} : vector<2x32xf32>, vector<32x4xf32>, vector<2x4xf32> -> vector<2x4xf32>
      %c0_61 = arith.constant 0 : index
      %c0_62 = arith.constant 0 : index
      %268 = vector.load %arg5[%c0_61, %c0_62] : memref<1x4xf32, #tpu.memory_space<vmem>>, vector<1x4xf32>
      %269 = vector.broadcast %268 : vector<1x4xf32> to vector<2x4xf32>
      %270 = arith.addf %267, %269 : vector<2x4xf32>
      %c0_63 = arith.constant 0 : index
      %c0_64 = arith.constant 0 : index
      %271 = vector.load %arg6[%c0_63, %c0_64] : memref<2x4xf32, #tpu.memory_space<vmem>>, vector<2x4xf32>
      tpu.vector_store %arg6[%c0_63, %c0_64], %270 {strides = array<i32>} : memref<2x4xf32, #tpu.memory_space<vmem>>, vector<2x4xf32>,
    } else {
    }
    return
  }
  func.func @transform_0(%arg0: i32) -> (i32, i32, i32) {
    %c0_i32 = arith.constant 0 : i32
    %c0_i32_0 = arith.constant 0 : i32
    %c0_i32_1 = arith.constant 0 : i32
    return %arg0, %c0_i32, %c0_i32_0 : i32, i32, i32
  }
  func.func @transform_1(%arg0: i32) -> (i32, i32) {
    %c0_i32 = arith.constant 0 : i32
    %c0_i32_0 = arith.constant 0 : i32
    %c0_i32_1 = arith.constant 0 : i32
    return %c0_i32, %c0_i32_0 : i32, i32
  }
  func.func @transform_2(%arg0: i32) -> (i32, i32) {
    %c0_i32 = arith.constant 0 : i32
    %c0_i32_0 = arith.constant 0 : i32
    %c0_i32_1 = arith.constant 0 : i32
    return %c0_i32, %c0_i32_0 : i32, i32
  }
  func.func @transform_3(%arg0: i32) -> (i32, i32) {
    %c0_i32 = arith.constant 0 : i32
    %c0_i32_0 = arith.constant 0 : i32
    %c0_i32_1 = arith.constant 0 : i32
    return %c0_i32, %c0_i32_0 : i32, i32
  }
  func.func @transform_4(%arg0: i32) -> (i32, i32) {
    %c0_i32 = arith.constant 0 : i32
    %c0_i32_0 = arith.constant 0 : i32
    %c0_i32_1 = arith.constant 0 : i32
    return %c0_i32, %c0_i32_0 : i32, i32
  }
  func.func @transform_5(%arg0: i32) -> (i32, i32) {
    %c0_i32 = arith.constant 0 : i32
    %c0_i32_0 = arith.constant 0 : i32
    %c0_i32_1 = arith.constant 0 : i32
    return %c0_i32, %c0_i32_0 : i32, i32
  }
}

</mosaic_0001>

<llo_original>
// kernel: gru_predictor_forward.4
$region0: #{gru_predictor_forward.4}
  #allocation0 [shape = 'u32[]', space=smem, size = 0x4, offset = 0x4, fixed_abs, tag = 'smem constant byte address 0x4 - core index']
  #allocation1 [shape = 'u32[144,128]{1,0:T(1,128)}', space=vmem, size = 0x12000, scoped, tag = 'internal scratch']
  %s0 = inlined_call_operand.vmem [shape: f32[16,16], index: 0, kind: input, shape index: {}]
  %s1 = inlined_call_operand.vmem [shape: f32[16,96], index: 1, kind: input, shape index: {}]
  %s2 = inlined_call_operand.vmem [shape: f32[1,96], index: 2, kind: input, shape index: {}]
  %s3 = inlined_call_operand.vmem [shape: f32[16,96], index: 3, kind: output, shape index: {}]
  %s4 = sld [smem:[#allocation0]]
  $region22: #{gru_predictor_forward.4} parent=0
    _
  %s6 = ssub.s32 1, %s4
  %s7 = scalar_select 0, %s6, %s4
  // Predicated region
  $region2: #{gru_predictor_forward.4} parent=0 // pred_check
    _
  $region3: #{gru_predictor_forward.4} parent=0 // pred_check_branch
    %9 = sbr.rel (0) target = $region5
  $region4: #{gru_predictor_forward.4} parent=0 // pred_region
    _
  $region5: #{gru_predictor_forward.4} parent=0 // pred_fallthru
    _
  // Predicated region
  $region6: #{gru_predictor_forward.4} parent=0 // pred_check
    _
  $region7: #{gru_predictor_forward.4} parent=0 // pred_check_branch
    %11 = sbr.rel (0) target = $region9
  $region8: #{gru_predictor_forward.4} parent=0 // pred_region
    _
  $region9: #{gru_predictor_forward.4} parent=0 // pred_fallthru
    _
  // Predicated region
  $region10: #{gru_predictor_forward.4} parent=0 // pred_check
    _
  $region11: #{gru_predictor_forward.4} parent=0 // pred_check_branch
    %13 = sbr.rel (0) target = $region13
  $region12: #{gru_predictor_forward.4} parent=0 // pred_region
    _
  $region13: #{gru_predictor_forward.4} parent=0 // pred_fallthru
    _
  %v14 = vld [vmem:[%s0] sm:$0xff]
  %v15 = vld [vmem:[%s0 + $0x8] sm:$0xff]
  %v16 = vld [vmem:[%s1] sm:$0xff]
  %v17 = vld [vmem:[%s1 + $0x8] sm:$0xff]
  %v18 = vld [vmem:[%s2] sm:$0x1]
  %v20 = vlaneseq
  %v21 = vshrl.u32 %v20, 7
  %v22 = vsub.s32 0, %v21
  %v23 = vrot.slane %v18, %v22
  %vm25 = vcmask 130048
  %v27 = vsel %vm25, %v14, 0
  %v30 = vsel %vm25, %v15, 0
  %32 = vmatprep.subr.mxu0 0.0
  %33 = vmatpush1.msra.mxu0 0.0
  %34 = vmatprep.subr.mxu0 0.0
  %35 = vmatpush1.msra.mxu0 0.0
  %36 = vmatprep.subr.mxu0 0.0
  %37 = vmatpush1.msra.mxu0 0.0
  %38 = vmatprep.subr.mxu0 0.0
  %39 = vmatpush1.msra.mxu0 0.0
  %40 = vmatprep.subr.mxu0 0.0
  %41 = vmatpush1.msra.mxu0 0.0
  %42 = vmatprep.subr.mxu0 0.0
  %43 = vmatpush1.msra.mxu0 0.0
  %44 = vmatprep.subr.mxu0 0.0
  %45 = vmatpush1.msra.mxu0 0.0
  %46 = vmatprep.subr.mxu0 0.0
  %47 = vmatpush1.msra.mxu0 0.0
  %48 = vmatprep.subr.mxu0 0.0
  %49 = vmatpush1.msra.mxu0 0.0
  %50 = vmatprep.subr.mxu0 0.0
  %51 = vmatpush1.msra.mxu0 0.0
  %52 = vmatprep.subr.mxu0 0.0
  %53 = vmatpush1.msra.mxu0 0.0
  %54 = vmatprep.subr.mxu0 0.0
  %55 = vmatpush1.msra.mxu0 0.0
  %56 = vmatprep.subr.mxu0 0.0
  %57 = vmatpush1.msra.mxu0 0.0
  %58 = vmatprep.subr.mxu0 0.0
  %59 = vmatpush1.msra.mxu0 0.0
  %60 = vmatprep.subr.mxu0 0.0
  %61 = vmatpush1.msra.mxu0 %v17
  %62 = vmatprep.subr.mxu0 0.0
  %63 = vmatpush1.msra.mxu0 %v16
  %64 = vmatprep.subr.mxu0 0.0
  %65 = vmatpush2.msra.mxu0 0.0
  %66 = vmatprep.subr.mxu0 0.0
  %67 = vmatpush2.msra.mxu0 0.0
  %68 = vmatprep.subr.mxu0 0.0
  %69 = vmatpush2.msra.mxu0 0.0
  %70 = vmatprep.subr.mxu0 0.0
  %71 = vmatpush2.msra.mxu0 0.0
  %72 = vmatprep.subr.mxu0 0.0
  %73 = vmatpush2.msra.mxu0 0.0
  %74 = vmatprep.subr.mxu0 0.0
  %75 = vmatpush2.msra.mxu0 0.0
  %76 = vmatprep.subr.mxu0 0.0
  %77 = vmatpush2.msra.mxu0 0.0
  %78 = vmatprep.subr.mxu0 0.0
  %79 = vmatpush2.msra.mxu0 0.0
  %80 = vmatprep.subr.mxu0 0.0
  %81 = vmatpush2.msra.mxu0 0.0
  %82 = vmatprep.subr.mxu0 0.0
  %83 = vmatpush2.msra.mxu0 0.0
  %84 = vmatprep.subr.mxu0 0.0
  %85 = vmatpush2.msra.mxu0 0.0
  %86 = vmatprep.subr.mxu0 0.0
  %87 = vmatpush2.msra.mxu0 0.0
  %88 = vmatprep.subr.mxu0 0.0
  %89 = vmatpush2.msra.mxu0 0.0
  %90 = vmatprep.subr.mxu0 0.0
  %91 = vmatpush2.msra.mxu0 0.0
  %92 = vmatprep.subr.mxu0 0.0
  %93 = vmatpush2.msra.mxu0 0.0
  %94 = vmatprep.subr.mxu0 0.0
  %95 = vmatpush2.msra.mxu0 0.0
  %96 = vmatprep.mubr.f32.mxu0 0.0
  %97 = vmatmul.mubr.f32.gmra.mxu0 %v27
  %v98 = vpop.f32.mrf.mxu0
  %v99 = vadd.f32 %v23, %v98
  %v100 = vpop.f32.mrf.mxu0
  %101 = vmatprep.mubr.f32.mxu0 0.0
  %102 = vmatmul.mubr.f32.gmra.mxu0 %v30
  %v103 = vpop.f32.mrf.mxu0
  %v104 = vadd.f32 %v23, %v103
  %v105 = vpop.f32.mrf.mxu0
  %106 = vdwg.mxu0
  %vm107 = vcmask 785408
  %108 = vst.msk [vmem:[%s3] sm:$0xff] %vm107, %v99
  %109 = vst.msk [vmem:[%s3 + $0x8] sm:$0xff] %vm107, %v104
  // Predicated region
  $region14: #{gru_predictor_forward.4} parent=0 // pred_check
    _
  $region15: #{gru_predictor_forward.4} parent=0 // pred_check_branch
    %111 = sbr.rel (0) target = $region17
  $region16: #{gru_predictor_forward.4} parent=0 // pred_region
    _
  $region17: #{gru_predictor_forward.4} parent=0 // pred_fallthru
    _
  // Predicated region
  $region18: #{gru_predictor_forward.4} parent=0 // pred_check
    _
  $region19: #{gru_predictor_forward.4} parent=0 // pred_check_branch
    %113 = sbr.rel (0) target = $region21
  $region20: #{gru_predictor_forward.4} parent=0 // pred_region
    _
  $region21: #{gru_predictor_forward.4} parent=0 // pred_fallthru
    _

// kernel: gru_predictor_forward.6
$region0: #{gru_predictor_forward.6}
  #allocation0 [shape = 'u32[]', space=smem, size = 0x4, offset = 0x4, fixed_abs, tag = 'smem constant byte address 0x4 - core index']
  #allocation1 [shape = 'u32[144,128]{1,0:T(1,128)}', space=vmem, size = 0x12000, scoped, tag = 'internal scratch']
  %s0 = inlined_call_operand.vmem [shape: f32[16,32], index: 0, kind: input, shape index: {}]
  %s1 = inlined_call_operand.vmem [shape: f32[32,96], index: 1, kind: input, shape index: {}]
  %s2 = inlined_call_operand.vmem [shape: f32[1,96], index: 2, kind: input, shape index: {}]
  %s3 = inlined_call_operand.vmem [shape: f32[16,96], index: 3, kind: output, shape index: {}]
  %s4 = sld [smem:[#allocation0]]
  $region22: #{gru_predictor_forward.6} parent=0
    _
  %s6 = ssub.s32 1, %s4
  %s7 = scalar_select 0, %s6, %s4
  // Predicated region
  $region2: #{gru_predictor_forward.6} parent=0 // pred_check
    _
  $region3: #{gru_predictor_forward.6} parent=0 // pred_check_branch
    %9 = sbr.rel (0) target = $region5
  $region4: #{gru_predictor_forward.6} parent=0 // pred_region
    _
  $region5: #{gru_predictor_forward.6} parent=0 // pred_fallthru
    _
  // Predicated region
  $region6: #{gru_predictor_forward.6} parent=0 // pred_check
    _
  $region7: #{gru_predictor_forward.6} parent=0 // pred_check_branch
    %11 = sbr.rel (0) target = $region9
  $region8: #{gru_predictor_forward.6} parent=0 // pred_region
    _
  $region9: #{gru_predictor_forward.6} parent=0 // pred_fallthru
    _
  // Predicated region
  $region10: #{gru_predictor_forward.6} parent=0 // pred_check
    _
  $region11: #{gru_predictor_forward.6} parent=0 // pred_check_branch
    %13 = sbr.rel (0) target = $region13
  $region12: #{gru_predictor_forward.6} parent=0 // pred_region
    _
  $region13: #{gru_predictor_forward.6} parent=0 // pred_fallthru
    _
  %v14 = vld [vmem:[%s0] sm:$0xff]
  %v15 = vld [vmem:[%s0 + $0x8] sm:$0xff]
  %v16 = vld [vmem:[%s1] sm:$0xff]
  %v17 = vld [vmem:[%s1 + $0x8] sm:$0xff]
  %v18 = vld [vmem:[%s1 + $0x10] sm:$0xff]
  %v19 = vld [vmem:[%s1 + $0x18] sm:$0xff]
  %v20 = vld [vmem:[%s2] sm:$0x1]
  %v22 = vlaneseq
  %v23 = vshrl.u32 %v22, 7
  %v24 = vsub.s32 0, %v23
  %v25 = vrot.slane %v20, %v24
  %vm27 = vcmask 261120
  %v29 = vsel %vm27, %v14, 0
  %v32 = vsel %vm27, %v15, 0
  %34 = vmatprep.subr.mxu0 0.0
  %35 = vmatpush1.msra.mxu0 0.0
  %36 = vmatprep.subr.mxu0 0.0
  %37 = vmatpush1.msra.mxu0 0.0
  %38 = vmatprep.subr.mxu0 0.0
  %39 = vmatpush1.msra.mxu0 0.0
  %40 = vmatprep.subr.mxu0 0.0
  %41 = vmatpush1.msra.mxu0 0.0
  %42 = vmatprep.subr.mxu0 0.0
  %43 = vmatpush1.msra.mxu0 0.0
  %44 = vmatprep.subr.mxu0 0.0
  %45 = vmatpush1.msra.mxu0 0.0
  %46 = vmatprep.subr.mxu0 0.0
  %47 = vmatpush1.msra.mxu0 0.0
  %48 = vmatprep.subr.mxu0 0.0
  %49 = vmatpush1.msra.mxu0 0.0
  %50 = vmatprep.subr.mxu0 0.0
  %51 = vmatpush1.msra.mxu0 0.0
  %52 = vmatprep.subr.mxu0 0.0
  %53 = vmatpush1.msra.mxu0 0.0
  %54 = vmatprep.subr.mxu0 0.0
  %55 = vmatpush1.msra.mxu0 0.0
  %56 = vmatprep.subr.mxu0 0.0
  %57 = vmatpush1.msra.mxu0 0.0
  %58 = vmatprep.subr.mxu0 0.0
  %59 = vmatpush1.msra.mxu0 %v19
  %60 = vmatprep.subr.mxu0 0.0
  %61 = vmatpush1.msra.mxu0 %v18
  %62 = vmatprep.subr.mxu0 0.0
  %63 = vmatpush1.msra.mxu0 %v17
  %64 = vmatprep.subr.mxu0 0.0
  %65 = vmatpush1.msra.mxu0 %v16
  %66 = vmatprep.subr.mxu0 0.0
  %67 = vmatpush2.msra.mxu0 0.0
  %68 = vmatprep.subr.mxu0 0.0
  %69 = vmatpush2.msra.mxu0 0.0
  %70 = vmatprep.subr.mxu0 0.0
  %71 = vmatpush2.msra.mxu0 0.0
  %72 = vmatprep.subr.mxu0 0.0
  %73 = vmatpush2.msra.mxu0 0.0
  %74 = vmatprep.subr.mxu0 0.0
  %75 = vmatpush2.msra.mxu0 0.0
  %76 = vmatprep.subr.mxu0 0.0
  %77 = vmatpush2.msra.mxu0 0.0
  %78 = vmatprep.subr.mxu0 0.0
  %79 = vmatpush2.msra.mxu0 0.0
  %80 = vmatprep.subr.mxu0 0.0
  %81 = vmatpush2.msra.mxu0 0.0
  %82 = vmatprep.subr.mxu0 0.0
  %83 = vmatpush2.msra.mxu0 0.0
  %84 = vmatprep.subr.mxu0 0.0
  %85 = vmatpush2.msra.mxu0 0.0
  %86 = vmatprep.subr.mxu0 0.0
  %87 = vmatpush2.msra.mxu0 0.0
  %88 = vmatprep.subr.mxu0 0.0
  %89 = vmatpush2.msra.mxu0 0.0
  %90 = vmatprep.subr.mxu0 0.0
  %91 = vmatpush2.msra.mxu0 0.0
  %92 = vmatprep.subr.mxu0 0.0
  %93 = vmatpush2.msra.mxu0 0.0
  %94 = vmatprep.subr.mxu0 0.0
  %95 = vmatpush2.msra.mxu0 0.0
  %96 = vmatprep.subr.mxu0 0.0
  %97 = vmatpush2.msra.mxu0 0.0
  %98 = vmatprep.mubr.f32.mxu0 0.0
  %99 = vmatmul.mubr.f32.gmra.mxu0 %v29
  %v100 = vpop.f32.mrf.mxu0
  %v101 = vadd.f32 %v25, %v100
  %v102 = vpop.f32.mrf.mxu0
  %103 = vmatprep.mubr.f32.mxu0 0.0
  %104 = vmatmul.mubr.f32.gmra.mxu0 %v32
  %v105 = vpop.f32.mrf.mxu0
  %v106 = vadd.f32 %v25, %v105
  %v107 = vpop.f32.mrf.mxu0
  %108 = vdwg.mxu0
  %vm109 = vcmask 785408
  %110 = vst.msk [vmem:[%s3] sm:$0xff] %vm109, %v101
  %111 = vst.msk [vmem:[%s3 + $0x8] sm:$0xff] %vm109, %v106
  // Predicated region
  $region14: #{gru_predictor_forward.6} parent=0 // pred_check
    _
  $region15: #{gru_predictor_forward.6} parent=0 // pred_check_branch
    %113 = sbr.rel (0) target = $region17
  $region16: #{gru_predictor_forward.6} parent=0 // pred_region
    _
  $region17: #{gru_predictor_forward.6} parent=0 // pred_fallthru
    _
  // Predicated region
  $region18: #{gru_predictor_forward.6} parent=0 // pred_check
    _
  $region19: #{gru_predictor_forward.6} parent=0 // pred_check_branch
    %115 = sbr.rel (0) target = $region21
  $region20: #{gru_predictor_forward.6} parent=0 // pred_region
    _
  $region21: #{gru_predictor_forward.6} parent=0 // pred_fallthru
    _

// kernel: gru_predictor_forward.5
$region0: #{gru_predictor_forward.5}
  #allocation0 [shape = 'u32[]', space=smem, size = 0x4, offset = 0x4, fixed_abs, tag = 'smem constant byte address 0x4 - core index']
  #allocation1 [shape = 'u32[144,128]{1,0:T(1,128)}', space=vmem, size = 0x12000, scoped, tag = 'internal scratch']
  #allocation2 [shape = 'f32[2,32]{1,0:T(2,128)}', space=vmem, size = 0x400, scoped, tag = 'scratch operand']
  %s0 = inlined_call_operand.vmem [shape: f32[8,2,96], index: 0, kind: input, shape index: {}]
  %s1 = inlined_call_operand.vmem [shape: f32[32,96], index: 1, kind: input, shape index: {}]
  %s2 = inlined_call_operand.vmem [shape: f32[1,96], index: 2, kind: input, shape index: {}]
  %s3 = inlined_call_operand.vmem [shape: f32[8,2,32], index: 3, kind: output, shape index: {}]
  %s4 = sld [smem:[#allocation0]]
  $region26: #{gru_predictor_forward.5} parent=0
    _
  %s6 = ssub.s32 1, %s4
  %s7 = scalar_select 0, %s6, %s4
  // Predicated region
  $region2: #{gru_predictor_forward.5} parent=0 // pred_check
    _
  $region3: #{gru_predictor_forward.5} parent=0 // pred_check_branch
    %9 = sbr.rel (0) target = $region5
  $region4: #{gru_predictor_forward.5} parent=0 // pred_region
    _
  $region5: #{gru_predictor_forward.5} parent=0 // pred_fallthru
    _
  // Predicated region
  $region6: #{gru_predictor_forward.5} parent=0 // pred_check
    _
  $region7: #{gru_predictor_forward.5} parent=0 // pred_check_branch
    %11 = sbr.rel (0) target = $region9
  $region8: #{gru_predictor_forward.5} parent=0 // pred_region
    _
  $region9: #{gru_predictor_forward.5} parent=0 // pred_fallthru
    _
  // Predicated region
  $region10: #{gru_predictor_forward.5} parent=0 // pred_check
    _
  $region11: #{gru_predictor_forward.5} parent=0 // pred_check_branch
    %13 = sbr.rel (0) target = $region13
  $region12: #{gru_predictor_forward.5} parent=0 // pred_region
    _
  $region13: #{gru_predictor_forward.5} parent=0 // pred_fallthru
    _
  %p14 = scmp.eq.s32.totalorder 0, 0
  // Predicated region
  $region14: #{gru_predictor_forward.5} parent=0 // pred_check
    %p15 = pneg %p14
  $region15: #{gru_predictor_forward.5} parent=0 // pred_check_branch
    %17 = sbr.rel (%p15) target = $region17
  $region16: #{gru_predictor_forward.5} parent=0 // pred_region
    %vm18 = vcmask 254976
    %19 = vst.msk [vmem:[#allocation2] sm:$0x3] %vm18, 0.0
  $region17: #{gru_predictor_forward.5} parent=0 // pred_fallthru
    _
  %v20 = vld [vmem:[%s1] sm:$0xff]
  %v21 = vld [vmem:[%s1 + $0x8] sm:$0xff]
  %v22 = vld [vmem:[%s1 + $0x10] sm:$0xff]
  %v23 = vld [vmem:[%s1 + $0x18] sm:$0xff]
  %v24 = vld [vmem:[%s2] sm:$0x1]
  %v25 = vld [vmem:[#allocation2] sm:$0x3]
  %v26 = vld [vmem:[%s0] sm:$0x3]
  %v28 = vlaneseq
  %v29 = vshrl.u32 %v28, 7
  %v30 = vsub.s32 0, %v29
  %v31 = vrot.slane %v24, %v30
  %vm33 = vcmask 261120
  %v35 = vsel %vm33, %v25, 0
  %37 = vmatprep.subr.mxu0 0.0
  %38 = vmatpush1.msra.mxu0 0.0
  %39 = vmatprep.subr.mxu0 0.0
  %40 = vmatpush1.msra.mxu0 0.0
  %41 = vmatprep.subr.mxu0 0.0
  %42 = vmatpush1.msra.mxu0 0.0
  %43 = vmatprep.subr.mxu0 0.0
  %44 = vmatpush1.msra.mxu0 0.0
  %45 = vmatprep.subr.mxu0 0.0
  %46 = vmatpush1.msra.mxu0 0.0
  %47 = vmatprep.subr.mxu0 0.0
  %48 = vmatpush1.msra.mxu0 0.0
  %49 = vmatprep.subr.mxu0 0.0
  %50 = vmatpush1.msra.mxu0 0.0
  %51 = vmatprep.subr.mxu0 0.0
  %52 = vmatpush1.msra.mxu0 0.0
  %53 = vmatprep.subr.mxu0 0.0
  %54 = vmatpush1.msra.mxu0 0.0
  %55 = vmatprep.subr.mxu0 0.0
  %56 = vmatpush1.msra.mxu0 0.0
  %57 = vmatprep.subr.mxu0 0.0
  %58 = vmatpush1.msra.mxu0 0.0
  %59 = vmatprep.subr.mxu0 0.0
  %60 = vmatpush1.msra.mxu0 0.0
  %61 = vmatprep.subr.mxu0 0.0
  %62 = vmatpush1.msra.mxu0 %v23
  %63 = vmatprep.subr.mxu0 0.0
  %64 = vmatpush1.msra.mxu0 %v22
  %65 = vmatprep.subr.mxu0 0.0
  %66 = vmatpush1.msra.mxu0 %v21
  %67 = vmatprep.subr.mxu0 0.0
  %68 = vmatpush1.msra.mxu0 %v20
  %69 = vmatprep.subr.mxu0 0.0
  %70 = vmatpush2.msra.mxu0 0.0
  %71 = vmatprep.subr.mxu0 0.0
  %72 = vmatpush2.msra.mxu0 0.0
  %73 = vmatprep.subr.mxu0 0.0
  %74 = vmatpush2.msra.mxu0 0.0
  %75 = vmatprep.subr.mxu0 0.0
  %76 = vmatpush2.msra.mxu0 0.0
  %77 = vmatprep.subr.mxu0 0.0
  %78 = vmatpush2.msra.mxu0 0.0
  %79 = vmatprep.subr.mxu0 0.0
  %80 = vmatpush2.msra.mxu0 0.0
  %81 = vmatprep.subr.mxu0 0.0
  %82 = vmatpush2.msra.mxu0 0.0
  %83 = vmatprep.subr.mxu0 0.0
  %84 = vmatpush2.msra.mxu0 0.0
  %85 = vmatprep.subr.mxu0 0.0
  %86 = vmatpush2.msra.mxu0 0.0
  %87 = vmatprep.subr.mxu0 0.0
  %88 = vmatpush2.msra.mxu0 0.0
  %89 = vmatprep.subr.mxu0 0.0
  %90 = vmatpush2.msra.mxu0 0.0
  %91 = vmatprep.subr.mxu0 0.0
  %92 = vmatpush2.msra.mxu0 0.0
  %93 = vmatprep.subr.mxu0 0.0
  %94 = vmatpush2.msra.mxu0 0.0
  %95 = vmatprep.subr.mxu0 0.0
  %96 = vmatpush2.msra.mxu0 0.0
  %97 = vmatprep.subr.mxu0 0.0
  %98 = vmatpush2.msra.mxu0 0.0
  %99 = vmatprep.subr.mxu0 0.0
  %100 = vmatpush2.msra.mxu0 0.0
  %101 = vmatprep.mubr.f32.mxu0 0.0
  %102 = vmatmul.mubr.f32.gmra.mxu0 %v35
  %v103 = vpop.f32.mrf.mxu0
  %v104 = vadd.f32 %v31, %v103
  %v105 = vpop.f32.mrf.mxu0
  %106 = vdwg.mxu0
  %v107 = vadd.f32 %v26, %v104
  %v108 = vxor.u32 %v107, 2147483648
  %v109 = vmul.f32 %v108, 1.442695
  %v110 = vpow.pop %v109
  %v111 = vadd.f32 %v110, 1.0
  %v112 = vrcp.pop %v111
  %v113 = vmul.f32 1.0, %v112
  %115 = vrot.lane.b32.xlu0 %v104, 64
  %v116 = vpop.permute.xlu0 %115
  %v118 = vmul.f32 %v113, %v116
  %120 = vrot.lane.b32.xlu0 %v118, 64
  %v121 = vpop.permute.xlu0 %120
  %v123 = vadd.f32 %v26, %v121
  %v124 = vtanh.pop %v123
  %v125 = vsub.f32 1.0, %v113
  %127 = vrot.lane.b32.xlu0 %v124, 96
  %v128 = vpop.permute.xlu0 %127
  %v130 = vmul.f32 %v125, %v128
  %131 = vrot.lane.b32.xlu0 %v25, 32
  %v132 = vpop.permute.xlu0 %131
  %v134 = vmul.f32 %v113, %v132
  %v135 = vadd.f32 %v130, %v134
  %137 = vrot.lane.b32.xlu0 %v135, 96
  %v138 = vpop.permute.xlu0 %137
  %vm140 = vcmask 254976
  %141 = vst.msk [vmem:[%s3] sm:$0x3] %vm140, %v138
  %s142 = scalar_lea.vmem %s0, 2
  %v143 = vld [vmem:[%s142] sm:$0x3]
  %v144 = vsel %vm33, %v138, 0
  %146 = vmatprep.subr.mxu0 0.0
  %147 = vmatpush1.msra.mxu0 0.0
  %148 = vmatprep.subr.mxu0 0.0
  %149 = vmatpush1.msra.mxu0 0.0
  %150 = vmatprep.subr.mxu0 0.0
  %151 = vmatpush1.msra.mxu0 0.0
  %152 = vmatprep.subr.mxu0 0.0
  %153 = vmatpush1.msra.mxu0 0.0
  %154 = vmatprep.subr.mxu0 0.0
  %155 = vmatpush1.msra.mxu0 0.0
  %156 = vmatprep.subr.mxu0 0.0
  %157 = vmatpush1.msra.mxu0 0.0
  %158 = vmatprep.subr.mxu0 0.0
  %159 = vmatpush1.msra.mxu0 0.0
  %160 = vmatprep.subr.mxu0 0.0
  %161 = vmatpush1.msra.mxu0 0.0
  %162 = vmatprep.subr.mxu0 0.0
  %163 = vmatpush1.msra.mxu0 0.0
  %164 = vmatprep.subr.mxu0 0.0
  %165 = vmatpush1.msra.mxu0 0.0
  %166 = vmatprep.subr.mxu0 0.0
  %167 = vmatpush1.msra.mxu0 0.0
  %168 = vmatprep.subr.mxu0 0.0
  %169 = vmatpush1.msra.mxu0 0.0
  %170 = vmatprep.subr.mxu0 0.0
  %171 = vmatpush1.msra.mxu0 %v23
  %172 = vmatprep.subr.mxu0 0.0
  %173 = vmatpush1.msra.mxu0 %v22
  %174 = vmatprep.subr.mxu0 0.0
  %175 = vmatpush1.msra.mxu0 %v21
  %176 = vmatprep.subr.mxu0 0.0
  %177 = vmatpush1.msra.mxu0 %v20
  %178 = vmatprep.subr.mxu0 0.0
  %179 = vmatpush2.msra.mxu0 0.0
  %180 = vmatprep.subr.mxu0 0.0
  %181 = vmatpush2.msra.mxu0 0.0
  %182 = vmatprep.subr.mxu0 0.0
  %183 = vmatpush2.msra.mxu0 0.0
  %184 = vmatprep.subr.mxu0 0.0
  %185 = vmatpush2.msra.mxu0 0.0
  %186 = vmatprep.subr.mxu0 0.0
  %187 = vmatpush2.msra.mxu0 0.0
  %188 = vmatprep.subr.mxu0 0.0
  %189 = vmatpush2.msra.mxu0 0.0
  %190 = vmatprep.subr.mxu0 0.0
  %191 = vmatpush2.msra.mxu0 0.0
  %192 = vmatprep.subr.mxu0 0.0
  %193 = vmatpush2.msra.mxu0 0.0
  %194 = vmatprep.subr.mxu0 0.0
  %195 = vmatpush2.msra.mxu0 0.0
  %196 = vmatprep.subr.mxu0 0.0
  %197 = vmatpush2.msra.mxu0 0.0
  %198 = vmatprep.subr.mxu0 0.0
  %199 = vmatpush2.msra.mxu0 0.0
  %200 = vmatprep.subr.mxu0 0.0
  %201 = vmatpush2.msra.mxu0 0.0
  %202 = vmatprep.subr.mxu0 0.0
  %203 = vmatpush2.msra.mxu0 0.0
  %204 = vmatprep.subr.mxu0 0.0
  %205 = vmatpush2.msra.mxu0 0.0
  %206 = vmatprep.subr.mxu0 0.0
  %207 = vmatpush2.msra.mxu0 0.0
  %208 = vmatprep.subr.mxu0 0.0
  %209 = vmatpush2.msra.mxu0 0.0
  %210 = vmatprep.mubr.f32.mxu0 0.0
  %211 = vmatmul.mubr.f32.gmra.mxu0 %v144
  %v212 = vpop.f32.mrf.mxu0
  %v213 = vadd.f32 %v31, %v212
  %v214 = vpop.f32.mrf.mxu0
  %215 = vdwg.mxu0
  %v216 = vadd.f32 %v143, %v213
  %v217 = vxor.u32 %v216, 2147483648
  %v218 = vmul.f32 %v217, 1.442695
  %v219 = vpow.pop %v218
  %v220 = vadd.f32 %v219, 1.0
  %v221 = vrcp.pop %v220
  %v222 = vmul.f32 1.0, %v221
  %224 = vrot.lane.b32.xlu0 %v213, 64
  %v225 = vpop.permute.xlu0 %224
  %v227 = vmul.f32 %v222, %v225
  %229 = vrot.lane.b32.xlu0 %v227, 64
  %v230 = vpop.permute.xlu0 %229
  %v232 = vadd.f32 %v143, %v230
  %v233 = vtanh.pop %v232
  %v234 = vsub.f32 1.0, %v222
  %236 = vrot.lane.b32.xlu0 %v233, 96
  %v237 = vpop.permute.xlu0 %236
  %v239 = vmul.f32 %v234, %v237
  %v240 = vmul.f32 %v222, %v135
  %v241 = vadd.f32 %v239, %v240
  %243 = vrot.lane.b32.xlu0 %v241, 96
  %v244 = vpop.permute.xlu0 %243
  %s246 = scalar_lea.vmem %s3, 2
  %247 = vst.msk [vmem:[%s246] sm:$0x3] %vm140, %v244
  %s248 = scalar_lea.vmem %s0, 4
  %v249 = vld [vmem:[%s248] sm:$0x3]
  %v250 = vsel %vm33, %v244, 0
  %252 = vmatprep.subr.mxu0 0.0
  %253 = vmatpush1.msra.mxu0 0.0
  %254 = vmatprep.subr.mxu0 0.0
  %255 = vmatpush1.msra.mxu0 0.0
  %256 = vmatprep.subr.mxu0 0.0
  %257 = vmatpush1.msra.mxu0 0.0
  %258 = vmatprep.subr.mxu0 0.0
  %259 = vmatpush1.msra.mxu0 0.0
  %260 = vmatprep.subr.mxu0 0.0
  %261 = vmatpush1.msra.mxu0 0.0
  %262 = vmatprep.subr.mxu0 0.0
  %263 = vmatpush1.msra.mxu0 0.0
  %264 = vmatprep.subr.mxu0 0.0
  %265 = vmatpush1.msra.mxu0 0.0
  %266 = vmatprep.subr.mxu0 0.0
  %267 = vmatpush1.msra.mxu0 0.0
  %268 = vmatprep.subr.mxu0 0.0
  %269 = vmatpush1.msra.mxu0 0.0
  %270 = vmatprep.subr.mxu0 0.0
  %271 = vmatpush1.msra.mxu0 0.0
  %272 = vmatprep.subr.mxu0 0.0
  %273 = vmatpush1.msra.mxu0 0.0
  %274 = vmatprep.subr.mxu0 0.0
  %275 = vmatpush1.msra.mxu0 0.0
  %276 = vmatprep.subr.mxu0 0.0
  %277 = vmatpush1.msra.mxu0 %v23
  %278 = vmatprep.subr.mxu0 0.0
  %279 = vmatpush1.msra.mxu0 %v22
  %280 = vmatprep.subr.mxu0 0.0
  %281 = vmatpush1.msra.mxu0 %v21
  %282 = vmatprep.subr.mxu0 0.0
  %283 = vmatpush1.msra.mxu0 %v20
  %284 = vmatprep.subr.mxu0 0.0
  %285 = vmatpush2.msra.mxu0 0.0
  %286 = vmatprep.subr.mxu0 0.0
  %287 = vmatpush2.msra.mxu0 0.0
  %288 = vmatprep.subr.mxu0 0.0
  %289 = vmatpush2.msra.mxu0 0.0
  %290 = vmatprep.subr.mxu0 0.0
  %291 = vmatpush2.msra.mxu0 0.0
  %292 = vmatprep.subr.mxu0 0.0
  %293 = vmatpush2.msra.mxu0 0.0
  %294 = vmatprep.subr.mxu0 0.0
  %295 = vmatpush2.msra.mxu0 0.0
  %296 = vmatprep.subr.mxu0 0.0
  %297 = vmatpush2.msra.mxu0 0.0
  %298 = vmatprep.subr.mxu0 0.0
  %299 = vmatpush2.msra.mxu0 0.0
  %300 = vmatprep.subr.mxu0 0.0
  %301 = vmatpush2.msra.mxu0 0.0
  %302 = vmatprep.subr.mxu0 0.0
  %303 = vmatpush2.msra.mxu0 0.0
  %304 = vmatprep.subr.mxu0 0.0
  %305 = vmatpush2.msra.mxu0 0.0
  %306 = vmatprep.subr.mxu0 0.0
  %307 = vmatpush2.msra.mxu0 0.0
  %308 = vmatprep.subr.mxu0 0.0
  %309 = vmatpush2.msra.mxu0 0.0
  %310 = vmatprep.subr.mxu0 0.0
  %311 = vmatpush2.msra.mxu0 0.0
  %312 = vmatprep.subr.mxu0 0.0
  %313 = vmatpush2.msra.mxu0 0.0
  %314 = vmatprep.subr.mxu0 0.0
  %315 = vmatpush2.msra.mxu0 0.0
  %316 = vmatprep.mubr.f32.mxu0 0.0
  %317 = vmatmul.mubr.f32.gmra.mxu0 %v250
  %v318 = vpop.f32.mrf.mxu0
  %v319 = vadd.f32 %v31, %v318
  %v320 = vpop.f32.mrf.mxu0
  %321 = vdwg.mxu0
  %v322 = vadd.f32 %v249, %v319
  %v323 = vxor.u32 %v322, 2147483648
  %v324 = vmul.f32 %v323, 1.442695
  %v325 = vpow.pop %v324
  %v326 = vadd.f32 %v325, 1.0
  %v327 = vrcp.pop %v326
  %v328 = vmul.f32 1.0, %v327
  %330 = vrot.lane.b32.xlu0 %v319, 64
  %v331 = vpop.permute.xlu0 %330
  %v333 = vmul.f32 %v328, %v331
  %335 = vrot.lane.b32.xlu0 %v333, 64
  %v336 = vpop.permute.xlu0 %335
  %v338 = vadd.f32 %v249, %v336
  %v339 = vtanh.pop %v338
  %v340 = vsub.f32 1.0, %v328
  %342 = vrot.lane.b32.xlu0 %v339, 96
  %v343 = vpop.permute.xlu0 %342
  %v345 = vmul.f32 %v340, %v343
  %v346 = vmul.f32 %v328, %v241
  %v347 = vadd.f32 %v345, %v346
  %349 = vrot.lane.b32.xlu0 %v347, 96
  %v350 = vpop.permute.xlu0 %349
  %s352 = scalar_lea.vmem %s3, 4
  %353 = vst.msk [vmem:[%s352] sm:$0x3] %vm140, %v350
  %s354 = scalar_lea.vmem %s0, 6
  %v355 = vld [vmem:[%s354] sm:$0x3]
  %v356 = vsel %vm33, %v350, 0
  %358 = vmatprep.subr.mxu0 0.0
  %359 = vmatpush1.msra.mxu0 0.0
  %360 = vmatprep.subr.mxu0 0.0
  %361 = vmatpush1.msra.mxu0 0.0
  %362 = vmatprep.subr.mxu0 0.0
  %363 = vmatpush1.msra.mxu0 0.0
  %364 = vmatprep.subr.mxu0 0.0
  %365 = vmatpush1.msra.mxu0 0.0
  %366 = vmatprep.subr.mxu0 0.0
  %367 = vmatpush1.msra.mxu0 0.0
  %368 = vmatprep.subr.mxu0 0.0
  %369 = vmatpush1.msra.mxu0 0.0
  %370 = vmatprep.subr.mxu0 0.0
  %371 = vmatpush1.msra.mxu0 0.0
  %372 = vmatprep.subr.mxu0 0.0
  %373 = vmatpush1.msra.mxu0 0.0
  %374 = vmatprep.subr.mxu0 0.0
  %375 = vmatpush1.msra.mxu0 0.0
  %376 = vmatprep.subr.mxu0 0.0
  %377 = vmatpush1.msra.mxu0 0.0
  %378 = vmatprep.subr.mxu0 0.0
  %379 = vmatpush1.msra.mxu0 0.0
  %380 = vmatprep.subr.mxu0 0.0
  %381 = vmatpush1.msra.mxu0 0.0
  %382 = vmatprep.subr.mxu0 0.0
  %383 = vmatpush1.msra.mxu0 %v23
  %384 = vmatprep.subr.mxu0 0.0
  %385 = vmatpush1.msra.mxu0 %v22
  %386 = vmatprep.subr.mxu0 0.0
  %387 = vmatpush1.msra.mxu0 %v21
  %388 = vmatprep.subr.mxu0 0.0
  %389 = vmatpush1.msra.mxu0 %v20
  %390 = vmatprep.subr.mxu0 0.0
  %391 = vmatpush2.msra.mxu0 0.0
  %392 = vmatprep.subr.mxu0 0.0
  %393 = vmatpush2.msra.mxu0 0.0
  %394 = vmatprep.subr.mxu0 0.0
  %395 = vmatpush2.msra.mxu0 0.0
  %396 = vmatprep.subr.mxu0 0.0
  %397 = vmatpush2.msra.mxu0 0.0
  %398 = vmatprep.subr.mxu0 0.0
  %399 = vmatpush2.msra.mxu0 0.0
  %400 = vmatprep.subr.mxu0 0.0
  %401 = vmatpush2.msra.mxu0 0.0
  %402 = vmatprep.subr.mxu0 0.0
  %403 = vmatpush2.msra.mxu0 0.0
  %404 = vmatprep.subr.mxu0 0.0
  %405 = vmatpush2.msra.mxu0 0.0
  %406 = vmatprep.subr.mxu0 0.0
  %407 = vmatpush2.msra.mxu0 0.0
  %408 = vmatprep.subr.mxu0 0.0
  %409 = vmatpush2.msra.mxu0 0.0
  %410 = vmatprep.subr.mxu0 0.0
  %411 = vmatpush2.msra.mxu0 0.0
  %412 = vmatprep.subr.mxu0 0.0
  %413 = vmatpush2.msra.mxu0 0.0
  %414 = vmatprep.subr.mxu0 0.0
  %415 = vmatpush2.msra.mxu0 0.0
  %416 = vmatprep.subr.mxu0 0.0
  %417 = vmatpush2.msra.mxu0 0.0
  %418 = vmatprep.subr.mxu0 0.0
  %419 = vmatpush2.msra.mxu0 0.0
  %420 = vmatprep.subr.mxu0 0.0
  %421 = vmatpush2.msra.mxu0 0.0
  %422 = vmatprep.mubr.f32.mxu0 0.0
  %423 = vmatmul.mubr.f32.gmra.mxu0 %v356
  %v424 = vpop.f32.mrf.mxu0
  %v425 = vadd.f32 %v31, %v424
  %v426 = vpop.f32.mrf.mxu0
  %427 = vdwg.mxu0
  %v428 = vadd.f32 %v355, %v425
  %v429 = vxor.u32 %v428, 2147483648
  %v430 = vmul.f32 %v429, 1.442695
  %v431 = vpow.pop %v430
  %v432 = vadd.f32 %v431, 1.0
  %v433 = vrcp.pop %v432
  %v434 = vmul.f32 1.0, %v433
  %436 = vrot.lane.b32.xlu0 %v425, 64
  %v437 = vpop.permute.xlu0 %436
  %v439 = vmul.f32 %v434, %v437
  %441 = vrot.lane.b32.xlu0 %v439, 64
  %v442 = vpop.permute.xlu0 %441
  %v444 = vadd.f32 %v355, %v442
  %v445 = vtanh.pop %v444
  %v446 = vsub.f32 1.0, %v434
  %448 = vrot.lane.b32.xlu0 %v445, 96
  %v449 = vpop.permute.xlu0 %448
  %v451 = vmul.f32 %v446, %v449
  %v452 = vmul.f32 %v434, %v347
  %v453 = vadd.f32 %v451, %v452
  %455 = vrot.lane.b32.xlu0 %v453, 96
  %v456 = vpop.permute.xlu0 %455
  %s458 = scalar_lea.vmem %s3, 6
  %459 = vst.msk [vmem:[%s458] sm:$0x3] %vm140, %v456
  %s460 = scalar_lea.vmem %s0, 8
  %v461 = vld [vmem:[%s460] sm:$0x3]
  %v462 = vsel %vm33, %v456, 0
  %464 = vmatprep.subr.mxu0 0.0
  %465 = vmatpush1.msra.mxu0 0.0
  %466 = vmatprep.subr.mxu0 0.0
  %467 = vmatpush1.msra.mxu0 0.0
  %468 = vmatprep.subr.mxu0 0.0
  %469 = vmatpush1.msra.mxu0 0.0
  %470 = vmatprep.subr.mxu0 0.0
  %471 = vmatpush1.msra.mxu0 0.0
  %472 = vmatprep.subr.mxu0 0.0
  %473 = vmatpush1.msra.mxu0 0.0
  %474 = vmatprep.subr.mxu0 0.0
  %475 = vmatpush1.msra.mxu0 0.0
  %476 = vmatprep.subr.mxu0 0.0
  %477 = vmatpush1.msra.mxu0 0.0
  %478 = vmatprep.subr.mxu0 0.0
  %479 = vmatpush1.msra.mxu0 0.0
  %480 = vmatprep.subr.mxu0 0.0
  %481 = vmatpush1.msra.mxu0 0.0
  %482 = vmatprep.subr.mxu0 0.0
  %483 = vmatpush1.msra.mxu0 0.0
  %484 = vmatprep.subr.mxu0 0.0
  %485 = vmatpush1.msra.mxu0 0.0
  %486 = vmatprep.subr.mxu0 0.0
  %487 = vmatpush1.msra.mxu0 0.0
  %488 = vmatprep.subr.mxu0 0.0
  %489 = vmatpush1.msra.mxu0 %v23
  %490 = vmatprep.subr.mxu0 0.0
  %491 = vmatpush1.msra.mxu0 %v22
  %492 = vmatprep.subr.mxu0 0.0
  %493 = vmatpush1.msra.mxu0 %v21
  %494 = vmatprep.subr.mxu0 0.0
  %495 = vmatpush1.msra.mxu0 %v20
  %496 = vmatprep.subr.mxu0 0.0
  %497 = vmatpush2.msra.mxu0 0.0
  %498 = vmatprep.subr.mxu0 0.0
  %499 = vmatpush2.msra.mxu0 0.0
  %500 = vmatprep.subr.mxu0 0.0
  %501 = vmatpush2.msra.mxu0 0.0
  %502 = vmatprep.subr.mxu0 0.0
  %503 = vmatpush2.msra.mxu0 0.0
  %504 = vmatprep.subr.mxu0 0.0
  %505 = vmatpush2.msra.mxu0 0.0
  %506 = vmatprep.subr.mxu0 0.0
  %507 = vmatpush2.msra.mxu0 0.0
  %508 = vmatprep.subr.mxu0 0.0
  %509 = vmatpush2.msra.mxu0 0.0
  %510 = vmatprep.subr.mxu0 0.0
  %511 = vmatpush2.msra.mxu0 0.0
  %512 = vmatprep.subr.mxu0 0.0
  %513 = vmatpush2.msra.mxu0 0.0
  %514 = vmatprep.subr.mxu0 0.0
  %515 = vmatpush2.msra.mxu0 0.0
  %516 = vmatprep.subr.mxu0 0.0
  %517 = vmatpush2.msra.mxu0 0.0
  %518 = vmatprep.subr.mxu0 0.0
  %519 = vmatpush2.msra.mxu0 0.0
  %520 = vmatprep.subr.mxu0 0.0
  %521 = vmatpush2.msra.mxu0 0.0
  %522 = vmatprep.subr.mxu0 0.0
  %523 = vmatpush2.msra.mxu0 0.0
  %524 = vmatprep.subr.mxu0 0.0
  %525 = vmatpush2.msra.mxu0 0.0
  %526 = vmatprep.subr.mxu0 0.0
  %527 = vmatpush2.msra.mxu0 0.0
  %528 = vmatprep.mubr.f32.mxu0 0.0
  %529 = vmatmul.mubr.f32.gmra.mxu0 %v462
  %v530 = vpop.f32.mrf.mxu0
  %v531 = vadd.f32 %v31, %v530
  %v532 = vpop.f32.mrf.mxu0
  %533 = vdwg.mxu0
  %v534 = vadd.f32 %v461, %v531
  %v535 = vxor.u32 %v534, 2147483648
  %v536 = vmul.f32 %v535, 1.442695
  %v537 = vpow.pop %v536
  %v538 = vadd.f32 %v537, 1.0
  %v539 = vrcp.pop %v538
  %v540 = vmul.f32 1.0, %v539
  %542 = vrot.lane.b32.xlu0 %v531, 64
  %v543 = vpop.permute.xlu0 %542
  %v545 = vmul.f32 %v540, %v543
  %547 = vrot.lane.b32.xlu0 %v545, 64
  %v548 = vpop.permute.xlu0 %547
  %v550 = vadd.f32 %v461, %v548
  %v551 = vtanh.pop %v550
  %v552 = vsub.f32 1.0, %v540
  %554 = vrot.lane.b32.xlu0 %v551, 96
  %v555 = vpop.permute.xlu0 %554
  %v557 = vmul.f32 %v552, %v555
  %v558 = vmul.f32 %v540, %v453
  %v559 = vadd.f32 %v557, %v558
  %561 = vrot.lane.b32.xlu0 %v559, 96
  %v562 = vpop.permute.xlu0 %561
  %s564 = scalar_lea.vmem %s3, 8
  %565 = vst.msk [vmem:[%s564] sm:$0x3] %vm140, %v562
  %s566 = scalar_lea.vmem %s0, 10
  %v567 = vld [vmem:[%s566] sm:$0x3]
  %v568 = vsel %vm33, %v562, 0
  %570 = vmatprep.subr.mxu0 0.0
  %571 = vmatpush1.msra.mxu0 0.0
  %572 = vmatprep.subr.mxu0 0.0
  %573 = vmatpush1.msra.mxu0 0.0
  %574 = vmatprep.subr.mxu0 0.0
  %575 = vmatpush1.msra.mxu0 0.0
  %576 = vmatprep.subr.mxu0 0.0
  %577 = vmatpush1.msra.mxu0 0.0
  %578 = vmatprep.subr.mxu0 0.0
  %579 = vmatpush1.msra.mxu0 0.0
  %580 = vmatprep.subr.mxu0 0.0
  %581 = vmatpush1.msra.mxu0 0.0
  %582 = vmatprep.subr.mxu0 0.0
  %583 = vmatpush1.msra.mxu0 0.0
  %584 = vmatprep.subr.mxu0 0.0
  %585 = vmatpush1.msra.mxu0 0.0
  %586 = vmatprep.subr.mxu0 0.0
  %587 = vmatpush1.msra.mxu0 0.0
  %588 = vmatprep.subr.mxu0 0.0
  %589 = vmatpush1.msra.mxu0 0.0
  %590 = vmatprep.subr.mxu0 0.0
  %591 = vmatpush1.msra.mxu0 0.0
  %592 = vmatprep.subr.mxu0 0.0
  %593 = vmatpush1.msra.mxu0 0.0
  %594 = vmatprep.subr.mxu0 0.0
  %595 = vmatpush1.msra.mxu0 %v23
  %596 = vmatprep.subr.mxu0 0.0
  %597 = vmatpush1.msra.mxu0 %v22
  %598 = vmatprep.subr.mxu0 0.0
  %599 = vmatpush1.msra.mxu0 %v21
  %600 = vmatprep.subr.mxu0 0.0
  %601 = vmatpush1.msra.mxu0 %v20
  %602 = vmatprep.subr.mxu0 0.0
  %603 = vmatpush2.msra.mxu0 0.0
  %604 = vmatprep.subr.mxu0 0.0
  %605 = vmatpush2.msra.mxu0 0.0
  %606 = vmatprep.subr.mxu0 0.0
  %607 = vmatpush2.msra.mxu0 0.0
  %608 = vmatprep.subr.mxu0 0.0
  %609 = vmatpush2.msra.mxu0 0.0
  %610 = vmatprep.subr.mxu0 0.0
  %611 = vmatpush2.msra.mxu0 0.0
  %612 = vmatprep.subr.mxu0 0.0
  %613 = vmatpush2.msra.mxu0 0.0
  %614 = vmatprep.subr.mxu0 0.0
  %615 = vmatpush2.msra.mxu0 0.0
  %616 = vmatprep.subr.mxu0 0.0
  %617 = vmatpush2.msra.mxu0 0.0
  %618 = vmatprep.subr.mxu0 0.0
  %619 = vmatpush2.msra.mxu0 0.0
  %620 = vmatprep.subr.mxu0 0.0
  %621 = vmatpush2.msra.mxu0 0.0
  %622 = vmatprep.subr.mxu0 0.0
  %623 = vmatpush2.msra.mxu0 0.0
  %624 = vmatprep.subr.mxu0 0.0
  %625 = vmatpush2.msra.mxu0 0.0
  %626 = vmatprep.subr.mxu0 0.0
  %627 = vmatpush2.msra.mxu0 0.0
  %628 = vmatprep.subr.mxu0 0.0
  %629 = vmatpush2.msra.mxu0 0.0
  %630 = vmatprep.subr.mxu0 0.0
  %631 = vmatpush2.msra.mxu0 0.0
  %632 = vmatprep.subr.mxu0 0.0
  %633 = vmatpush2.msra.mxu0 0.0
  %634 = vmatprep.mubr.f32.mxu0 0.0
  %635 = vmatmul.mubr.f32.gmra.mxu0 %v568
  %v636 = vpop.f32.mrf.mxu0
  %v637 = vadd.f32 %v31, %v636
  %v638 = vpop.f32.mrf.mxu0
  %639 = vdwg.mxu0
  %v640 = vadd.f32 %v567, %v637
  %v641 = vxor.u32 %v640, 2147483648
  %v642 = vmul.f32 %v641, 1.442695
  %v643 = vpow.pop %v642
  %v644 = vadd.f32 %v643, 1.0
  %v645 = vrcp.pop %v644
  %v646 = vmul.f32 1.0, %v645
  %648 = vrot.lane.b32.xlu0 %v637, 64
  %v649 = vpop.permute.xlu0 %648
  %v651 = vmul.f32 %v646, %v649
  %653 = vrot.lane.b32.xlu0 %v651, 64
  %v654 = vpop.permute.xlu0 %653
  %v656 = vadd.f32 %v567, %v654
  %v657 = vtanh.pop %v656
  %v658 = vsub.f32 1.0, %v646
  %660 = vrot.lane.b32.xlu0 %v657, 96
  %v661 = vpop.permute.xlu0 %660
  %v663 = vmul.f32 %v658, %v661
  %v664 = vmul.f32 %v646, %v559
  %v665 = vadd.f32 %v663, %v664
  %667 = vrot.lane.b32.xlu0 %v665, 96
  %v668 = vpop.permute.xlu0 %667
  %s670 = scalar_lea.vmem %s3, 10
  %671 = vst.msk [vmem:[%s670] sm:$0x3] %vm140, %v668
  %s672 = scalar_lea.vmem %s0, 12
  %v673 = vld [vmem:[%s672] sm:$0x3]
  %v674 = vsel %vm33, %v668, 0
  %676 = vmatprep.subr.mxu0 0.0
  %677 = vmatpush1.msra.mxu0 0.0
  %678 = vmatprep.subr.mxu0 0.0
  %679 = vmatpush1.msra.mxu0 0.0
  %680 = vmatprep.subr.mxu0 0.0
  %681 = vmatpush1.msra.mxu0 0.0
  %682 = vmatprep.subr.mxu0 0.0
  %683 = vmatpush1.msra.mxu0 0.0
  %684 = vmatprep.subr.mxu0 0.0
  %685 = vmatpush1.msra.mxu0 0.0
  %686 = vmatprep.subr.mxu0 0.0
  %687 = vmatpush1.msra.mxu0 0.0
  %688 = vmatprep.subr.mxu0 0.0
  %689 = vmatpush1.msra.mxu0 0.0
  %690 = vmatprep.subr.mxu0 0.0
  %691 = vmatpush1.msra.mxu0 0.0
  %692 = vmatprep.subr.mxu0 0.0
  %693 = vmatpush1.msra.mxu0 0.0
  %694 = vmatprep.subr.mxu0 0.0
  %695 = vmatpush1.msra.mxu0 0.0
  %696 = vmatprep.subr.mxu0 0.0
  %697 = vmatpush1.msra.mxu0 0.0
  %698 = vmatprep.subr.mxu0 0.0
  %699 = vmatpush1.msra.mxu0 0.0
  %700 = vmatprep.subr.mxu0 0.0
  %701 = vmatpush1.msra.mxu0 %v23
  %702 = vmatprep.subr.mxu0 0.0
  %703 = vmatpush1.msra.mxu0 %v22
  %704 = vmatprep.subr.mxu0 0.0
  %705 = vmatpush1.msra.mxu0 %v21
  %706 = vmatprep.subr.mxu0 0.0
  %707 = vmatpush1.msra.mxu0 %v20
  %708 = vmatprep.subr.mxu0 0.0
  %709 = vmatpush2.msra.mxu0 0.0
  %710 = vmatprep.subr.mxu0 0.0
  %711 = vmatpush2.msra.mxu0 0.0
  %712 = vmatprep.subr.mxu0 0.0
  %713 = vmatpush2.msra.mxu0 0.0
  %714 = vmatprep.subr.mxu0 0.0
  %715 = vmatpush2.msra.mxu0 0.0
  %716 = vmatprep.subr.mxu0 0.0
  %717 = vmatpush2.msra.mxu0 0.0
  %718 = vmatprep.subr.mxu0 0.0
  %719 = vmatpush2.msra.mxu0 0.0
  %720 = vmatprep.subr.mxu0 0.0
  %721 = vmatpush2.msra.mxu0 0.0
  %722 = vmatprep.subr.mxu0 0.0
  %723 = vmatpush2.msra.mxu0 0.0
  %724 = vmatprep.subr.mxu0 0.0
  %725 = vmatpush2.msra.mxu0 0.0
  %726 = vmatprep.subr.mxu0 0.0
  %727 = vmatpush2.msra.mxu0 0.0
  %728 = vmatprep.subr.mxu0 0.0
  %729 = vmatpush2.msra.mxu0 0.0
  %730 = vmatprep.subr.mxu0 0.0
  %731 = vmatpush2.msra.mxu0 0.0
  %732 = vmatprep.subr.mxu0 0.0
  %733 = vmatpush2.msra.mxu0 0.0
  %734 = vmatprep.subr.mxu0 0.0
  %735 = vmatpush2.msra.mxu0 0.0
  %736 = vmatprep.subr.mxu0 0.0
  %737 = vmatpush2.msra.mxu0 0.0
  %738 = vmatprep.subr.mxu0 0.0
  %739 = vmatpush2.msra.mxu0 0.0
  %740 = vmatprep.mubr.f32.mxu0 0.0
  %741 = vmatmul.mubr.f32.gmra.mxu0 %v674
  %v742 = vpop.f32.mrf.mxu0
  %v743 = vadd.f32 %v31, %v742
  %v744 = vpop.f32.mrf.mxu0
  %745 = vdwg.mxu0
  %v746 = vadd.f32 %v673, %v743
  %v747 = vxor.u32 %v746, 2147483648
  %v748 = vmul.f32 %v747, 1.442695
  %v749 = vpow.pop %v748
  %v750 = vadd.f32 %v749, 1.0
  %v751 = vrcp.pop %v750
  %v752 = vmul.f32 1.0, %v751
  %754 = vrot.lane.b32.xlu0 %v743, 64
  %v755 = vpop.permute.xlu0 %754
  %v757 = vmul.f32 %v752, %v755
  %759 = vrot.lane.b32.xlu0 %v757, 64
  %v760 = vpop.permute.xlu0 %759
  %v762 = vadd.f32 %v673, %v760
  %v763 = vtanh.pop %v762
  %v764 = vsub.f32 1.0, %v752
  %766 = vrot.lane.b32.xlu0 %v763, 96
  %v767 = vpop.permute.xlu0 %766
  %v769 = vmul.f32 %v764, %v767
  %v770 = vmul.f32 %v752, %v665
  %v771 = vadd.f32 %v769, %v770
  %773 = vrot.lane.b32.xlu0 %v771, 96
  %v774 = vpop.permute.xlu0 %773
  %s776 = scalar_lea.vmem %s3, 12
  %777 = vst.msk [vmem:[%s776] sm:$0x3] %vm140, %v774
  %s778 = scalar_lea.vmem %s0, 14
  %v779 = vld [vmem:[%s778] sm:$0x3]
  %v780 = vsel %vm33, %v774, 0
  %782 = vmatprep.subr.mxu0 0.0
  %783 = vmatpush1.msra.mxu0 0.0
  %784 = vmatprep.subr.mxu0 0.0
  %785 = vmatpush1.msra.mxu0 0.0
  %786 = vmatprep.subr.mxu0 0.0
  %787 = vmatpush1.msra.mxu0 0.0
  %788 = vmatprep.subr.mxu0 0.0
  %789 = vmatpush1.msra.mxu0 0.0
  %790 = vmatprep.subr.mxu0 0.0
  %791 = vmatpush1.msra.mxu0 0.0
  %792 = vmatprep.subr.mxu0 0.0
  %793 = vmatpush1.msra.mxu0 0.0
  %794 = vmatprep.subr.mxu0 0.0
  %795 = vmatpush1.msra.mxu0 0.0
  %796 = vmatprep.subr.mxu0 0.0
  %797 = vmatpush1.msra.mxu0 0.0
  %798 = vmatprep.subr.mxu0 0.0
  %799 = vmatpush1.msra.mxu0 0.0
  %800 = vmatprep.subr.mxu0 0.0
  %801 = vmatpush1.msra.mxu0 0.0
  %802 = vmatprep.subr.mxu0 0.0
  %803 = vmatpush1.msra.mxu0 0.0
  %804 = vmatprep.subr.mxu0 0.0
  %805 = vmatpush1.msra.mxu0 0.0
  %806 = vmatprep.subr.mxu0 0.0
  %807 = vmatpush1.msra.mxu0 %v23
  %808 = vmatprep.subr.mxu0 0.0
  %809 = vmatpush1.msra.mxu0 %v22
  %810 = vmatprep.subr.mxu0 0.0
  %811 = vmatpush1.msra.mxu0 %v21
  %812 = vmatprep.subr.mxu0 0.0
  %813 = vmatpush1.msra.mxu0 %v20
  %814 = vmatprep.subr.mxu0 0.0
  %815 = vmatpush2.msra.mxu0 0.0
  %816 = vmatprep.subr.mxu0 0.0
  %817 = vmatpush2.msra.mxu0 0.0
  %818 = vmatprep.subr.mxu0 0.0
  %819 = vmatpush2.msra.mxu0 0.0
  %820 = vmatprep.subr.mxu0 0.0
  %821 = vmatpush2.msra.mxu0 0.0
  %822 = vmatprep.subr.mxu0 0.0
  %823 = vmatpush2.msra.mxu0 0.0
  %824 = vmatprep.subr.mxu0 0.0
  %825 = vmatpush2.msra.mxu0 0.0
  %826 = vmatprep.subr.mxu0 0.0
  %827 = vmatpush2.msra.mxu0 0.0
  %828 = vmatprep.subr.mxu0 0.0
  %829 = vmatpush2.msra.mxu0 0.0
  %830 = vmatprep.subr.mxu0 0.0
  %831 = vmatpush2.msra.mxu0 0.0
  %832 = vmatprep.subr.mxu0 0.0
  %833 = vmatpush2.msra.mxu0 0.0
  %834 = vmatprep.subr.mxu0 0.0
  %835 = vmatpush2.msra.mxu0 0.0
  %836 = vmatprep.subr.mxu0 0.0
  %837 = vmatpush2.msra.mxu0 0.0
  %838 = vmatprep.subr.mxu0 0.0
  %839 = vmatpush2.msra.mxu0 0.0
  %840 = vmatprep.subr.mxu0 0.0
  %841 = vmatpush2.msra.mxu0 0.0
  %842 = vmatprep.subr.mxu0 0.0
  %843 = vmatpush2.msra.mxu0 0.0
  %844 = vmatprep.subr.mxu0 0.0
  %845 = vmatpush2.msra.mxu0 0.0
  %846 = vmatprep.mubr.f32.mxu0 0.0
  %847 = vmatmul.mubr.f32.gmra.mxu0 %v780
  %v848 = vpop.f32.mrf.mxu0
  %v849 = vadd.f32 %v31, %v848
  %v850 = vpop.f32.mrf.mxu0
  %851 = vdwg.mxu0
  %v852 = vadd.f32 %v779, %v849
  %v853 = vxor.u32 %v852, 2147483648
  %v854 = vmul.f32 %v853, 1.442695
  %v855 = vpow.pop %v854
  %v856 = vadd.f32 %v855, 1.0
  %v857 = vrcp.pop %v856
  %v858 = vmul.f32 1.0, %v857
  %860 = vrot.lane.b32.xlu0 %v849, 64
  %v861 = vpop.permute.xlu0 %860
  %v863 = vmul.f32 %v858, %v861
  %865 = vrot.lane.b32.xlu0 %v863, 64
  %v866 = vpop.permute.xlu0 %865
  %v868 = vadd.f32 %v779, %v866
  %v869 = vtanh.pop %v868
  %v870 = vsub.f32 1.0, %v858
  %872 = vrot.lane.b32.xlu0 %v869, 96
  %v873 = vpop.permute.xlu0 %872
  %v875 = vmul.f32 %v870, %v873
  %v876 = vmul.f32 %v858, %v771
  %v877 = vadd.f32 %v875, %v876
  %879 = vrot.lane.b32.xlu0 %v877, 96
  %v880 = vpop.permute.xlu0 %879
  %s882 = scalar_lea.vmem %s3, 14
  %883 = vst.msk [vmem:[%s882] sm:$0x3] %vm140, %v880
  %884 = vst.msk [vmem:[#allocation2] sm:$0x3] %vm140, %v880
  // Predicated region
  $region18: #{gru_predictor_forward.5} parent=0 // pred_check
    _
  $region19: #{gru_predictor_forward.5} parent=0 // pred_check_branch
    %886 = sbr.rel (0) target = $region21
  $region20: #{gru_predictor_forward.5} parent=0 // pred_region
    _
  $region21: #{gru_predictor_forward.5} parent=0 // pred_fallthru
    _
  // Predicated region
  $region22: #{gru_predictor_forward.5} parent=0 // pred_check
    _
  $region23: #{gru_predictor_forward.5} parent=0 // pred_check_branch
    %888 = sbr.rel (0) target = $region25
  $region24: #{gru_predictor_forward.5} parent=0 // pred_region
    _
  $region25: #{gru_predictor_forward.5} parent=0 // pred_fallthru
    _

// kernel: gru_predictor_forward.7
$region0: #{gru_predictor_forward.7}
  #allocation0 [shape = 'u32[]', space=smem, size = 0x4, offset = 0x4, fixed_abs, tag = 'smem constant byte address 0x4 - core index']
  #allocation1 [shape = 'u32[144,128]{1,0:T(1,128)}', space=vmem, size = 0x12000, scoped, tag = 'internal scratch']
  #allocation2 [shape = 'f32[2,32]{1,0:T(2,128)}', space=vmem, size = 0x400, scoped, tag = 'scratch operand']
  %s0 = inlined_call_operand.vmem [shape: f32[8,2,96], index: 0, kind: input, shape index: {}]
  %s1 = inlined_call_operand.vmem [shape: f32[32,96], index: 1, kind: input, shape index: {}]
  %s2 = inlined_call_operand.vmem [shape: f32[1,96], index: 2, kind: input, shape index: {}]
  %s3 = inlined_call_operand.vmem [shape: f32[32,4], index: 3, kind: input, shape index: {}]
  %s4 = inlined_call_operand.vmem [shape: f32[1,4], index: 4, kind: input, shape index: {}]
  %s5 = inlined_call_operand.hbm [shape: f32[2,4], index: 5, kind: output, shape index: {}]
  %s6 = sld [smem:[#allocation0]]
  $region38: #{gru_predictor_forward.7} parent=0
    _
  %s8 = ssub.s32 1, %s6
  %s9 = scalar_select 0, %s8, %s6
  $region1: #{gru_predictor_forward.7} parent=0
    #allocation3 [shape = 'u8[1024]{0}', space=vmem, size = 0x400, scoped, tag = 'output window, operand 0, single buffered']
    #allocation4 [shape = 's32[1]{0}', space=sflag, size = 0x4, scoped, tag = 'scoped memory for gru_predictor_forward.7']
    %10 = vsyncpa [#allocation4], 0
    // Predicated region
    $region2: #{gru_predictor_forward.7} parent=1 // pred_check
      _
    $region3: #{gru_predictor_forward.7} parent=1 // pred_check_branch
      %12 = sbr.rel (0) target = $region5
    $region4: #{gru_predictor_forward.7} parent=1 // pred_region
      _
    $region5: #{gru_predictor_forward.7} parent=1 // pred_fallthru
      _
    // Predicated region
    $region6: #{gru_predictor_forward.7} parent=1 // pred_check
      _
    $region7: #{gru_predictor_forward.7} parent=1 // pred_check_branch
      %14 = sbr.rel (0) target = $region9
    $region8: #{gru_predictor_forward.7} parent=1 // pred_region
      _
    $region9: #{gru_predictor_forward.7} parent=1 // pred_fallthru
      _
    // Predicated region
    $region10: #{gru_predictor_forward.7} parent=1 // pred_check
      _
    $region11: #{gru_predictor_forward.7} parent=1 // pred_check_branch
      %16 = sbr.rel (0) target = $region13
    $region12: #{gru_predictor_forward.7} parent=1 // pred_region
      _
    $region13: #{gru_predictor_forward.7} parent=1 // pred_fallthru
      _
    // Predicated region
    $region14: #{gru_predictor_forward.7} parent=1 // pred_check
      _
    $region15: #{gru_predictor_forward.7} parent=1 // pred_check_branch
      %18 = sbr.rel (0) target = $region17
    $region16: #{gru_predictor_forward.7} parent=1 // pred_region
      _
    $region17: #{gru_predictor_forward.7} parent=1 // pred_fallthru
      _
    // Predicated region
    $region18: #{gru_predictor_forward.7} parent=1 // pred_check
      _
    $region19: #{gru_predictor_forward.7} parent=1 // pred_check_branch
      %20 = sbr.rel (0) target = $region21
    $region20: #{gru_predictor_forward.7} parent=1 // pred_region
      _
    $region21: #{gru_predictor_forward.7} parent=1 // pred_fallthru
      _
    %p21 = scmp.eq.s32.totalorder 0, 0
    // Predicated region
    $region22: #{gru_predictor_forward.7} parent=1 // pred_check
      %p22 = pneg %p21
    $region23: #{gru_predictor_forward.7} parent=1 // pred_check_branch
      %24 = sbr.rel (%p22) target = $region25
    $region24: #{gru_predictor_forward.7} parent=1 // pred_region
      %vm25 = vcmask 254976
      %26 = vst.msk [vmem:[#allocation2] sm:$0x3] %vm25, 0.0
    $region25: #{gru_predictor_forward.7} parent=1 // pred_fallthru
      _
    %v27 = vld [vmem:[%s1] sm:$0xff]
    %v28 = vld [vmem:[%s1 + $0x8] sm:$0xff]
    %v29 = vld [vmem:[%s1 + $0x10] sm:$0xff]
    %v30 = vld [vmem:[%s1 + $0x18] sm:$0xff]
    %v31 = vld [vmem:[%s2] sm:$0x1]
    %v32 = vld [vmem:[#allocation2] sm:$0x3]
    %v33 = vld [vmem:[%s0] sm:$0x3]
    %v35 = vlaneseq
    %v36 = vshrl.u32 %v35, 7
    %v37 = vsub.s32 0, %v36
    %v38 = vrot.slane %v31, %v37
    %vm40 = vcmask 261120
    %v42 = vsel %vm40, %v32, 0
    %44 = vmatprep.subr.mxu0 0.0
    %45 = vmatpush1.msra.mxu0 0.0
    %46 = vmatprep.subr.mxu0 0.0
    %47 = vmatpush1.msra.mxu0 0.0
    %48 = vmatprep.subr.mxu0 0.0
    %49 = vmatpush1.msra.mxu0 0.0
    %50 = vmatprep.subr.mxu0 0.0
    %51 = vmatpush1.msra.mxu0 0.0
    %52 = vmatprep.subr.mxu0 0.0
    %53 = vmatpush1.msra.mxu0 0.0
    %54 = vmatprep.subr.mxu0 0.0
    %55 = vmatpush1.msra.mxu0 0.0
    %56 = vmatprep.subr.mxu0 0.0
    %57 = vmatpush1.msra.mxu0 0.0
    %58 = vmatprep.subr.mxu0 0.0
    %59 = vmatpush1.msra.mxu0 0.0
    %60 = vmatprep.subr.mxu0 0.0
    %61 = vmatpush1.msra.mxu0 0.0
    %62 = vmatprep.subr.mxu0 0.0
    %63 = vmatpush1.msra.mxu0 0.0
    %64 = vmatprep.subr.mxu0 0.0
    %65 = vmatpush1.msra.mxu0 0.0
    %66 = vmatprep.subr.mxu0 0.0
    %67 = vmatpush1.msra.mxu0 0.0
    %68 = vmatprep.subr.mxu0 0.0
    %69 = vmatpush1.msra.mxu0 %v30
    %70 = vmatprep.subr.mxu0 0.0
    %71 = vmatpush1.msra.mxu0 %v29
    %72 = vmatprep.subr.mxu0 0.0
    %73 = vmatpush1.msra.mxu0 %v28
    %74 = vmatprep.subr.mxu0 0.0
    %75 = vmatpush1.msra.mxu0 %v27
    %76 = vmatprep.subr.mxu0 0.0
    %77 = vmatpush2.msra.mxu0 0.0
    %78 = vmatprep.subr.mxu0 0.0
    %79 = vmatpush2.msra.mxu0 0.0
    %80 = vmatprep.subr.mxu0 0.0
    %81 = vmatpush2.msra.mxu0 0.0
    %82 = vmatprep.subr.mxu0 0.0
    %83 = vmatpush2.msra.mxu0 0.0
    %84 = vmatprep.subr.mxu0 0.0
    %85 = vmatpush2.msra.mxu0 0.0
    %86 = vmatprep.subr.mxu0 0.0
    %87 = vmatpush2.msra.mxu0 0.0
    %88 = vmatprep.subr.mxu0 0.0
    %89 = vmatpush2.msra.mxu0 0.0
    %90 = vmatprep.subr.mxu0 0.0
    %91 = vmatpush2.msra.mxu0 0.0
    %92 = vmatprep.subr.mxu0 0.0
    %93 = vmatpush2.msra.mxu0 0.0
    %94 = vmatprep.subr.mxu0 0.0
    %95 = vmatpush2.msra.mxu0 0.0
    %96 = vmatprep.subr.mxu0 0.0
    %97 = vmatpush2.msra.mxu0 0.0
    %98 = vmatprep.subr.mxu0 0.0
    %99 = vmatpush2.msra.mxu0 0.0
    %100 = vmatprep.subr.mxu0 0.0
    %101 = vmatpush2.msra.mxu0 0.0
    %102 = vmatprep.subr.mxu0 0.0
    %103 = vmatpush2.msra.mxu0 0.0
    %104 = vmatprep.subr.mxu0 0.0
    %105 = vmatpush2.msra.mxu0 0.0
    %106 = vmatprep.subr.mxu0 0.0
    %107 = vmatpush2.msra.mxu0 0.0
    %108 = vmatprep.mubr.f32.mxu0 0.0
    %109 = vmatmul.mubr.f32.gmra.mxu0 %v42
    %v110 = vpop.f32.mrf.mxu0
    %v111 = vadd.f32 %v38, %v110
    %v112 = vpop.f32.mrf.mxu0
    %113 = vdwg.mxu0
    %v114 = vadd.f32 %v33, %v111
    %v115 = vxor.u32 %v114, 2147483648
    %v116 = vmul.f32 %v115, 1.442695
    %v117 = vpow.pop %v116
    %v118 = vadd.f32 %v117, 1.0
    %v119 = vrcp.pop %v118
    %v120 = vmul.f32 1.0, %v119
    %122 = vrot.lane.b32.xlu0 %v111, 64
    %v123 = vpop.permute.xlu0 %122
    %v125 = vmul.f32 %v120, %v123
    %127 = vrot.lane.b32.xlu0 %v125, 64
    %v128 = vpop.permute.xlu0 %127
    %v130 = vadd.f32 %v33, %v128
    %v131 = vtanh.pop %v130
    %v132 = vsub.f32 1.0, %v120
    %134 = vrot.lane.b32.xlu0 %v131, 96
    %v135 = vpop.permute.xlu0 %134
    %v137 = vmul.f32 %v132, %v135
    %138 = vrot.lane.b32.xlu0 %v32, 32
    %v139 = vpop.permute.xlu0 %138
    %v141 = vmul.f32 %v120, %v139
    %v142 = vadd.f32 %v137, %v141
    %s143 = scalar_lea.vmem %s0, 2
    %v144 = vld [vmem:[%s143] sm:$0x3]
    %146 = vrot.lane.b32.xlu0 %v142, 96
    %v147 = vpop.permute.xlu0 %146
    %v148 = vsel %vm40, %v147, 0
    %150 = vmatprep.subr.mxu0 0.0
    %151 = vmatpush1.msra.mxu0 0.0
    %152 = vmatprep.subr.mxu0 0.0
    %153 = vmatpush1.msra.mxu0 0.0
    %154 = vmatprep.subr.mxu0 0.0
    %155 = vmatpush1.msra.mxu0 0.0
    %156 = vmatprep.subr.mxu0 0.0
    %157 = vmatpush1.msra.mxu0 0.0
    %158 = vmatprep.subr.mxu0 0.0
    %159 = vmatpush1.msra.mxu0 0.0
    %160 = vmatprep.subr.mxu0 0.0
    %161 = vmatpush1.msra.mxu0 0.0
    %162 = vmatprep.subr.mxu0 0.0
    %163 = vmatpush1.msra.mxu0 0.0
    %164 = vmatprep.subr.mxu0 0.0
    %165 = vmatpush1.msra.mxu0 0.0
    %166 = vmatprep.subr.mxu0 0.0
    %167 = vmatpush1.msra.mxu0 0.0
    %168 = vmatprep.subr.mxu0 0.0
    %169 = vmatpush1.msra.mxu0 0.0
    %170 = vmatprep.subr.mxu0 0.0
    %171 = vmatpush1.msra.mxu0 0.0
    %172 = vmatprep.subr.mxu0 0.0
    %173 = vmatpush1.msra.mxu0 0.0
    %174 = vmatprep.subr.mxu0 0.0
    %175 = vmatpush1.msra.mxu0 %v30
    %176 = vmatprep.subr.mxu0 0.0
    %177 = vmatpush1.msra.mxu0 %v29
    %178 = vmatprep.subr.mxu0 0.0
    %179 = vmatpush1.msra.mxu0 %v28
    %180 = vmatprep.subr.mxu0 0.0
    %181 = vmatpush1.msra.mxu0 %v27
    %182 = vmatprep.subr.mxu0 0.0
    %183 = vmatpush2.msra.mxu0 0.0
    %184 = vmatprep.subr.mxu0 0.0
    %185 = vmatpush2.msra.mxu0 0.0
    %186 = vmatprep.subr.mxu0 0.0
    %187 = vmatpush2.msra.mxu0 0.0
    %188 = vmatprep.subr.mxu0 0.0
    %189 = vmatpush2.msra.mxu0 0.0
    %190 = vmatprep.subr.mxu0 0.0
    %191 = vmatpush2.msra.mxu0 0.0
    %192 = vmatprep.subr.mxu0 0.0
    %193 = vmatpush2.msra.mxu0 0.0
    %194 = vmatprep.subr.mxu0 0.0
    %195 = vmatpush2.msra.mxu0 0.0
    %196 = vmatprep.subr.mxu0 0.0
    %197 = vmatpush2.msra.mxu0 0.0
    %198 = vmatprep.subr.mxu0 0.0
    %199 = vmatpush2.msra.mxu0 0.0
    %200 = vmatprep.subr.mxu0 0.0
    %201 = vmatpush2.msra.mxu0 0.0
    %202 = vmatprep.subr.mxu0 0.0
    %203 = vmatpush2.msra.mxu0 0.0
    %204 = vmatprep.subr.mxu0 0.0
    %205 = vmatpush2.msra.mxu0 0.0
    %206 = vmatprep.subr.mxu0 0.0
    %207 = vmatpush2.msra.mxu0 0.0
    %208 = vmatprep.subr.mxu0 0.0
    %209 = vmatpush2.msra.mxu0 0.0
    %210 = vmatprep.subr.mxu0 0.0
    %211 = vmatpush2.msra.mxu0 0.0
    %212 = vmatprep.subr.mxu0 0.0
    %213 = vmatpush2.msra.mxu0 0.0
    %214 = vmatprep.mubr.f32.mxu0 0.0
    %215 = vmatmul.mubr.f32.gmra.mxu0 %v148
    %v216 = vpop.f32.mrf.mxu0
    %v217 = vadd.f32 %v38, %v216
    %v218 = vpop.f32.mrf.mxu0
    %219 = vdwg.mxu0
    %v220 = vadd.f32 %v144, %v217
    %v221 = vxor.u32 %v220, 2147483648
    %v222 = vmul.f32 %v221, 1.442695
    %v223 = vpow.pop %v222
    %v224 = vadd.f32 %v223, 1.0
    %v225 = vrcp.pop %v224
    %v226 = vmul.f32 1.0, %v225
    %228 = vrot.lane.b32.xlu0 %v217, 64
    %v229 = vpop.permute.xlu0 %228
    %v231 = vmul.f32 %v226, %v229
    %233 = vrot.lane.b32.xlu0 %v231, 64
    %v234 = vpop.permute.xlu0 %233
    %v236 = vadd.f32 %v144, %v234
    %v237 = vtanh.pop %v236
    %v238 = vsub.f32 1.0, %v226
    %240 = vrot.lane.b32.xlu0 %v237, 96
    %v241 = vpop.permute.xlu0 %240
    %v243 = vmul.f32 %v238, %v241
    %v244 = vmul.f32 %v226, %v142
    %v245 = vadd.f32 %v243, %v244
    %s246 = scalar_lea.vmem %s0, 4
    %v247 = vld [vmem:[%s246] sm:$0x3]
    %249 = vrot.lane.b32.xlu0 %v245, 96
    %v250 = vpop.permute.xlu0 %249
    %v251 = vsel %vm40, %v250, 0
    %253 = vmatprep.subr.mxu0 0.0
    %254 = vmatpush1.msra.mxu0 0.0
    %255 = vmatprep.subr.mxu0 0.0
    %256 = vmatpush1.msra.mxu0 0.0
    %257 = vmatprep.subr.mxu0 0.0
    %258 = vmatpush1.msra.mxu0 0.0
    %259 = vmatprep.subr.mxu0 0.0
    %260 = vmatpush1.msra.mxu0 0.0
    %261 = vmatprep.subr.mxu0 0.0
    %262 = vmatpush1.msra.mxu0 0.0
    %263 = vmatprep.subr.mxu0 0.0
    %264 = vmatpush1.msra.mxu0 0.0
    %265 = vmatprep.subr.mxu0 0.0
    %266 = vmatpush1.msra.mxu0 0.0
    %267 = vmatprep.subr.mxu0 0.0
    %268 = vmatpush1.msra.mxu0 0.0
    %269 = vmatprep.subr.mxu0 0.0
    %270 = vmatpush1.msra.mxu0 0.0
    %271 = vmatprep.subr.mxu0 0.0
    %272 = vmatpush1.msra.mxu0 0.0
    %273 = vmatprep.subr.mxu0 0.0
    %274 = vmatpush1.msra.mxu0 0.0
    %275 = vmatprep.subr.mxu0 0.0
    %276 = vmatpush1.msra.mxu0 0.0
    %277 = vmatprep.subr.mxu0 0.0
    %278 = vmatpush1.msra.mxu0 %v30
    %279 = vmatprep.subr.mxu0 0.0
    %280 = vmatpush1.msra.mxu0 %v29
    %281 = vmatprep.subr.mxu0 0.0
    %282 = vmatpush1.msra.mxu0 %v28
    %283 = vmatprep.subr.mxu0 0.0
    %284 = vmatpush1.msra.mxu0 %v27
    %285 = vmatprep.subr.mxu0 0.0
    %286 = vmatpush2.msra.mxu0 0.0
    %287 = vmatprep.subr.mxu0 0.0
    %288 = vmatpush2.msra.mxu0 0.0
    %289 = vmatprep.subr.mxu0 0.0
    %290 = vmatpush2.msra.mxu0 0.0
    %291 = vmatprep.subr.mxu0 0.0
    %292 = vmatpush2.msra.mxu0 0.0
    %293 = vmatprep.subr.mxu0 0.0
    %294 = vmatpush2.msra.mxu0 0.0
    %295 = vmatprep.subr.mxu0 0.0
    %296 = vmatpush2.msra.mxu0 0.0
    %297 = vmatprep.subr.mxu0 0.0
    %298 = vmatpush2.msra.mxu0 0.0
    %299 = vmatprep.subr.mxu0 0.0
    %300 = vmatpush2.msra.mxu0 0.0
    %301 = vmatprep.subr.mxu0 0.0
    %302 = vmatpush2.msra.mxu0 0.0
    %303 = vmatprep.subr.mxu0 0.0
    %304 = vmatpush2.msra.mxu0 0.0
    %305 = vmatprep.subr.mxu0 0.0
    %306 = vmatpush2.msra.mxu0 0.0
    %307 = vmatprep.subr.mxu0 0.0
    %308 = vmatpush2.msra.mxu0 0.0
    %309 = vmatprep.subr.mxu0 0.0
    %310 = vmatpush2.msra.mxu0 0.0
    %311 = vmatprep.subr.mxu0 0.0
    %312 = vmatpush2.msra.mxu0 0.0
    %313 = vmatprep.subr.mxu0 0.0
    %314 = vmatpush2.msra.mxu0 0.0
    %315 = vmatprep.subr.mxu0 0.0
    %316 = vmatpush2.msra.mxu0 0.0
    %317 = vmatprep.mubr.f32.mxu0 0.0
    %318 = vmatmul.mubr.f32.gmra.mxu0 %v251
    %v319 = vpop.f32.mrf.mxu0
    %v320 = vadd.f32 %v38, %v319
    %v321 = vpop.f32.mrf.mxu0
    %322 = vdwg.mxu0
    %v323 = vadd.f32 %v247, %v320
    %v324 = vxor.u32 %v323, 2147483648
    %v325 = vmul.f32 %v324, 1.442695
    %v326 = vpow.pop %v325
    %v327 = vadd.f32 %v326, 1.0
    %v328 = vrcp.pop %v327
    %v329 = vmul.f32 1.0, %v328
    %331 = vrot.lane.b32.xlu0 %v320, 64
    %v332 = vpop.permute.xlu0 %331
    %v334 = vmul.f32 %v329, %v332
    %336 = vrot.lane.b32.xlu0 %v334, 64
    %v337 = vpop.permute.xlu0 %336
    %v339 = vadd.f32 %v247, %v337
    %v340 = vtanh.pop %v339
    %v341 = vsub.f32 1.0, %v329
    %343 = vrot.lane.b32.xlu0 %v340, 96
    %v344 = vpop.permute.xlu0 %343
    %v346 = vmul.f32 %v341, %v344
    %v347 = vmul.f32 %v329, %v245
    %v348 = vadd.f32 %v346, %v347
    %s349 = scalar_lea.vmem %s0, 6
    %v350 = vld [vmem:[%s349] sm:$0x3]
    %352 = vrot.lane.b32.xlu0 %v348, 96
    %v353 = vpop.permute.xlu0 %352
    %v354 = vsel %vm40, %v353, 0
    %356 = vmatprep.subr.mxu0 0.0
    %357 = vmatpush1.msra.mxu0 0.0
    %358 = vmatprep.subr.mxu0 0.0
    %359 = vmatpush1.msra.mxu0 0.0
    %360 = vmatprep.subr.mxu0 0.0
    %361 = vmatpush1.msra.mxu0 0.0
    %362 = vmatprep.subr.mxu0 0.0
    %363 = vmatpush1.msra.mxu0 0.0
    %364 = vmatprep.subr.mxu0 0.0
    %365 = vmatpush1.msra.mxu0 0.0
    %366 = vmatprep.subr.mxu0 0.0
    %367 = vmatpush1.msra.mxu0 0.0
    %368 = vmatprep.subr.mxu0 0.0
    %369 = vmatpush1.msra.mxu0 0.0
    %370 = vmatprep.subr.mxu0 0.0
    %371 = vmatpush1.msra.mxu0 0.0
    %372 = vmatprep.subr.mxu0 0.0
    %373 = vmatpush1.msra.mxu0 0.0
    %374 = vmatprep.subr.mxu0 0.0
    %375 = vmatpush1.msra.mxu0 0.0
    %376 = vmatprep.subr.mxu0 0.0
    %377 = vmatpush1.msra.mxu0 0.0
    %378 = vmatprep.subr.mxu0 0.0
    %379 = vmatpush1.msra.mxu0 0.0
    %380 = vmatprep.subr.mxu0 0.0
    %381 = vmatpush1.msra.mxu0 %v30
    %382 = vmatprep.subr.mxu0 0.0
    %383 = vmatpush1.msra.mxu0 %v29
    %384 = vmatprep.subr.mxu0 0.0
    %385 = vmatpush1.msra.mxu0 %v28
    %386 = vmatprep.subr.mxu0 0.0
    %387 = vmatpush1.msra.mxu0 %v27
    %388 = vmatprep.subr.mxu0 0.0
    %389 = vmatpush2.msra.mxu0 0.0
    %390 = vmatprep.subr.mxu0 0.0
    %391 = vmatpush2.msra.mxu0 0.0
    %392 = vmatprep.subr.mxu0 0.0
    %393 = vmatpush2.msra.mxu0 0.0
    %394 = vmatprep.subr.mxu0 0.0
    %395 = vmatpush2.msra.mxu0 0.0
    %396 = vmatprep.subr.mxu0 0.0
    %397 = vmatpush2.msra.mxu0 0.0
    %398 = vmatprep.subr.mxu0 0.0
    %399 = vmatpush2.msra.mxu0 0.0
    %400 = vmatprep.subr.mxu0 0.0
    %401 = vmatpush2.msra.mxu0 0.0
    %402 = vmatprep.subr.mxu0 0.0
    %403 = vmatpush2.msra.mxu0 0.0
    %404 = vmatprep.subr.mxu0 0.0
    %405 = vmatpush2.msra.mxu0 0.0
    %406 = vmatprep.subr.mxu0 0.0
    %407 = vmatpush2.msra.mxu0 0.0
    %408 = vmatprep.subr.mxu0 0.0
    %409 = vmatpush2.msra.mxu0 0.0
    %410 = vmatprep.subr.mxu0 0.0
    %411 = vmatpush2.msra.mxu0 0.0
    %412 = vmatprep.subr.mxu0 0.0
    %413 = vmatpush2.msra.mxu0 0.0
    %414 = vmatprep.subr.mxu0 0.0
    %415 = vmatpush2.msra.mxu0 0.0
    %416 = vmatprep.subr.mxu0 0.0
    %417 = vmatpush2.msra.mxu0 0.0
    %418 = vmatprep.subr.mxu0 0.0
    %419 = vmatpush2.msra.mxu0 0.0
    %420 = vmatprep.mubr.f32.mxu0 0.0
    %421 = vmatmul.mubr.f32.gmra.mxu0 %v354
    %v422 = vpop.f32.mrf.mxu0
    %v423 = vadd.f32 %v38, %v422
    %v424 = vpop.f32.mrf.mxu0
    %425 = vdwg.mxu0
    %v426 = vadd.f32 %v350, %v423
    %v427 = vxor.u32 %v426, 2147483648
    %v428 = vmul.f32 %v427, 1.442695
    %v429 = vpow.pop %v428
    %v430 = vadd.f32 %v429, 1.0
    %v431 = vrcp.pop %v430
    %v432 = vmul.f32 1.0, %v431
    %434 = vrot.lane.b32.xlu0 %v423, 64
    %v435 = vpop.permute.xlu0 %434
    %v437 = vmul.f32 %v432, %v435
    %439 = vrot.lane.b32.xlu0 %v437, 64
    %v440 = vpop.permute.xlu0 %439
    %v442 = vadd.f32 %v350, %v440
    %v443 = vtanh.pop %v442
    %v444 = vsub.f32 1.0, %v432
    %446 = vrot.lane.b32.xlu0 %v443, 96
    %v447 = vpop.permute.xlu0 %446
    %v449 = vmul.f32 %v444, %v447
    %v450 = vmul.f32 %v432, %v348
    %v451 = vadd.f32 %v449, %v450
    %s452 = scalar_lea.vmem %s0, 8
    %v453 = vld [vmem:[%s452] sm:$0x3]
    %455 = vrot.lane.b32.xlu0 %v451, 96
    %v456 = vpop.permute.xlu0 %455
    %v457 = vsel %vm40, %v456, 0
    %459 = vmatprep.subr.mxu0 0.0
    %460 = vmatpush1.msra.mxu0 0.0
    %461 = vmatprep.subr.mxu0 0.0
    %462 = vmatpush1.msra.mxu0 0.0
    %463 = vmatprep.subr.mxu0 0.0
    %464 = vmatpush1.msra.mxu0 0.0
    %465 = vmatprep.subr.mxu0 0.0
    %466 = vmatpush1.msra.mxu0 0.0
    %467 = vmatprep.subr.mxu0 0.0
    %468 = vmatpush1.msra.mxu0 0.0
    %469 = vmatprep.subr.mxu0 0.0
    %470 = vmatpush1.msra.mxu0 0.0
    %471 = vmatprep.subr.mxu0 0.0
    %472 = vmatpush1.msra.mxu0 0.0
    %473 = vmatprep.subr.mxu0 0.0
    %474 = vmatpush1.msra.mxu0 0.0
    %475 = vmatprep.subr.mxu0 0.0
    %476 = vmatpush1.msra.mxu0 0.0
    %477 = vmatprep.subr.mxu0 0.0
    %478 = vmatpush1.msra.mxu0 0.0
    %479 = vmatprep.subr.mxu0 0.0
    %480 = vmatpush1.msra.mxu0 0.0
    %481 = vmatprep.subr.mxu0 0.0
    %482 = vmatpush1.msra.mxu0 0.0
    %483 = vmatprep.subr.mxu0 0.0
    %484 = vmatpush1.msra.mxu0 %v30
    %485 = vmatprep.subr.mxu0 0.0
    %486 = vmatpush1.msra.mxu0 %v29
    %487 = vmatprep.subr.mxu0 0.0
    %488 = vmatpush1.msra.mxu0 %v28
    %489 = vmatprep.subr.mxu0 0.0
    %490 = vmatpush1.msra.mxu0 %v27
    %491 = vmatprep.subr.mxu0 0.0
    %492 = vmatpush2.msra.mxu0 0.0
    %493 = vmatprep.subr.mxu0 0.0
    %494 = vmatpush2.msra.mxu0 0.0
    %495 = vmatprep.subr.mxu0 0.0
    %496 = vmatpush2.msra.mxu0 0.0
    %497 = vmatprep.subr.mxu0 0.0
    %498 = vmatpush2.msra.mxu0 0.0
    %499 = vmatprep.subr.mxu0 0.0
    %500 = vmatpush2.msra.mxu0 0.0
    %501 = vmatprep.subr.mxu0 0.0
    %502 = vmatpush2.msra.mxu0 0.0
    %503 = vmatprep.subr.mxu0 0.0
    %504 = vmatpush2.msra.mxu0 0.0
    %505 = vmatprep.subr.mxu0 0.0
    %506 = vmatpush2.msra.mxu0 0.0
    %507 = vmatprep.subr.mxu0 0.0
    %508 = vmatpush2.msra.mxu0 0.0
    %509 = vmatprep.subr.mxu0 0.0
    %510 = vmatpush2.msra.mxu0 0.0
    %511 = vmatprep.subr.mxu0 0.0
    %512 = vmatpush2.msra.mxu0 0.0
    %513 = vmatprep.subr.mxu0 0.0
    %514 = vmatpush2.msra.mxu0 0.0
    %515 = vmatprep.subr.mxu0 0.0
    %516 = vmatpush2.msra.mxu0 0.0
    %517 = vmatprep.subr.mxu0 0.0
    %518 = vmatpush2.msra.mxu0 0.0
    %519 = vmatprep.subr.mxu0 0.0
    %520 = vmatpush2.msra.mxu0 0.0
    %521 = vmatprep.subr.mxu0 0.0
    %522 = vmatpush2.msra.mxu0 0.0
    %523 = vmatprep.mubr.f32.mxu0 0.0
    %524 = vmatmul.mubr.f32.gmra.mxu0 %v457
    %v525 = vpop.f32.mrf.mxu0
    %v526 = vadd.f32 %v38, %v525
    %v527 = vpop.f32.mrf.mxu0
    %528 = vdwg.mxu0
    %v529 = vadd.f32 %v453, %v526
    %v530 = vxor.u32 %v529, 2147483648
    %v531 = vmul.f32 %v530, 1.442695
    %v532 = vpow.pop %v531
    %v533 = vadd.f32 %v532, 1.0
    %v534 = vrcp.pop %v533
    %v535 = vmul.f32 1.0, %v534
    %537 = vrot.lane.b32.xlu0 %v526, 64
    %v538 = vpop.permute.xlu0 %537
    %v540 = vmul.f32 %v535, %v538
    %542 = vrot.lane.b32.xlu0 %v540, 64
    %v543 = vpop.permute.xlu0 %542
    %v545 = vadd.f32 %v453, %v543
    %v546 = vtanh.pop %v545
    %v547 = vsub.f32 1.0, %v535
    %549 = vrot.lane.b32.xlu0 %v546, 96
    %v550 = vpop.permute.xlu0 %549
    %v552 = vmul.f32 %v547, %v550
    %v553 = vmul.f32 %v535, %v451
    %v554 = vadd.f32 %v552, %v553
    %s555 = scalar_lea.vmem %s0, 10
    %v556 = vld [vmem:[%s555] sm:$0x3]
    %558 = vrot.lane.b32.xlu0 %v554, 96
    %v559 = vpop.permute.xlu0 %558
    %v560 = vsel %vm40, %v559, 0
    %562 = vmatprep.subr.mxu0 0.0
    %563 = vmatpush1.msra.mxu0 0.0
    %564 = vmatprep.subr.mxu0 0.0
    %565 = vmatpush1.msra.mxu0 0.0
    %566 = vmatprep.subr.mxu0 0.0
    %567 = vmatpush1.msra.mxu0 0.0
    %568 = vmatprep.subr.mxu0 0.0
    %569 = vmatpush1.msra.mxu0 0.0
    %570 = vmatprep.subr.mxu0 0.0
    %571 = vmatpush1.msra.mxu0 0.0
    %572 = vmatprep.subr.mxu0 0.0
    %573 = vmatpush1.msra.mxu0 0.0
    %574 = vmatprep.subr.mxu0 0.0
    %575 = vmatpush1.msra.mxu0 0.0
    %576 = vmatprep.subr.mxu0 0.0
    %577 = vmatpush1.msra.mxu0 0.0
    %578 = vmatprep.subr.mxu0 0.0
    %579 = vmatpush1.msra.mxu0 0.0
    %580 = vmatprep.subr.mxu0 0.0
    %581 = vmatpush1.msra.mxu0 0.0
    %582 = vmatprep.subr.mxu0 0.0
    %583 = vmatpush1.msra.mxu0 0.0
    %584 = vmatprep.subr.mxu0 0.0
    %585 = vmatpush1.msra.mxu0 0.0
    %586 = vmatprep.subr.mxu0 0.0
    %587 = vmatpush1.msra.mxu0 %v30
    %588 = vmatprep.subr.mxu0 0.0
    %589 = vmatpush1.msra.mxu0 %v29
    %590 = vmatprep.subr.mxu0 0.0
    %591 = vmatpush1.msra.mxu0 %v28
    %592 = vmatprep.subr.mxu0 0.0
    %593 = vmatpush1.msra.mxu0 %v27
    %594 = vmatprep.subr.mxu0 0.0
    %595 = vmatpush2.msra.mxu0 0.0
    %596 = vmatprep.subr.mxu0 0.0
    %597 = vmatpush2.msra.mxu0 0.0
    %598 = vmatprep.subr.mxu0 0.0
    %599 = vmatpush2.msra.mxu0 0.0
    %600 = vmatprep.subr.mxu0 0.0
    %601 = vmatpush2.msra.mxu0 0.0
    %602 = vmatprep.subr.mxu0 0.0
    %603 = vmatpush2.msra.mxu0 0.0
    %604 = vmatprep.subr.mxu0 0.0
    %605 = vmatpush2.msra.mxu0 0.0
    %606 = vmatprep.subr.mxu0 0.0
    %607 = vmatpush2.msra.mxu0 0.0
    %608 = vmatprep.subr.mxu0 0.0
    %609 = vmatpush2.msra.mxu0 0.0
    %610 = vmatprep.subr.mxu0 0.0
    %611 = vmatpush2.msra.mxu0 0.0
    %612 = vmatprep.subr.mxu0 0.0
    %613 = vmatpush2.msra.mxu0 0.0
    %614 = vmatprep.subr.mxu0 0.0
    %615 = vmatpush2.msra.mxu0 0.0
    %616 = vmatprep.subr.mxu0 0.0
    %617 = vmatpush2.msra.mxu0 0.0
    %618 = vmatprep.subr.mxu0 0.0
    %619 = vmatpush2.msra.mxu0 0.0
    %620 = vmatprep.subr.mxu0 0.0
    %621 = vmatpush2.msra.mxu0 0.0
    %622 = vmatprep.subr.mxu0 0.0
    %623 = vmatpush2.msra.mxu0 0.0
    %624 = vmatprep.subr.mxu0 0.0
    %625 = vmatpush2.msra.mxu0 0.0
    %626 = vmatprep.mubr.f32.mxu0 0.0
    %627 = vmatmul.mubr.f32.gmra.mxu0 %v560
    %v628 = vpop.f32.mrf.mxu0
    %v629 = vadd.f32 %v38, %v628
    %v630 = vpop.f32.mrf.mxu0
    %631 = vdwg.mxu0
    %v632 = vadd.f32 %v556, %v629
    %v633 = vxor.u32 %v632, 2147483648
    %v634 = vmul.f32 %v633, 1.442695
    %v635 = vpow.pop %v634
    %v636 = vadd.f32 %v635, 1.0
    %v637 = vrcp.pop %v636
    %v638 = vmul.f32 1.0, %v637
    %640 = vrot.lane.b32.xlu0 %v629, 64
    %v641 = vpop.permute.xlu0 %640
    %v643 = vmul.f32 %v638, %v641
    %645 = vrot.lane.b32.xlu0 %v643, 64
    %v646 = vpop.permute.xlu0 %645
    %v648 = vadd.f32 %v556, %v646
    %v649 = vtanh.pop %v648
    %v650 = vsub.f32 1.0, %v638
    %652 = vrot.lane.b32.xlu0 %v649, 96
    %v653 = vpop.permute.xlu0 %652
    %v655 = vmul.f32 %v650, %v653
    %v656 = vmul.f32 %v638, %v554
    %v657 = vadd.f32 %v655, %v656
    %s658 = scalar_lea.vmem %s0, 12
    %v659 = vld [vmem:[%s658] sm:$0x3]
    %661 = vrot.lane.b32.xlu0 %v657, 96
    %v662 = vpop.permute.xlu0 %661
    %v663 = vsel %vm40, %v662, 0
    %665 = vmatprep.subr.mxu0 0.0
    %666 = vmatpush1.msra.mxu0 0.0
    %667 = vmatprep.subr.mxu0 0.0
    %668 = vmatpush1.msra.mxu0 0.0
    %669 = vmatprep.subr.mxu0 0.0
    %670 = vmatpush1.msra.mxu0 0.0
    %671 = vmatprep.subr.mxu0 0.0
    %672 = vmatpush1.msra.mxu0 0.0
    %673 = vmatprep.subr.mxu0 0.0
    %674 = vmatpush1.msra.mxu0 0.0
    %675 = vmatprep.subr.mxu0 0.0
    %676 = vmatpush1.msra.mxu0 0.0
    %677 = vmatprep.subr.mxu0 0.0
    %678 = vmatpush1.msra.mxu0 0.0
    %679 = vmatprep.subr.mxu0 0.0
    %680 = vmatpush1.msra.mxu0 0.0
    %681 = vmatprep.subr.mxu0 0.0
    %682 = vmatpush1.msra.mxu0 0.0
    %683 = vmatprep.subr.mxu0 0.0
    %684 = vmatpush1.msra.mxu0 0.0
    %685 = vmatprep.subr.mxu0 0.0
    %686 = vmatpush1.msra.mxu0 0.0
    %687 = vmatprep.subr.mxu0 0.0
    %688 = vmatpush1.msra.mxu0 0.0
    %689 = vmatprep.subr.mxu0 0.0
    %690 = vmatpush1.msra.mxu0 %v30
    %691 = vmatprep.subr.mxu0 0.0
    %692 = vmatpush1.msra.mxu0 %v29
    %693 = vmatprep.subr.mxu0 0.0
    %694 = vmatpush1.msra.mxu0 %v28
    %695 = vmatprep.subr.mxu0 0.0
    %696 = vmatpush1.msra.mxu0 %v27
    %697 = vmatprep.subr.mxu0 0.0
    %698 = vmatpush2.msra.mxu0 0.0
    %699 = vmatprep.subr.mxu0 0.0
    %700 = vmatpush2.msra.mxu0 0.0
    %701 = vmatprep.subr.mxu0 0.0
    %702 = vmatpush2.msra.mxu0 0.0
    %703 = vmatprep.subr.mxu0 0.0
    %704 = vmatpush2.msra.mxu0 0.0
    %705 = vmatprep.subr.mxu0 0.0
    %706 = vmatpush2.msra.mxu0 0.0
    %707 = vmatprep.subr.mxu0 0.0
    %708 = vmatpush2.msra.mxu0 0.0
    %709 = vmatprep.subr.mxu0 0.0
    %710 = vmatpush2.msra.mxu0 0.0
    %711 = vmatprep.subr.mxu0 0.0
    %712 = vmatpush2.msra.mxu0 0.0
    %713 = vmatprep.subr.mxu0 0.0
    %714 = vmatpush2.msra.mxu0 0.0
    %715 = vmatprep.subr.mxu0 0.0
    %716 = vmatpush2.msra.mxu0 0.0
    %717 = vmatprep.subr.mxu0 0.0
    %718 = vmatpush2.msra.mxu0 0.0
    %719 = vmatprep.subr.mxu0 0.0
    %720 = vmatpush2.msra.mxu0 0.0
    %721 = vmatprep.subr.mxu0 0.0
    %722 = vmatpush2.msra.mxu0 0.0
    %723 = vmatprep.subr.mxu0 0.0
    %724 = vmatpush2.msra.mxu0 0.0
    %725 = vmatprep.subr.mxu0 0.0
    %726 = vmatpush2.msra.mxu0 0.0
    %727 = vmatprep.subr.mxu0 0.0
    %728 = vmatpush2.msra.mxu0 0.0
    %729 = vmatprep.mubr.f32.mxu0 0.0
    %730 = vmatmul.mubr.f32.gmra.mxu0 %v663
    %v731 = vpop.f32.mrf.mxu0
    %v732 = vadd.f32 %v38, %v731
    %v733 = vpop.f32.mrf.mxu0
    %734 = vdwg.mxu0
    %v735 = vadd.f32 %v659, %v732
    %v736 = vxor.u32 %v735, 2147483648
    %v737 = vmul.f32 %v736, 1.442695
    %v738 = vpow.pop %v737
    %v739 = vadd.f32 %v738, 1.0
    %v740 = vrcp.pop %v739
    %v741 = vmul.f32 1.0, %v740
    %743 = vrot.lane.b32.xlu0 %v732, 64
    %v744 = vpop.permute.xlu0 %743
    %v746 = vmul.f32 %v741, %v744
    %748 = vrot.lane.b32.xlu0 %v746, 64
    %v749 = vpop.permute.xlu0 %748
    %v751 = vadd.f32 %v659, %v749
    %v752 = vtanh.pop %v751
    %v753 = vsub.f32 1.0, %v741
    %755 = vrot.lane.b32.xlu0 %v752, 96
    %v756 = vpop.permute.xlu0 %755
    %v758 = vmul.f32 %v753, %v756
    %v759 = vmul.f32 %v741, %v657
    %v760 = vadd.f32 %v758, %v759
    %s761 = scalar_lea.vmem %s0, 14
    %v762 = vld [vmem:[%s761] sm:$0x3]
    %764 = vrot.lane.b32.xlu0 %v760, 96
    %v765 = vpop.permute.xlu0 %764
    %v766 = vsel %vm40, %v765, 0
    %768 = vmatprep.subr.mxu0 0.0
    %769 = vmatpush1.msra.mxu0 0.0
    %770 = vmatprep.subr.mxu0 0.0
    %771 = vmatpush1.msra.mxu0 0.0
    %772 = vmatprep.subr.mxu0 0.0
    %773 = vmatpush1.msra.mxu0 0.0
    %774 = vmatprep.subr.mxu0 0.0
    %775 = vmatpush1.msra.mxu0 0.0
    %776 = vmatprep.subr.mxu0 0.0
    %777 = vmatpush1.msra.mxu0 0.0
    %778 = vmatprep.subr.mxu0 0.0
    %779 = vmatpush1.msra.mxu0 0.0
    %780 = vmatprep.subr.mxu0 0.0
    %781 = vmatpush1.msra.mxu0 0.0
    %782 = vmatprep.subr.mxu0 0.0
    %783 = vmatpush1.msra.mxu0 0.0
    %784 = vmatprep.subr.mxu0 0.0
    %785 = vmatpush1.msra.mxu0 0.0
    %786 = vmatprep.subr.mxu0 0.0
    %787 = vmatpush1.msra.mxu0 0.0
    %788 = vmatprep.subr.mxu0 0.0
    %789 = vmatpush1.msra.mxu0 0.0
    %790 = vmatprep.subr.mxu0 0.0
    %791 = vmatpush1.msra.mxu0 0.0
    %792 = vmatprep.subr.mxu0 0.0
    %793 = vmatpush1.msra.mxu0 %v30
    %794 = vmatprep.subr.mxu0 0.0
    %795 = vmatpush1.msra.mxu0 %v29
    %796 = vmatprep.subr.mxu0 0.0
    %797 = vmatpush1.msra.mxu0 %v28
    %798 = vmatprep.subr.mxu0 0.0
    %799 = vmatpush1.msra.mxu0 %v27
    %800 = vmatprep.subr.mxu0 0.0
    %801 = vmatpush2.msra.mxu0 0.0
    %802 = vmatprep.subr.mxu0 0.0
    %803 = vmatpush2.msra.mxu0 0.0
    %804 = vmatprep.subr.mxu0 0.0
    %805 = vmatpush2.msra.mxu0 0.0
    %806 = vmatprep.subr.mxu0 0.0
    %807 = vmatpush2.msra.mxu0 0.0
    %808 = vmatprep.subr.mxu0 0.0
    %809 = vmatpush2.msra.mxu0 0.0
    %810 = vmatprep.subr.mxu0 0.0
    %811 = vmatpush2.msra.mxu0 0.0
    %812 = vmatprep.subr.mxu0 0.0
    %813 = vmatpush2.msra.mxu0 0.0
    %814 = vmatprep.subr.mxu0 0.0
    %815 = vmatpush2.msra.mxu0 0.0
    %816 = vmatprep.subr.mxu0 0.0
    %817 = vmatpush2.msra.mxu0 0.0
    %818 = vmatprep.subr.mxu0 0.0
    %819 = vmatpush2.msra.mxu0 0.0
    %820 = vmatprep.subr.mxu0 0.0
    %821 = vmatpush2.msra.mxu0 0.0
    %822 = vmatprep.subr.mxu0 0.0
    %823 = vmatpush2.msra.mxu0 0.0
    %824 = vmatprep.subr.mxu0 0.0
    %825 = vmatpush2.msra.mxu0 0.0
    %826 = vmatprep.subr.mxu0 0.0
    %827 = vmatpush2.msra.mxu0 0.0
    %828 = vmatprep.subr.mxu0 0.0
    %829 = vmatpush2.msra.mxu0 0.0
    %830 = vmatprep.subr.mxu0 0.0
    %831 = vmatpush2.msra.mxu0 0.0
    %832 = vmatprep.mubr.f32.mxu0 0.0
    %833 = vmatmul.mubr.f32.gmra.mxu0 %v766
    %v834 = vpop.f32.mrf.mxu0
    %v835 = vadd.f32 %v38, %v834
    %v836 = vpop.f32.mrf.mxu0
    %837 = vdwg.mxu0
    %v838 = vadd.f32 %v762, %v835
    %v839 = vxor.u32 %v838, 2147483648
    %v840 = vmul.f32 %v839, 1.442695
    %v841 = vpow.pop %v840
    %v842 = vadd.f32 %v841, 1.0
    %v843 = vrcp.pop %v842
    %v844 = vmul.f32 1.0, %v843
    %846 = vrot.lane.b32.xlu0 %v835, 64
    %v847 = vpop.permute.xlu0 %846
    %v849 = vmul.f32 %v844, %v847
    %851 = vrot.lane.b32.xlu0 %v849, 64
    %v852 = vpop.permute.xlu0 %851
    %v854 = vadd.f32 %v762, %v852
    %v855 = vtanh.pop %v854
    %v856 = vsub.f32 1.0, %v844
    %858 = vrot.lane.b32.xlu0 %v855, 96
    %v859 = vpop.permute.xlu0 %858
    %v861 = vmul.f32 %v856, %v859
    %v862 = vmul.f32 %v844, %v760
    %v863 = vadd.f32 %v861, %v862
    %865 = vrot.lane.b32.xlu0 %v863, 96
    %v866 = vpop.permute.xlu0 %865
    %vm868 = vcmask 254976
    %869 = vst.msk [vmem:[#allocation2] sm:$0x3] %vm868, %v866
    // Predicated region
    $region26: #{gru_predictor_forward.7} parent=1 // pred_check
      %p870 = pneg %p21
    $region27: #{gru_predictor_forward.7} parent=1 // pred_check_branch
      %872 = sbr.rel (%p870) target = $region29
    $region28: #{gru_predictor_forward.7} parent=1 // pred_region
      %v873 = vld [vmem:[%s3] sm:$0xff]
      %v874 = vld [vmem:[%s3 + $0x8] sm:$0xff]
      %v875 = vld [vmem:[%s3 + $0x10] sm:$0xff]
      %v876 = vld [vmem:[%s3 + $0x18] sm:$0xff]
      %v877 = vld [vmem:[%s4] sm:$0x1]
      %v879 = vlaneseq
      %v880 = vshrl.u32 %v879, 7
      %v881 = vsub.s32 0, %v880
      %v882 = vrot.slane %v877, %v881
      %v884 = vsel %vm40, %v866, 0
      %886 = vmatprep.subr.mxu0 0.0
      %887 = vmatpush1.msra.mxu0 0.0
      %888 = vmatprep.subr.mxu0 0.0
      %889 = vmatpush1.msra.mxu0 0.0
      %890 = vmatprep.subr.mxu0 0.0
      %891 = vmatpush1.msra.mxu0 0.0
      %892 = vmatprep.subr.mxu0 0.0
      %893 = vmatpush1.msra.mxu0 0.0
      %894 = vmatprep.subr.mxu0 0.0
      %895 = vmatpush1.msra.mxu0 0.0
      %896 = vmatprep.subr.mxu0 0.0
      %897 = vmatpush1.msra.mxu0 0.0
      %898 = vmatprep.subr.mxu0 0.0
      %899 = vmatpush1.msra.mxu0 0.0
      %900 = vmatprep.subr.mxu0 0.0
      %901 = vmatpush1.msra.mxu0 0.0
      %902 = vmatprep.subr.mxu0 0.0
      %903 = vmatpush1.msra.mxu0 0.0
      %904 = vmatprep.subr.mxu0 0.0
      %905 = vmatpush1.msra.mxu0 0.0
      %906 = vmatprep.subr.mxu0 0.0
      %907 = vmatpush1.msra.mxu0 0.0
      %908 = vmatprep.subr.mxu0 0.0
      %909 = vmatpush1.msra.mxu0 0.0
      %910 = vmatprep.subr.mxu0 0.0
      %911 = vmatpush1.msra.mxu0 %v876
      %912 = vmatprep.subr.mxu0 0.0
      %913 = vmatpush1.msra.mxu0 %v875
      %914 = vmatprep.subr.mxu0 0.0
      %915 = vmatpush1.msra.mxu0 %v874
      %916 = vmatprep.subr.mxu0 0.0
      %917 = vmatpush1.msra.mxu0 %v873
      %918 = vmatprep.subr.mxu0 0.0
      %919 = vmatpush2.msra.mxu0 0.0
      %920 = vmatprep.subr.mxu0 0.0
      %921 = vmatpush2.msra.mxu0 0.0
      %922 = vmatprep.subr.mxu0 0.0
      %923 = vmatpush2.msra.mxu0 0.0
      %924 = vmatprep.subr.mxu0 0.0
      %925 = vmatpush2.msra.mxu0 0.0
      %926 = vmatprep.subr.mxu0 0.0
      %927 = vmatpush2.msra.mxu0 0.0
      %928 = vmatprep.subr.mxu0 0.0
      %929 = vmatpush2.msra.mxu0 0.0
      %930 = vmatprep.subr.mxu0 0.0
      %931 = vmatpush2.msra.mxu0 0.0
      %932 = vmatprep.subr.mxu0 0.0
      %933 = vmatpush2.msra.mxu0 0.0
      %934 = vmatprep.subr.mxu0 0.0
      %935 = vmatpush2.msra.mxu0 0.0
      %936 = vmatprep.subr.mxu0 0.0
      %937 = vmatpush2.msra.mxu0 0.0
      %938 = vmatprep.subr.mxu0 0.0
      %939 = vmatpush2.msra.mxu0 0.0
      %940 = vmatprep.subr.mxu0 0.0
      %941 = vmatpush2.msra.mxu0 0.0
      %942 = vmatprep.subr.mxu0 0.0
      %943 = vmatpush2.msra.mxu0 0.0
      %944 = vmatprep.subr.mxu0 0.0
      %945 = vmatpush2.msra.mxu0 0.0
      %946 = vmatprep.subr.mxu0 0.0
      %947 = vmatpush2.msra.mxu0 0.0
      %948 = vmatprep.subr.mxu0 0.0
      %949 = vmatpush2.msra.mxu0 0.0
      %950 = vmatprep.mubr.f32.mxu0 0.0
      %951 = vmatmul.mubr.f32.gmra.mxu0 %v884
      %v952 = vpop.f32.mrf.mxu0
      %v953 = vadd.f32 %v882, %v952
      %v954 = vpop.f32.mrf.mxu0
      %955 = vdwg.mxu0
      %vm956 = vcmask 25600
      %957 = vst.msk [vmem:[#allocation3] sm:$0x3] %vm956, %v953
    $region29: #{gru_predictor_forward.7} parent=1 // pred_fallthru
      _
    // Predicated region
    $region30: #{gru_predictor_forward.7} parent=1 // pred_check
      _
    $region31: #{gru_predictor_forward.7} parent=1 // pred_check_branch
      %959 = sbr.rel (0) target = $region33
    $region32: #{gru_predictor_forward.7} parent=1 // pred_region
      %s961 = ssub.s32 32, 32
      %962 = vsyncadd [#allocation4], %s961
      %s964 = sshll.u32 [#allocation3], 4
      %s965 = int_to_ptr.vmem [resolvable:$true] %s964
      %967 = dma.vmem_to_hbm [thread:$0]  %s965, 32, %s5, [#allocation4]
    $region33: #{gru_predictor_forward.7} parent=1 // pred_fallthru
      _
    // Predicated region
    $region34: #{gru_predictor_forward.7} parent=1 // pred_check
      _
    $region35: #{gru_predictor_forward.7} parent=1 // pred_check_branch
      %969 = sbr.rel (0) target = $region37
    $region36: #{gru_predictor_forward.7} parent=1 // pred_region
      %970 = dma.done [#allocation4], 32
    $region37: #{gru_predictor_forward.7} parent=1 // pred_fallthru
      _
    %971 = vsyncpa [#allocation4], 1

</llo_original>
